<compile_context>
chip_gen: v6e
topology: v6e:2x2x1
jax: 0.10.0
libtpu: 0.0.40
codegen_flags: <defaults>
</compile_context>

<pallas_src>
import math

import jax
import jax.numpy as jnp
import numpy as np
from jax import lax
from jax.experimental import pallas as pl
from jax.experimental.pallas import tpu as pltpu

# ----------------------------- config ---------------------------------------
BATCH = 2
SEQ = 128
HIDDEN = 128
NUM_HEADS = 4
HEAD_DIM = HIDDEN // NUM_HEADS  # 32


# ----------------------------- kernel ---------------------------------------
def bert_self_attention_kernel(
    x_ref,       # (B*S, H)   f32
    w_ref,       # (H, 3H)    bf16   [Wq*scale | Wk | Wv]
    b_ref,       # (1, 3H)    f32    [bq*scale | 0  | bv]
    out_ref,     # (B*S, H)   f32
    qkv_ref,     # (B*S, 3H)  bf16   VMEM scratch
):
    B, S, H, N, D = BATCH, SEQ, HIDDEN, NUM_HEADS, HEAD_DIM

    # Fused lane-dense QKV projection: (256,128) x (128,384) -> (256,384),
    # bf16 operands, f32 accumulation, one dense bias-row add.
    x = x_ref[...].astype(jnp.bfloat16)
    qkv = jnp.dot(x, w_ref[...], preferred_element_type=jnp.float32)
    qkv_ref[...] = (qkv + b_ref[...]).astype(jnp.bfloat16)

    # Per-(batch, head) attention.  Unrolled static loop (B*N = 8 iterations);
    # only one (S, S) f32 score tile is live per iteration.
    for b in range(B):
        r0 = b * S
        for h in range(N):
            q = qkv_ref[pl.ds(r0, S), pl.ds(h * D, D)]              # (S, D) bf16, pre-scaled
            k = qkv_ref[pl.ds(r0, S), pl.ds(H + h * D, D)]          # (S, D) bf16
            v = qkv_ref[pl.ds(r0, S), pl.ds(2 * H + h * D, D)]      # (S, D) bf16

            # scores[i, j] = sum_d q[i, d] * k[j, d]  (no explicit k.T)
            s = lax.dot_general(
                q, k,
                dimension_numbers=(((1,), (1,)), ((), ())),
                preferred_element_type=jnp.float32)                 # (S, S) f32

            # Softmax over keys in f32; reciprocal on the (otherwise idle) EUP.
            p = jnp.exp(s - jnp.max(s, axis=-1, keepdims=True))
            p = p * pl.reciprocal(jnp.sum(p, axis=-1, keepdims=True), approx=True)

            # context[i, d] = sum_j p[i, j] * v[j, d]
            ctx = jnp.dot(p.astype(jnp.bfloat16), v,
                          preferred_element_type=jnp.float32)       # (S, D) f32

            # Heads land directly at their lane offset in the merged output;
            # the HBM writeback of out_ref stays one dense 128-lane block.
            out_ref[pl.ds(r0, S), pl.ds(h * D, D)] = ctx.astype(out_ref.dtype)


# ----------------------------- wrapper ---------------------------------------
def bert_self_attention_pallas(hidden_states, params):
    B, S, H = hidden_states.shape
    D = HEAD_DIM
    scale = 1.0 / math.sqrt(D)

    # Constant weight-side transforms (layout plumbing, not per-call compute):
    #  * fold 1/sqrt(D) into Wq and bq,
    #  * drop the key bias (softmax-invariant: it only adds a per-query
    #    constant to every score in a row),
    #  * fuse Wq|Wk|Wv into one lane-dense (H, 3H) bf16 slab, biases into one
    #    (1, 3H) f32 row.
    w_qkv = jnp.concatenate(
        [params["wq"] * scale, params["wk"], params["wv"]], axis=1
    ).astype(jnp.bfloat16)                                           # (H, 3H)
    b_qkv = jnp.concatenate(
        [params["bq"] * scale, jnp.zeros_like(params["bk"]), params["bv"]]
    ).reshape(1, 3 * H).astype(jnp.float32)                          # (1, 3H)

    # Flatten batch into the sublane axis; single grid step does everything.
    x2 = hidden_states.reshape(B * S, H)

    out = pl.pallas_call(
        bert_self_attention_kernel,
        out_shape=jax.ShapeDtypeStruct((B * S, H), hidden_states.dtype),
        grid=(1,),
        in_specs=[
            pl.BlockSpec((B * S, H), lambda i: (0, 0)),
            pl.BlockSpec((H, 3 * H), lambda i: (0, 0)),
            pl.BlockSpec((1, 3 * H), lambda i: (0, 0)),
        ],
        out_specs=pl.BlockSpec((B * S, H), lambda i: (0, 0)),
        scratch_shapes=[pltpu.VMEM((B * S, 3 * H), jnp.bfloat16)],
        compiler_params=pltpu.CompilerParams(
            dimension_semantics=("arbitrary",)),
    )(x2, w_qkv, b_qkv)
    return out.reshape(B, S, H)


# ----------------------------- pure-JAX reference -----------------------------
def bert_self_attention_ref(hidden_states, params):
    B, S, H = hidden_states.shape
    q = hidden_states @ params["wq"] + params["bq"]
    k = hidden_states @ params["wk"] + params["bk"]
    v = hidden_states @ params["wv"] + params["bv"]

    def split(t):  # (B, S, H) -> (B, nH, S, hd)
        return t.reshape(B, S, NUM_HEADS, HEAD_DIM).transpose(0, 2, 1, 3)

    qh, kh, vh = split(q), split(k), split(v)
    scores = jnp.einsum("bhqd,bhkd->bhqk", qh, kh) / math.sqrt(HEAD_DIM)
    probs = jax.nn.softmax(scores, axis=-1)
    ctx = jnp.einsum("bhqk,bhkd->bhqd", probs, vh)
    return ctx.transpose(0, 2, 1, 3).reshape(B, S, H)


# ----------------------------- main -------------------------------------------
if __name__ == "__main__":
    key = jax.random.PRNGKey(0)
    keys = jax.random.split(key, 8)

    H = HIDDEN

    def init(k, shape, fan_in):
        return jax.random.normal(k, shape, jnp.float32) * (1.0 / math.sqrt(fan_in))

    params = {
        "wq": init(keys[0], (H, H), H), "bq": 0.1 * init(keys[1], (H,), H),
        "wk": init(keys[2], (H, H), H), "bk": 0.1 * init(keys[3], (H,), H),
        "wv": init(keys[4], (H, H), H), "bv": 0.1 * init(keys[5], (H,), H),
    }
    x = jax.random.normal(keys[6], (BATCH, SEQ, HIDDEN), jnp.float32)

    out = jax.block_until_ready(bert_self_attention_pallas(x, params))
    ref = jax.block_until_ready(bert_self_attention_ref(x, params))

    # bf16 MXU operands + approx reciprocal vs f32 reference.
    np.testing.assert_allclose(np.asarray(out), np.asarray(ref), rtol=5e-2, atol=5e-2)

    print("KERNEL_OK")
</pallas_src>

<mosaic_0001>
module attributes {stable_mosaic.version = 11 : i64} {
  func.func @bert_self_attention_kernel(%arg0: i32, %arg1: memref<256x128xf32, #tpu.memory_space<vmem>>, %arg2: memref<128x384xbf16, #tpu.memory_space<vmem>>, %arg3: memref<1x384xf32, #tpu.memory_space<vmem>>, %arg4: memref<256x128xf32, #tpu.memory_space<vmem>>, %arg5: memref<256x384xbf16, #tpu.memory_space<vmem>>) attributes {dimension_semantics = [#tpu.dimension_semantics<arbitrary>], iteration_bounds = array<i64: 1>, scalar_prefetch = 0 : i64, scratch_operands = 1 : i64, tpu.core_type = #tpu.core_type<tc>, window_params = [{pipeline_mode = #tpu.pipeline_mode<synchronous>, transform_indices = @transform_0, window_bounds = array<i64: 256, 128>}, {pipeline_mode = #tpu.pipeline_mode<synchronous>, transform_indices = @transform_1, window_bounds = array<i64: 128, 384>}, {pipeline_mode = #tpu.pipeline_mode<synchronous>, transform_indices = @transform_2, window_bounds = array<i64: 1, 384>}, {pipeline_mode = #tpu.pipeline_mode<synchronous>, transform_indices = @transform_3, window_bounds = array<i64: 256, 128>}]} {
    %c0 = arith.constant 0 : index
    %c0_0 = arith.constant 0 : index
    %0 = vector.load %arg1[%c0, %c0_0] : memref<256x128xf32, #tpu.memory_space<vmem>>, vector<256x128xf32>
    %1 = arith.truncf %0 : vector<256x128xf32> to vector<256x128xbf16>
    %c0_1 = arith.constant 0 : index
    %c0_2 = arith.constant 0 : index
    %2 = vector.load %arg2[%c0_1, %c0_2] : memref<128x384xbf16, #tpu.memory_space<vmem>>, vector<128x384xbf16>
    %cst = arith.constant dense<0.000000e+00> : vector<256x384xf32>
    %3 = tpu.matmul %1, %2, %cst {dimension_numbers = #tpu.dot_dimension_numbers<[1], [0], [0], [1], [0, 0, 1, 1], [], []>} : vector<256x128xbf16>, vector<128x384xbf16>, vector<256x384xf32> -> vector<256x384xf32>
    %c0_3 = arith.constant 0 : index
    %c0_4 = arith.constant 0 : index
    %4 = vector.load %arg3[%c0_3, %c0_4] : memref<1x384xf32, #tpu.memory_space<vmem>>, vector<1x384xf32>
    %5 = vector.broadcast %4 : vector<1x384xf32> to vector<256x384xf32>
    %6 = arith.addf %3, %5 : vector<256x384xf32>
    %7 = arith.truncf %6 : vector<256x384xf32> to vector<256x384xbf16>
    %c0_5 = arith.constant 0 : index
    %c0_6 = arith.constant 0 : index
    %8 = vector.load %arg5[%c0_5, %c0_6] : memref<256x384xbf16, #tpu.memory_space<vmem>>, vector<256x384xbf16>
    tpu.vector_store %arg5[%c0_5, %c0_6], %7 {strides = array<i32>} : memref<256x384xbf16, #tpu.memory_space<vmem>>, vector<256x384xbf16>,
    %c0_7 = arith.constant 0 : index
    %c0_8 = arith.constant 0 : index
    %9 = vector.load %arg5[%c0_7, %c0_8] : memref<256x384xbf16, #tpu.memory_space<vmem>>, vector<128x32xbf16>
    %c0_9 = arith.constant 0 : index
    %c128 = arith.constant 128 : index
    %10 = vector.load %arg5[%c0_9, %c128] : memref<256x384xbf16, #tpu.memory_space<vmem>>, vector<128x32xbf16>
    %c0_10 = arith.constant 0 : index
    %c256 = arith.constant 256 : index
    %11 = vector.load %arg5[%c0_10, %c256] : memref<256x384xbf16, #tpu.memory_space<vmem>>, vector<128x32xbf16>
    %cst_11 = arith.constant dense<0.000000e+00> : vector<128x128xf32>
    %12 = tpu.matmul %9, %10, %cst_11 {dimension_numbers = #tpu.dot_dimension_numbers<[1], [1], [0], [0], [0, 0, 1, 0], [], []>} : vector<128x32xbf16>, vector<128x32xbf16>, vector<128x128xf32> -> vector<128x128xf32>
    %cst_12 = arith.constant dense<0xFF800000> : vector<128xf32>
    %13 = vector.multi_reduction <maximumf>, %12, %cst_12 [1] : vector<128x128xf32> to vector<128xf32>
    %14 = vector.shape_cast %13 : vector<128xf32> to vector<128x1xf32>
    %15 = vector.broadcast %14 : vector<128x1xf32> to vector<128x128xf32>
    %16 = arith.subf %12, %15 : vector<128x128xf32>
    %17 = math.exp %16 : vector<128x128xf32>
    %cst_13 = arith.constant dense<0.000000e+00> : vector<128xf32>
    %18 = vector.multi_reduction <add>, %17, %cst_13 [1] : vector<128x128xf32> to vector<128xf32>
    %19 = vector.shape_cast %18 : vector<128xf32> to vector<128x1xf32>
    %20 = tpu.reciprocal %19 {approx = true} : vector<128x1xf32> -> vector<128x1xf32>
    %21 = vector.broadcast %20 : vector<128x1xf32> to vector<128x128xf32>
    %22 = arith.mulf %17, %21 : vector<128x128xf32>
    %23 = arith.truncf %22 : vector<128x128xf32> to vector<128x128xbf16>
    %cst_14 = arith.constant dense<0.000000e+00> : vector<128x32xf32>
    %24 = tpu.matmul %23, %11, %cst_14 {dimension_numbers = #tpu.dot_dimension_numbers<[1], [0], [0], [1], [0, 0, 1, 1], [], []>} : vector<128x128xbf16>, vector<128x32xbf16>, vector<128x32xf32> -> vector<128x32xf32>
    %c0_15 = arith.constant 0 : index
    %c0_16 = arith.constant 0 : index
    %25 = vector.load %arg4[%c0_15, %c0_16] : memref<256x128xf32, #tpu.memory_space<vmem>>, vector<128x32xf32>
    tpu.vector_store %arg4[%c0_15, %c0_16], %24 {strides = array<i32>} : memref<256x128xf32, #tpu.memory_space<vmem>>, vector<128x32xf32>,
    %c0_17 = arith.constant 0 : index
    %c32 = arith.constant 32 : index
    %26 = vector.load %arg5[%c0_17, %c32] : memref<256x384xbf16, #tpu.memory_space<vmem>>, vector<128x32xbf16>
    %c0_18 = arith.constant 0 : index
    %c160 = arith.constant 160 : index
    %27 = vector.load %arg5[%c0_18, %c160] : memref<256x384xbf16, #tpu.memory_space<vmem>>, vector<128x32xbf16>
    %c0_19 = arith.constant 0 : index
    %c288 = arith.constant 288 : index
    %28 = vector.load %arg5[%c0_19, %c288] : memref<256x384xbf16, #tpu.memory_space<vmem>>, vector<128x32xbf16>
    %cst_20 = arith.constant dense<0.000000e+00> : vector<128x128xf32>
    %29 = tpu.matmul %26, %27, %cst_20 {dimension_numbers = #tpu.dot_dimension_numbers<[1], [1], [0], [0], [0, 0, 1, 0], [], []>} : vector<128x32xbf16>, vector<128x32xbf16>, vector<128x128xf32> -> vector<128x128xf32>
    %cst_21 = arith.constant dense<0xFF800000> : vector<128xf32>
    %30 = vector.multi_reduction <maximumf>, %29, %cst_21 [1] : vector<128x128xf32> to vector<128xf32>
    %31 = vector.shape_cast %30 : vector<128xf32> to vector<128x1xf32>
    %32 = vector.broadcast %31 : vector<128x1xf32> to vector<128x128xf32>
    %33 = arith.subf %29, %32 : vector<128x128xf32>
    %34 = math.exp %33 : vector<128x128xf32>
    %cst_22 = arith.constant dense<0.000000e+00> : vector<128xf32>
    %35 = vector.multi_reduction <add>, %34, %cst_22 [1] : vector<128x128xf32> to vector<128xf32>
    %36 = vector.shape_cast %35 : vector<128xf32> to vector<128x1xf32>
    %37 = tpu.reciprocal %36 {approx = true} : vector<128x1xf32> -> vector<128x1xf32>
    %38 = vector.broadcast %37 : vector<128x1xf32> to vector<128x128xf32>
    %39 = arith.mulf %34, %38 : vector<128x128xf32>
    %40 = arith.truncf %39 : vector<128x128xf32> to vector<128x128xbf16>
    %cst_23 = arith.constant dense<0.000000e+00> : vector<128x32xf32>
    %41 = tpu.matmul %40, %28, %cst_23 {dimension_numbers = #tpu.dot_dimension_numbers<[1], [0], [0], [1], [0, 0, 1, 1], [], []>} : vector<128x128xbf16>, vector<128x32xbf16>, vector<128x32xf32> -> vector<128x32xf32>
    %c0_24 = arith.constant 0 : index
    %c32_25 = arith.constant 32 : index
    %42 = vector.load %arg4[%c0_24, %c32_25] : memref<256x128xf32, #tpu.memory_space<vmem>>, vector<128x32xf32>
    tpu.vector_store %arg4[%c0_24, %c32_25], %41 {strides = array<i32>} : memref<256x128xf32, #tpu.memory_space<vmem>>, vector<128x32xf32>,
    %c0_26 = arith.constant 0 : index
    %c64 = arith.constant 64 : index
    %43 = vector.load %arg5[%c0_26, %c64] : memref<256x384xbf16, #tpu.memory_space<vmem>>, vector<128x32xbf16>
    %c0_27 = arith.constant 0 : index
    %c192 = arith.constant 192 : index
    %44 = vector.load %arg5[%c0_27, %c192] : memref<256x384xbf16, #tpu.memory_space<vmem>>, vector<128x32xbf16>
    %c0_28 = arith.constant 0 : index
    %c320 = arith.constant 320 : index
    %45 = vector.load %arg5[%c0_28, %c320] : memref<256x384xbf16, #tpu.memory_space<vmem>>, vector<128x32xbf16>
    %cst_29 = arith.constant dense<0.000000e+00> : vector<128x128xf32>
    %46 = tpu.matmul %43, %44, %cst_29 {dimension_numbers = #tpu.dot_dimension_numbers<[1], [1], [0], [0], [0, 0, 1, 0], [], []>} : vector<128x32xbf16>, vector<128x32xbf16>, vector<128x128xf32> -> vector<128x128xf32>
    %cst_30 = arith.constant dense<0xFF800000> : vector<128xf32>
    %47 = vector.multi_reduction <maximumf>, %46, %cst_30 [1] : vector<128x128xf32> to vector<128xf32>
    %48 = vector.shape_cast %47 : vector<128xf32> to vector<128x1xf32>
    %49 = vector.broadcast %48 : vector<128x1xf32> to vector<128x128xf32>
    %50 = arith.subf %46, %49 : vector<128x128xf32>
    %51 = math.exp %50 : vector<128x128xf32>
    %cst_31 = arith.constant dense<0.000000e+00> : vector<128xf32>
    %52 = vector.multi_reduction <add>, %51, %cst_31 [1] : vector<128x128xf32> to vector<128xf32>
    %53 = vector.shape_cast %52 : vector<128xf32> to vector<128x1xf32>
    %54 = tpu.reciprocal %53 {approx = true} : vector<128x1xf32> -> vector<128x1xf32>
    %55 = vector.broadcast %54 : vector<128x1xf32> to vector<128x128xf32>
    %56 = arith.mulf %51, %55 : vector<128x128xf32>
    %57 = arith.truncf %56 : vector<128x128xf32> to vector<128x128xbf16>
    %cst_32 = arith.constant dense<0.000000e+00> : vector<128x32xf32>
    %58 = tpu.matmul %57, %45, %cst_32 {dimension_numbers = #tpu.dot_dimension_numbers<[1], [0], [0], [1], [0, 0, 1, 1], [], []>} : vector<128x128xbf16>, vector<128x32xbf16>, vector<128x32xf32> -> vector<128x32xf32>
    %c0_33 = arith.constant 0 : index
    %c64_34 = arith.constant 64 : index
    %59 = vector.load %arg4[%c0_33, %c64_34] : memref<256x128xf32, #tpu.memory_space<vmem>>, vector<128x32xf32>
    tpu.vector_store %arg4[%c0_33, %c64_34], %58 {strides = array<i32>} : memref<256x128xf32, #tpu.memory_space<vmem>>, vector<128x32xf32>,
    %c0_35 = arith.constant 0 : index
    %c96 = arith.constant 96 : index
    %60 = vector.load %arg5[%c0_35, %c96] : memref<256x384xbf16, #tpu.memory_space<vmem>>, vector<128x32xbf16>
    %c0_36 = arith.constant 0 : index
    %c224 = arith.constant 224 : index
    %61 = vector.load %arg5[%c0_36, %c224] : memref<256x384xbf16, #tpu.memory_space<vmem>>, vector<128x32xbf16>
    %c0_37 = arith.constant 0 : index
    %c352 = arith.constant 352 : index
    %62 = vector.load %arg5[%c0_37, %c352] : memref<256x384xbf16, #tpu.memory_space<vmem>>, vector<128x32xbf16>
    %cst_38 = arith.constant dense<0.000000e+00> : vector<128x128xf32>
    %63 = tpu.matmul %60, %61, %cst_38 {dimension_numbers = #tpu.dot_dimension_numbers<[1], [1], [0], [0], [0, 0, 1, 0], [], []>} : vector<128x32xbf16>, vector<128x32xbf16>, vector<128x128xf32> -> vector<128x128xf32>
    %cst_39 = arith.constant dense<0xFF800000> : vector<128xf32>
    %64 = vector.multi_reduction <maximumf>, %63, %cst_39 [1] : vector<128x128xf32> to vector<128xf32>
    %65 = vector.shape_cast %64 : vector<128xf32> to vector<128x1xf32>
    %66 = vector.broadcast %65 : vector<128x1xf32> to vector<128x128xf32>
    %67 = arith.subf %63, %66 : vector<128x128xf32>
    %68 = math.exp %67 : vector<128x128xf32>
    %cst_40 = arith.constant dense<0.000000e+00> : vector<128xf32>
    %69 = vector.multi_reduction <add>, %68, %cst_40 [1] : vector<128x128xf32> to vector<128xf32>
    %70 = vector.shape_cast %69 : vector<128xf32> to vector<128x1xf32>
    %71 = tpu.reciprocal %70 {approx = true} : vector<128x1xf32> -> vector<128x1xf32>
    %72 = vector.broadcast %71 : vector<128x1xf32> to vector<128x128xf32>
    %73 = arith.mulf %68, %72 : vector<128x128xf32>
    %74 = arith.truncf %73 : vector<128x128xf32> to vector<128x128xbf16>
    %cst_41 = arith.constant dense<0.000000e+00> : vector<128x32xf32>
    %75 = tpu.matmul %74, %62, %cst_41 {dimension_numbers = #tpu.dot_dimension_numbers<[1], [0], [0], [1], [0, 0, 1, 1], [], []>} : vector<128x128xbf16>, vector<128x32xbf16>, vector<128x32xf32> -> vector<128x32xf32>
    %c0_42 = arith.constant 0 : index
    %c96_43 = arith.constant 96 : index
    %76 = vector.load %arg4[%c0_42, %c96_43] : memref<256x128xf32, #tpu.memory_space<vmem>>, vector<128x32xf32>
    tpu.vector_store %arg4[%c0_42, %c96_43], %75 {strides = array<i32>} : memref<256x128xf32, #tpu.memory_space<vmem>>, vector<128x32xf32>,
    %c128_44 = arith.constant 128 : index
    %c0_45 = arith.constant 0 : index
    %77 = vector.load %arg5[%c128_44, %c0_45] : memref<256x384xbf16, #tpu.memory_space<vmem>>, vector<128x32xbf16>
    %c128_46 = arith.constant 128 : index
    %c128_47 = arith.constant 128 : index
    %78 = vector.load %arg5[%c128_46, %c128_47] : memref<256x384xbf16, #tpu.memory_space<vmem>>, vector<128x32xbf16>
    %c128_48 = arith.constant 128 : index
    %c256_49 = arith.constant 256 : index
    %79 = vector.load %arg5[%c128_48, %c256_49] : memref<256x384xbf16, #tpu.memory_space<vmem>>, vector<128x32xbf16>
    %cst_50 = arith.constant dense<0.000000e+00> : vector<128x128xf32>
    %80 = tpu.matmul %77, %78, %cst_50 {dimension_numbers = #tpu.dot_dimension_numbers<[1], [1], [0], [0], [0, 0, 1, 0], [], []>} : vector<128x32xbf16>, vector<128x32xbf16>, vector<128x128xf32> -> vector<128x128xf32>
    %cst_51 = arith.constant dense<0xFF800000> : vector<128xf32>
    %81 = vector.multi_reduction <maximumf>, %80, %cst_51 [1] : vector<128x128xf32> to vector<128xf32>
    %82 = vector.shape_cast %81 : vector<128xf32> to vector<128x1xf32>
    %83 = vector.broadcast %82 : vector<128x1xf32> to vector<128x128xf32>
    %84 = arith.subf %80, %83 : vector<128x128xf32>
    %85 = math.exp %84 : vector<128x128xf32>
    %cst_52 = arith.constant dense<0.000000e+00> : vector<128xf32>
    %86 = vector.multi_reduction <add>, %85, %cst_52 [1] : vector<128x128xf32> to vector<128xf32>
    %87 = vector.shape_cast %86 : vector<128xf32> to vector<128x1xf32>
    %88 = tpu.reciprocal %87 {approx = true} : vector<128x1xf32> -> vector<128x1xf32>
    %89 = vector.broadcast %88 : vector<128x1xf32> to vector<128x128xf32>
    %90 = arith.mulf %85, %89 : vector<128x128xf32>
    %91 = arith.truncf %90 : vector<128x128xf32> to vector<128x128xbf16>
    %cst_53 = arith.constant dense<0.000000e+00> : vector<128x32xf32>
    %92 = tpu.matmul %91, %79, %cst_53 {dimension_numbers = #tpu.dot_dimension_numbers<[1], [0], [0], [1], [0, 0, 1, 1], [], []>} : vector<128x128xbf16>, vector<128x32xbf16>, vector<128x32xf32> -> vector<128x32xf32>
    %c128_54 = arith.constant 128 : index
    %c0_55 = arith.constant 0 : index
    %93 = vector.load %arg4[%c128_54, %c0_55] : memref<256x128xf32, #tpu.memory_space<vmem>>, vector<128x32xf32>
    tpu.vector_store %arg4[%c128_54, %c0_55], %92 {strides = array<i32>} : memref<256x128xf32, #tpu.memory_space<vmem>>, vector<128x32xf32>,
    %c128_56 = arith.constant 128 : index
    %c32_57 = arith.constant 32 : index
    %94 = vector.load %arg5[%c128_56, %c32_57] : memref<256x384xbf16, #tpu.memory_space<vmem>>, vector<128x32xbf16>
    %c128_58 = arith.constant 128 : index
    %c160_59 = arith.constant 160 : index
    %95 = vector.load %arg5[%c128_58, %c160_59] : memref<256x384xbf16, #tpu.memory_space<vmem>>, vector<128x32xbf16>
    %c128_60 = arith.constant 128 : index
    %c288_61 = arith.constant 288 : index
    %96 = vector.load %arg5[%c128_60, %c288_61] : memref<256x384xbf16, #tpu.memory_space<vmem>>, vector<128x32xbf16>
    %cst_62 = arith.constant dense<0.000000e+00> : vector<128x128xf32>
    %97 = tpu.matmul %94, %95, %cst_62 {dimension_numbers = #tpu.dot_dimension_numbers<[1], [1], [0], [0], [0, 0, 1, 0], [], []>} : vector<128x32xbf16>, vector<128x32xbf16>, vector<128x128xf32> -> vector<128x128xf32>
    %cst_63 = arith.constant dense<0xFF800000> : vector<128xf32>
    %98 = vector.multi_reduction <maximumf>, %97, %cst_63 [1] : vector<128x128xf32> to vector<128xf32>
    %99 = vector.shape_cast %98 : vector<128xf32> to vector<128x1xf32>
    %100 = vector.broadcast %99 : vector<128x1xf32> to vector<128x128xf32>
    %101 = arith.subf %97, %100 : vector<128x128xf32>
    %102 = math.exp %101 : vector<128x128xf32>
    %cst_64 = arith.constant dense<0.000000e+00> : vector<128xf32>
    %103 = vector.multi_reduction <add>, %102, %cst_64 [1] : vector<128x128xf32> to vector<128xf32>
    %104 = vector.shape_cast %103 : vector<128xf32> to vector<128x1xf32>
    %105 = tpu.reciprocal %104 {approx = true} : vector<128x1xf32> -> vector<128x1xf32>
    %106 = vector.broadcast %105 : vector<128x1xf32> to vector<128x128xf32>
    %107 = arith.mulf %102, %106 : vector<128x128xf32>
    %108 = arith.truncf %107 : vector<128x128xf32> to vector<128x128xbf16>
    %cst_65 = arith.constant dense<0.000000e+00> : vector<128x32xf32>
    %109 = tpu.matmul %108, %96, %cst_65 {dimension_numbers = #tpu.dot_dimension_numbers<[1], [0], [0], [1], [0, 0, 1, 1], [], []>} : vector<128x128xbf16>, vector<128x32xbf16>, vector<128x32xf32> -> vector<128x32xf32>
    %c128_66 = arith.constant 128 : index
    %c32_67 = arith.constant 32 : index
    %110 = vector.load %arg4[%c128_66, %c32_67] : memref<256x128xf32, #tpu.memory_space<vmem>>, vector<128x32xf32>
    tpu.vector_store %arg4[%c128_66, %c32_67], %109 {strides = array<i32>} : memref<256x128xf32, #tpu.memory_space<vmem>>, vector<128x32xf32>,
    %c128_68 = arith.constant 128 : index
    %c64_69 = arith.constant 64 : index
    %111 = vector.load %arg5[%c128_68, %c64_69] : memref<256x384xbf16, #tpu.memory_space<vmem>>, vector<128x32xbf16>
    %c128_70 = arith.constant 128 : index
    %c192_71 = arith.constant 192 : index
    %112 = vector.load %arg5[%c128_70, %c192_71] : memref<256x384xbf16, #tpu.memory_space<vmem>>, vector<128x32xbf16>
    %c128_72 = arith.constant 128 : index
    %c320_73 = arith.constant 320 : index
    %113 = vector.load %arg5[%c128_72, %c320_73] : memref<256x384xbf16, #tpu.memory_space<vmem>>, vector<128x32xbf16>
    %cst_74 = arith.constant dense<0.000000e+00> : vector<128x128xf32>
    %114 = tpu.matmul %111, %112, %cst_74 {dimension_numbers = #tpu.dot_dimension_numbers<[1], [1], [0], [0], [0, 0, 1, 0], [], []>} : vector<128x32xbf16>, vector<128x32xbf16>, vector<128x128xf32> -> vector<128x128xf32>
    %cst_75 = arith.constant dense<0xFF800000> : vector<128xf32>
    %115 = vector.multi_reduction <maximumf>, %114, %cst_75 [1] : vector<128x128xf32> to vector<128xf32>
    %116 = vector.shape_cast %115 : vector<128xf32> to vector<128x1xf32>
    %117 = vector.broadcast %116 : vector<128x1xf32> to vector<128x128xf32>
    %118 = arith.subf %114, %117 : vector<128x128xf32>
    %119 = math.exp %118 : vector<128x128xf32>
    %cst_76 = arith.constant dense<0.000000e+00> : vector<128xf32>
    %120 = vector.multi_reduction <add>, %119, %cst_76 [1] : vector<128x128xf32> to vector<128xf32>
    %121 = vector.shape_cast %120 : vector<128xf32> to vector<128x1xf32>
    %122 = tpu.reciprocal %121 {approx = true} : vector<128x1xf32> -> vector<128x1xf32>
    %123 = vector.broadcast %122 : vector<128x1xf32> to vector<128x128xf32>
    %124 = arith.mulf %119, %123 : vector<128x128xf32>
    %125 = arith.truncf %124 : vector<128x128xf32> to vector<128x128xbf16>
    %cst_77 = arith.constant dense<0.000000e+00> : vector<128x32xf32>
    %126 = tpu.matmul %125, %113, %cst_77 {dimension_numbers = #tpu.dot_dimension_numbers<[1], [0], [0], [1], [0, 0, 1, 1], [], []>} : vector<128x128xbf16>, vector<128x32xbf16>, vector<128x32xf32> -> vector<128x32xf32>
    %c128_78 = arith.constant 128 : index
    %c64_79 = arith.constant 64 : index
    %127 = vector.load %arg4[%c128_78, %c64_79] : memref<256x128xf32, #tpu.memory_space<vmem>>, vector<128x32xf32>
    tpu.vector_store %arg4[%c128_78, %c64_79], %126 {strides = array<i32>} : memref<256x128xf32, #tpu.memory_space<vmem>>, vector<128x32xf32>,
    %c128_80 = arith.constant 128 : index
    %c96_81 = arith.constant 96 : index
    %128 = vector.load %arg5[%c128_80, %c96_81] : memref<256x384xbf16, #tpu.memory_space<vmem>>, vector<128x32xbf16>
    %c128_82 = arith.constant 128 : index
    %c224_83 = arith.constant 224 : index
    %129 = vector.load %arg5[%c128_82, %c224_83] : memref<256x384xbf16, #tpu.memory_space<vmem>>, vector<128x32xbf16>
    %c128_84 = arith.constant 128 : index
    %c352_85 = arith.constant 352 : index
    %130 = vector.load %arg5[%c128_84, %c352_85] : memref<256x384xbf16, #tpu.memory_space<vmem>>, vector<128x32xbf16>
    %cst_86 = arith.constant dense<0.000000e+00> : vector<128x128xf32>
    %131 = tpu.matmul %128, %129, %cst_86 {dimension_numbers = #tpu.dot_dimension_numbers<[1], [1], [0], [0], [0, 0, 1, 0], [], []>} : vector<128x32xbf16>, vector<128x32xbf16>, vector<128x128xf32> -> vector<128x128xf32>
    %cst_87 = arith.constant dense<0xFF800000> : vector<128xf32>
    %132 = vector.multi_reduction <maximumf>, %131, %cst_87 [1] : vector<128x128xf32> to vector<128xf32>
    %133 = vector.shape_cast %132 : vector<128xf32> to vector<128x1xf32>
    %134 = vector.broadcast %133 : vector<128x1xf32> to vector<128x128xf32>
    %135 = arith.subf %131, %134 : vector<128x128xf32>
    %136 = math.exp %135 : vector<128x128xf32>
    %cst_88 = arith.constant dense<0.000000e+00> : vector<128xf32>
    %137 = vector.multi_reduction <add>, %136, %cst_88 [1] : vector<128x128xf32> to vector<128xf32>
    %138 = vector.shape_cast %137 : vector<128xf32> to vector<128x1xf32>
    %139 = tpu.reciprocal %138 {approx = true} : vector<128x1xf32> -> vector<128x1xf32>
    %140 = vector.broadcast %139 : vector<128x1xf32> to vector<128x128xf32>
    %141 = arith.mulf %136, %140 : vector<128x128xf32>
    %142 = arith.truncf %141 : vector<128x128xf32> to vector<128x128xbf16>
    %cst_89 = arith.constant dense<0.000000e+00> : vector<128x32xf32>
    %143 = tpu.matmul %142, %130, %cst_89 {dimension_numbers = #tpu.dot_dimension_numbers<[1], [0], [0], [1], [0, 0, 1, 1], [], []>} : vector<128x128xbf16>, vector<128x32xbf16>, vector<128x32xf32> -> vector<128x32xf32>
    %c128_90 = arith.constant 128 : index
    %c96_91 = arith.constant 96 : index
    %144 = vector.load %arg4[%c128_90, %c96_91] : memref<256x128xf32, #tpu.memory_space<vmem>>, vector<128x32xf32>
    tpu.vector_store %arg4[%c128_90, %c96_91], %143 {strides = array<i32>} : memref<256x128xf32, #tpu.memory_space<vmem>>, vector<128x32xf32>,
    return
  }
  func.func @transform_0(%arg0: i32) -> (i32, i32) {
    %c0_i32 = arith.constant 0 : i32
    %c0_i32_0 = arith.constant 0 : i32
    %c0_i32_1 = arith.constant 0 : i32
    return %c0_i32, %c0_i32_0 : i32, i32
  }
  func.func @transform_1(%arg0: i32) -> (i32, i32) {
    %c0_i32 = arith.constant 0 : i32
    %c0_i32_0 = arith.constant 0 : i32
    %c0_i32_1 = arith.constant 0 : i32
    return %c0_i32, %c0_i32_0 : i32, i32
  }
  func.func @transform_2(%arg0: i32) -> (i32, i32) {
    %c0_i32 = arith.constant 0 : i32
    %c0_i32_0 = arith.constant 0 : i32
    %c0_i32_1 = arith.constant 0 : i32
    return %c0_i32, %c0_i32_0 : i32, i32
  }
  func.func @transform_3(%arg0: i32) -> (i32, i32) {
    %c0_i32 = arith.constant 0 : i32
    %c0_i32_0 = arith.constant 0 : i32
    %c0_i32_1 = arith.constant 0 : i32
    return %c0_i32, %c0_i32_0 : i32, i32
  }
}

</mosaic_0001>

<llo_original>
// kernel: tpu_custom_call.1
$region0: #{tpu_custom_call.1}
  #allocation0 [shape = 'u32[]', space=smem, size = 0x4, offset = 0x4, fixed_abs, tag = 'smem constant byte address 0x4 - core index']
  #allocation1 [shape = 'u32[144,128]{1,0:T(1,128)}', space=vmem, size = 0x12000, scoped, tag = 'internal scratch']
  #allocation2 [shape = 'bf16[256,384]{1,0:T(8,128)(2,1)}', space=vmem, size = 0x30000, scoped, tag = 'scratch operand']
  %s0 = inlined_call_operand.hbm [shape: f32[256,128], index: 0, kind: input, shape index: {}]
  %s1 = inlined_call_operand.hbm [shape: bf16[128,384], index: 1, kind: input, shape index: {}]
  %s2 = inlined_call_operand.vmem [shape: f32[1,384], index: 2, kind: input, shape index: {}]
  %s3 = inlined_call_operand.hbm [shape: f32[256,128], index: 3, kind: output, shape index: {}]
  %s4 = sld [smem:[#allocation0]]
  $region30: #{tpu_custom_call.1} parent=0
    _
  %s6 = ssub.s32 1, %s4
  %s7 = scalar_select 0, %s6, %s4
  $region1: #{tpu_custom_call.1} parent=0
    #allocation3 [shape = 'u8[131072]{0}', space=vmem, size = 0x20000, scoped, tag = 'input window, operand 0, single buffered']
    #allocation4 [shape = 's32[1]{0}', space=sflag, size = 0x4, scoped, tag = 'scoped memory for tpu_custom_call.1']
    #allocation5 [shape = 's32[1]{0}', space=sflag, size = 0x4, scoped, tag = 'scoped memory for tpu_custom_call.1']
    #allocation6 [shape = 'u8[98304]{0}', space=vmem, size = 0x18000, scoped, tag = 'input window, operand 1, single buffered']
    #allocation7 [shape = 's32[1]{0}', space=sflag, size = 0x4, scoped, tag = 'scoped memory for tpu_custom_call.1']
    #allocation8 [shape = 'u8[131072]{0}', space=vmem, size = 0x20000, scoped, tag = 'output window, operand 0, single buffered']
    %8 = vsyncpa [#allocation4], 0
    %9 = vsyncpa [#allocation7], 0
    %10 = vsyncpa [#allocation5], 0
    // Predicated region
    $region2: #{tpu_custom_call.1} parent=1 // pred_check
      _
    $region3: #{tpu_custom_call.1} parent=1 // pred_check_branch
      %12 = sbr.rel (0) target = $region5
    $region4: #{tpu_custom_call.1} parent=1 // pred_region
      %s14 = ssub.s32 4096, 4096
      %15 = vsyncadd [#allocation4], %s14
      %s16 = sshll.u32 [#allocation3], 4
      %s17 = int_to_ptr.vmem [resolvable:$true] %s16
      %22 = dma.hbm_to_vmem [thread:$0]  %s0, 4096, %s17, [#allocation4], 128, 128, 8
    $region5: #{tpu_custom_call.1} parent=1 // pred_fallthru
      _
    // Predicated region
    $region6: #{tpu_custom_call.1} parent=1 // pred_check
      _
    $region7: #{tpu_custom_call.1} parent=1 // pred_check_branch
      %24 = sbr.rel (0) target = $region9
    $region8: #{tpu_custom_call.1} parent=1 // pred_region
      %s26 = ssub.s32 3072, 3072
      %27 = vsyncadd [#allocation7], %s26
      %s28 = sshll.u32 [#allocation6], 4
      %s29 = int_to_ptr.vmem [resolvable:$true] %s28
      %34 = dma.hbm_to_vmem [thread:$0]  %s1, 3072, %s29, [#allocation7], 192, 192, 12
    $region9: #{tpu_custom_call.1} parent=1 // pred_fallthru
      _
    // Predicated region
    $region10: #{tpu_custom_call.1} parent=1 // pred_check
      _
    $region11: #{tpu_custom_call.1} parent=1 // pred_check_branch
      %36 = sbr.rel (0) target = $region13
    $region12: #{tpu_custom_call.1} parent=1 // pred_region
      _
    $region13: #{tpu_custom_call.1} parent=1 // pred_fallthru
      _
    // Predicated region
    $region14: #{tpu_custom_call.1} parent=1 // pred_check
      _
    $region15: #{tpu_custom_call.1} parent=1 // pred_check_branch
      %38 = sbr.rel (0) target = $region17
    $region16: #{tpu_custom_call.1} parent=1 // pred_region
      %39 = dma.done [#allocation4], 4096
    $region17: #{tpu_custom_call.1} parent=1 // pred_fallthru
      _
    // Predicated region
    $region18: #{tpu_custom_call.1} parent=1 // pred_check
      _
    $region19: #{tpu_custom_call.1} parent=1 // pred_check_branch
      %41 = sbr.rel (0) target = $region21
    $region20: #{tpu_custom_call.1} parent=1 // pred_region
      %42 = dma.done [#allocation7], 3072
    $region21: #{tpu_custom_call.1} parent=1 // pred_fallthru
      _
    %v44 = vld [vmem:[#allocation3] sm:$0xff]
    %v45 = vld [vmem:[#allocation3 + $0x8] sm:$0xff]
    %v46 = vld [vmem:[#allocation3 + $0x10] sm:$0xff]
    %v47 = vld [vmem:[#allocation3 + $0x18] sm:$0xff]
    %v48 = vld [vmem:[#allocation3 + $0x20] sm:$0xff]
    %v49 = vld [vmem:[#allocation3 + $0x28] sm:$0xff]
    %v50 = vld [vmem:[#allocation3 + $0x30] sm:$0xff]
    %v51 = vld [vmem:[#allocation3 + $0x38] sm:$0xff]
    %v52 = vld [vmem:[#allocation3 + $0x40] sm:$0xff]
    %v53 = vld [vmem:[#allocation3 + $0x48] sm:$0xff]
    %v54 = vld [vmem:[#allocation3 + $0x50] sm:$0xff]
    %v55 = vld [vmem:[#allocation3 + $0x58] sm:$0xff]
    %v56 = vld [vmem:[#allocation3 + $0x60] sm:$0xff]
    %v57 = vld [vmem:[#allocation3 + $0x68] sm:$0xff]
    %v58 = vld [vmem:[#allocation3 + $0x70] sm:$0xff]
    %v59 = vld [vmem:[#allocation3 + $0x78] sm:$0xff]
    %v60 = vld [vmem:[#allocation3 + $0x80] sm:$0xff]
    %v61 = vld [vmem:[#allocation3 + $0x88] sm:$0xff]
    %v62 = vld [vmem:[#allocation3 + $0x90] sm:$0xff]
    %v63 = vld [vmem:[#allocation3 + $0x98] sm:$0xff]
    %v64 = vld [vmem:[#allocation3 + $0xa0] sm:$0xff]
    %v65 = vld [vmem:[#allocation3 + $0xa8] sm:$0xff]
    %v66 = vld [vmem:[#allocation3 + $0xb0] sm:$0xff]
    %v67 = vld [vmem:[#allocation3 + $0xb8] sm:$0xff]
    %v68 = vld [vmem:[#allocation3 + $0xc0] sm:$0xff]
    %v69 = vld [vmem:[#allocation3 + $0xc8] sm:$0xff]
    %v70 = vld [vmem:[#allocation3 + $0xd0] sm:$0xff]
    %v71 = vld [vmem:[#allocation3 + $0xd8] sm:$0xff]
    %v72 = vld [vmem:[#allocation3 + $0xe0] sm:$0xff]
    %v73 = vld [vmem:[#allocation3 + $0xe8] sm:$0xff]
    %v74 = vld [vmem:[#allocation3 + $0xf0] sm:$0xff]
    %v75 = vld [vmem:[#allocation3 + $0xf8] sm:$0xff]
    %v76 = vpack.c.bf16 %v45, %v44
    %v77 = vpack.c.bf16 %v47, %v46
    %v78 = vpack.c.bf16 %v49, %v48
    %v79 = vpack.c.bf16 %v51, %v50
    %v80 = vpack.c.bf16 %v53, %v52
    %v81 = vpack.c.bf16 %v55, %v54
    %v82 = vpack.c.bf16 %v57, %v56
    %v83 = vpack.c.bf16 %v59, %v58
    %v84 = vpack.c.bf16 %v61, %v60
    %v85 = vpack.c.bf16 %v63, %v62
    %v86 = vpack.c.bf16 %v65, %v64
    %v87 = vpack.c.bf16 %v67, %v66
    %v88 = vpack.c.bf16 %v69, %v68
    %v89 = vpack.c.bf16 %v71, %v70
    %v90 = vpack.c.bf16 %v73, %v72
    %v91 = vpack.c.bf16 %v75, %v74
    %v92 = vld [vmem:[#allocation6] sm:$0xff]
    %v93 = vld [vmem:[#allocation6 + $0x8] sm:$0xf]
    %v94 = vld [vmem:[#allocation6 + $0xc] sm:$0xff]
    %v95 = vld [vmem:[#allocation6 + $0x14] sm:$0xf]
    %v96 = vld [vmem:[#allocation6 + $0x18] sm:$0xff]
    %v97 = vld [vmem:[#allocation6 + $0x20] sm:$0xf]
    %v98 = vld [vmem:[#allocation6 + $0x24] sm:$0xff]
    %v99 = vld [vmem:[#allocation6 + $0x2c] sm:$0xf]
    %v100 = vld [vmem:[#allocation6 + $0x30] sm:$0xff]
    %v101 = vld [vmem:[#allocation6 + $0x38] sm:$0xf]
    %v102 = vld [vmem:[#allocation6 + $0x3c] sm:$0xff]
    %v103 = vld [vmem:[#allocation6 + $0x44] sm:$0xf]
    %v104 = vld [vmem:[#allocation6 + $0x48] sm:$0xff]
    %v105 = vld [vmem:[#allocation6 + $0x50] sm:$0xf]
    %v106 = vld [vmem:[#allocation6 + $0x54] sm:$0xff]
    %v107 = vld [vmem:[#allocation6 + $0x5c] sm:$0xf]
    %v108 = vld [vmem:[#allocation6 + $0x60] sm:$0xff]
    %v109 = vld [vmem:[#allocation6 + $0x68] sm:$0xf]
    %v110 = vld [vmem:[#allocation6 + $0x6c] sm:$0xff]
    %v111 = vld [vmem:[#allocation6 + $0x74] sm:$0xf]
    %v112 = vld [vmem:[#allocation6 + $0x78] sm:$0xff]
    %v113 = vld [vmem:[#allocation6 + $0x80] sm:$0xf]
    %v114 = vld [vmem:[#allocation6 + $0x84] sm:$0xff]
    %v115 = vld [vmem:[#allocation6 + $0x8c] sm:$0xf]
    %v116 = vld [vmem:[#allocation6 + $0x90] sm:$0xff]
    %v117 = vld [vmem:[#allocation6 + $0x98] sm:$0xf]
    %v118 = vld [vmem:[#allocation6 + $0x9c] sm:$0xff]
    %v119 = vld [vmem:[#allocation6 + $0xa4] sm:$0xf]
    %v120 = vld [vmem:[#allocation6 + $0xa8] sm:$0xff]
    %v121 = vld [vmem:[#allocation6 + $0xb0] sm:$0xf]
    %v122 = vld [vmem:[#allocation6 + $0xb4] sm:$0xff]
    %v123 = vld [vmem:[#allocation6 + $0xbc] sm:$0xf]
    %v124 = vld [vmem:[%s2] sm:$0x7]
    %v126 = vlaneseq
    %v127 = vshrl.u32 %v126, 7
    %v128 = vsub.s32 0, %v127
    %v129 = vrot.slane %v124, %v128
    %v130 = vlaneseq
    %v131 = vshrl.u32 %v130, 7
    %v132 = vsub.s32 1, %v131
    %v133 = vrot.slane %v124, %v132
    %v134 = vlaneseq
    %v135 = vshrl.u32 %v134, 7
    %v136 = vsub.s32 2, %v135
    %v137 = vrot.slane %v124, %v136
    %v173 = vunpack.c.l.b16 %v92
    %v174 = vunpack.c.h.b16 %v92
    %v175 = vunpack.c.l.b16 %v93
    %v176 = vunpack.c.l.b16 %v94
    %v177 = vunpack.c.h.b16 %v94
    %v178 = vunpack.c.l.b16 %v95
    %v179 = vunpack.c.l.b16 %v96
    %v180 = vunpack.c.h.b16 %v96
    %v181 = vunpack.c.l.b16 %v97
    %v182 = vunpack.c.l.b16 %v98
    %v183 = vunpack.c.h.b16 %v98
    %v184 = vunpack.c.l.b16 %v99
    %v185 = vunpack.c.l.b16 %v100
    %v186 = vunpack.c.h.b16 %v100
    %v187 = vunpack.c.l.b16 %v101
    %v188 = vunpack.c.l.b16 %v102
    %v189 = vunpack.c.h.b16 %v102
    %v190 = vunpack.c.l.b16 %v103
    %v191 = vunpack.c.l.b16 %v104
    %v192 = vunpack.c.h.b16 %v104
    %v193 = vunpack.c.l.b16 %v105
    %v194 = vunpack.c.l.b16 %v106
    %v195 = vunpack.c.h.b16 %v106
    %v196 = vunpack.c.l.b16 %v107
    %v197 = vunpack.c.l.b16 %v108
    %v198 = vunpack.c.h.b16 %v108
    %v199 = vunpack.c.l.b16 %v109
    %v200 = vunpack.c.l.b16 %v110
    %v201 = vunpack.c.h.b16 %v110
    %v202 = vunpack.c.l.b16 %v111
    %v203 = vunpack.c.l.b16 %v112
    %v204 = vunpack.c.h.b16 %v112
    %v205 = vunpack.c.l.b16 %v113
    %v206 = vunpack.c.l.b16 %v114
    %v207 = vunpack.c.h.b16 %v114
    %v208 = vunpack.c.l.b16 %v115
    %v209 = vunpack.c.l.b16 %v116
    %v210 = vunpack.c.h.b16 %v116
    %v211 = vunpack.c.l.b16 %v117
    %v212 = vunpack.c.l.b16 %v118
    %v213 = vunpack.c.h.b16 %v118
    %v214 = vunpack.c.l.b16 %v119
    %v215 = vunpack.c.l.b16 %v120
    %v216 = vunpack.c.h.b16 %v120
    %v217 = vunpack.c.l.b16 %v121
    %v218 = vunpack.c.l.b16 %v122
    %v219 = vunpack.c.h.b16 %v122
    %v220 = vunpack.c.l.b16 %v123
    %v221 = vpack.c.b16 %v176, %v173
    %v222 = vpack.c.b16 %v177, %v174
    %v223 = vpack.c.b16 %v178, %v175
    %v224 = vpack.c.b16 %v182, %v179
    %v225 = vpack.c.b16 %v183, %v180
    %v226 = vpack.c.b16 %v184, %v181
    %v227 = vpack.c.b16 %v188, %v185
    %v228 = vpack.c.b16 %v189, %v186
    %v229 = vpack.c.b16 %v190, %v187
    %v230 = vpack.c.b16 %v194, %v191
    %v231 = vpack.c.b16 %v195, %v192
    %v232 = vpack.c.b16 %v196, %v193
    %v233 = vpack.c.b16 %v200, %v197
    %v234 = vpack.c.b16 %v201, %v198
    %v235 = vpack.c.b16 %v202, %v199
    %v236 = vpack.c.b16 %v206, %v203
    %v237 = vpack.c.b16 %v207, %v204
    %v238 = vpack.c.b16 %v208, %v205
    %v239 = vpack.c.b16 %v212, %v209
    %v240 = vpack.c.b16 %v213, %v210
    %v241 = vpack.c.b16 %v214, %v211
    %v242 = vpack.c.b16 %v218, %v215
    %v243 = vpack.c.b16 %v219, %v216
    %v244 = vpack.c.b16 %v220, %v217
    %269 = vmatprep.subr.bf16.mxu0 %v243
    %270 = vmatpush1.bf16.msra.mxu0 %v242
    %271 = vmatprep.subr.bf16.mxu0 %v240
    %272 = vmatpush1.bf16.msra.mxu0 %v239
    %273 = vmatprep.subr.bf16.mxu0 %v237
    %274 = vmatpush1.bf16.msra.mxu0 %v236
    %275 = vmatprep.subr.bf16.mxu0 %v234
    %276 = vmatpush1.bf16.msra.mxu0 %v233
    %277 = vmatprep.subr.bf16.mxu0 %v231
    %278 = vmatpush1.bf16.msra.mxu0 %v230
    %279 = vmatprep.subr.bf16.mxu0 %v228
    %280 = vmatpush1.bf16.msra.mxu0 %v227
    %281 = vmatprep.subr.bf16.mxu0 %v225
    %282 = vmatpush1.bf16.msra.mxu0 %v224
    %283 = vmatprep.subr.bf16.mxu0 %v222
    %284 = vmatpush1.bf16.msra.mxu0 %v221
    %285 = vmatprep.subr.bf16.mxu0 0
    %286 = vmatpush2.bf16.msra.mxu0 0
    %287 = vmatprep.subr.bf16.mxu0 0
    %288 = vmatpush2.bf16.msra.mxu0 0
    %289 = vmatprep.subr.bf16.mxu0 0
    %290 = vmatpush2.bf16.msra.mxu0 0
    %291 = vmatprep.subr.bf16.mxu0 0
    %292 = vmatpush2.bf16.msra.mxu0 0
    %293 = vmatprep.subr.bf16.mxu0 0
    %294 = vmatpush2.bf16.msra.mxu0 0
    %295 = vmatprep.subr.bf16.mxu0 0
    %296 = vmatpush2.bf16.msra.mxu0 0
    %297 = vmatprep.subr.bf16.mxu0 0
    %298 = vmatpush2.bf16.msra.mxu0 0
    %299 = vmatprep.subr.bf16.mxu0 0
    %300 = vmatpush2.bf16.msra.mxu0 0
    %301 = vmatprep.mubr.bf16.mxu0 0
    %302 = vmatmul.mubr.bf16.gmra.mxu0 %v76
    %v303 = vpop.f32.mrf.mxu0
    %v304 = vadd.f32 %v129, %v303
    %v305 = vpop.f32.mrf.mxu0
    %v306 = vadd.f32 %v133, %v305
    %v307 = vpop.f32.mrf.mxu0
    %v308 = vadd.f32 %v129, %v307
    %v309 = vpop.f32.mrf.mxu0
    %v310 = vadd.f32 %v133, %v309
    %311 = vmatprep.mubr.bf16.mxu0 0
    %312 = vmatmul.mubr.bf16.gmra.mxu0 %v77
    %v313 = vpop.f32.mrf.mxu0
    %v314 = vadd.f32 %v129, %v313
    %v315 = vpop.f32.mrf.mxu0
    %v316 = vadd.f32 %v133, %v315
    %v317 = vpop.f32.mrf.mxu0
    %v318 = vadd.f32 %v129, %v317
    %v319 = vpop.f32.mrf.mxu0
    %v320 = vadd.f32 %v133, %v319
    %321 = vmatprep.mubr.bf16.mxu0 0
    %322 = vmatmul.mubr.bf16.gmra.mxu0 %v78
    %v323 = vpop.f32.mrf.mxu0
    %v324 = vadd.f32 %v129, %v323
    %v325 = vpop.f32.mrf.mxu0
    %v326 = vadd.f32 %v133, %v325
    %v327 = vpop.f32.mrf.mxu0
    %v328 = vadd.f32 %v129, %v327
    %v329 = vpop.f32.mrf.mxu0
    %v330 = vadd.f32 %v133, %v329
    %331 = vmatprep.mubr.bf16.mxu0 0
    %332 = vmatmul.mubr.bf16.gmra.mxu0 %v79
    %v333 = vpop.f32.mrf.mxu0
    %v334 = vadd.f32 %v129, %v333
    %v335 = vpop.f32.mrf.mxu0
    %v336 = vadd.f32 %v133, %v335
    %v337 = vpop.f32.mrf.mxu0
    %v338 = vadd.f32 %v129, %v337
    %v339 = vpop.f32.mrf.mxu0
    %v340 = vadd.f32 %v133, %v339
    %341 = vmatprep.mubr.bf16.mxu0 0
    %342 = vmatmul.mubr.bf16.gmra.mxu0 %v80
    %v343 = vpop.f32.mrf.mxu0
    %v344 = vadd.f32 %v129, %v343
    %v345 = vpop.f32.mrf.mxu0
    %v346 = vadd.f32 %v133, %v345
    %v347 = vpop.f32.mrf.mxu0
    %v348 = vadd.f32 %v129, %v347
    %v349 = vpop.f32.mrf.mxu0
    %v350 = vadd.f32 %v133, %v349
    %351 = vmatprep.mubr.bf16.mxu0 0
    %352 = vmatmul.mubr.bf16.gmra.mxu0 %v81
    %v353 = vpop.f32.mrf.mxu0
    %v354 = vadd.f32 %v129, %v353
    %v355 = vpop.f32.mrf.mxu0
    %v356 = vadd.f32 %v133, %v355
    %v357 = vpop.f32.mrf.mxu0
    %v358 = vadd.f32 %v129, %v357
    %v359 = vpop.f32.mrf.mxu0
    %v360 = vadd.f32 %v133, %v359
    %361 = vmatprep.mubr.bf16.mxu0 0
    %362 = vmatmul.mubr.bf16.gmra.mxu0 %v82
    %v363 = vpop.f32.mrf.mxu0
    %v364 = vadd.f32 %v129, %v363
    %v365 = vpop.f32.mrf.mxu0
    %v366 = vadd.f32 %v133, %v365
    %v367 = vpop.f32.mrf.mxu0
    %v368 = vadd.f32 %v129, %v367
    %v369 = vpop.f32.mrf.mxu0
    %v370 = vadd.f32 %v133, %v369
    %371 = vmatprep.mubr.bf16.mxu0 0
    %372 = vmatmul.mubr.bf16.gmra.mxu0 %v83
    %v373 = vpop.f32.mrf.mxu0
    %v374 = vadd.f32 %v129, %v373
    %v375 = vpop.f32.mrf.mxu0
    %v376 = vadd.f32 %v133, %v375
    %v377 = vpop.f32.mrf.mxu0
    %v378 = vadd.f32 %v129, %v377
    %v379 = vpop.f32.mrf.mxu0
    %v380 = vadd.f32 %v133, %v379
    %381 = vmatprep.mubr.bf16.mxu0 0
    %382 = vmatmul.mubr.bf16.gmra.mxu0 %v84
    %v383 = vpop.f32.mrf.mxu0
    %v384 = vadd.f32 %v129, %v383
    %v385 = vpop.f32.mrf.mxu0
    %v386 = vadd.f32 %v133, %v385
    %v387 = vpop.f32.mrf.mxu0
    %v388 = vadd.f32 %v129, %v387
    %v389 = vpop.f32.mrf.mxu0
    %v390 = vadd.f32 %v133, %v389
    %391 = vmatprep.mubr.bf16.mxu0 0
    %392 = vmatmul.mubr.bf16.gmra.mxu0 %v85
    %v393 = vpop.f32.mrf.mxu0
    %v394 = vadd.f32 %v129, %v393
    %v395 = vpop.f32.mrf.mxu0
    %v396 = vadd.f32 %v133, %v395
    %v397 = vpop.f32.mrf.mxu0
    %v398 = vadd.f32 %v129, %v397
    %v399 = vpop.f32.mrf.mxu0
    %v400 = vadd.f32 %v133, %v399
    %401 = vmatprep.mubr.bf16.mxu0 0
    %402 = vmatmul.mubr.bf16.gmra.mxu0 %v86
    %v403 = vpop.f32.mrf.mxu0
    %v404 = vadd.f32 %v129, %v403
    %v405 = vpop.f32.mrf.mxu0
    %v406 = vadd.f32 %v133, %v405
    %v407 = vpop.f32.mrf.mxu0
    %v408 = vadd.f32 %v129, %v407
    %v409 = vpop.f32.mrf.mxu0
    %v410 = vadd.f32 %v133, %v409
    %411 = vmatprep.mubr.bf16.mxu0 0
    %412 = vmatmul.mubr.bf16.gmra.mxu0 %v87
    %v413 = vpop.f32.mrf.mxu0
    %v414 = vadd.f32 %v129, %v413
    %v415 = vpop.f32.mrf.mxu0
    %v416 = vadd.f32 %v133, %v415
    %v417 = vpop.f32.mrf.mxu0
    %v418 = vadd.f32 %v129, %v417
    %v419 = vpop.f32.mrf.mxu0
    %v420 = vadd.f32 %v133, %v419
    %421 = vmatprep.mubr.bf16.mxu0 0
    %422 = vmatmul.mubr.bf16.gmra.mxu0 %v88
    %v423 = vpop.f32.mrf.mxu0
    %v424 = vadd.f32 %v129, %v423
    %v425 = vpop.f32.mrf.mxu0
    %v426 = vadd.f32 %v133, %v425
    %v427 = vpop.f32.mrf.mxu0
    %v428 = vadd.f32 %v129, %v427
    %v429 = vpop.f32.mrf.mxu0
    %v430 = vadd.f32 %v133, %v429
    %431 = vmatprep.mubr.bf16.mxu0 0
    %432 = vmatmul.mubr.bf16.gmra.mxu0 %v89
    %v433 = vpop.f32.mrf.mxu0
    %v434 = vadd.f32 %v129, %v433
    %v435 = vpop.f32.mrf.mxu0
    %v436 = vadd.f32 %v133, %v435
    %v437 = vpop.f32.mrf.mxu0
    %v438 = vadd.f32 %v129, %v437
    %v439 = vpop.f32.mrf.mxu0
    %v440 = vadd.f32 %v133, %v439
    %441 = vmatprep.mubr.bf16.mxu0 0
    %442 = vmatmul.mubr.bf16.gmra.mxu0 %v90
    %v443 = vpop.f32.mrf.mxu0
    %v444 = vadd.f32 %v129, %v443
    %v445 = vpop.f32.mrf.mxu0
    %v446 = vadd.f32 %v133, %v445
    %v447 = vpop.f32.mrf.mxu0
    %v448 = vadd.f32 %v129, %v447
    %v449 = vpop.f32.mrf.mxu0
    %v450 = vadd.f32 %v133, %v449
    %451 = vmatprep.mubr.bf16.mxu0 0
    %452 = vmatmul.mubr.bf16.gmra.mxu0 %v91
    %v453 = vpop.f32.mrf.mxu0
    %v454 = vadd.f32 %v129, %v453
    %v455 = vpop.f32.mrf.mxu0
    %v456 = vadd.f32 %v133, %v455
    %v457 = vpop.f32.mrf.mxu0
    %v458 = vadd.f32 %v129, %v457
    %v459 = vpop.f32.mrf.mxu0
    %v460 = vadd.f32 %v133, %v459
    %461 = vdwg.mxu0
    %462 = vmatprep.subr.bf16.mxu0 0
    %463 = vmatpush1.bf16.msra.mxu0 %v244
    %464 = vmatprep.subr.bf16.mxu0 0
    %465 = vmatpush1.bf16.msra.mxu0 %v241
    %466 = vmatprep.subr.bf16.mxu0 0
    %467 = vmatpush1.bf16.msra.mxu0 %v238
    %468 = vmatprep.subr.bf16.mxu0 0
    %469 = vmatpush1.bf16.msra.mxu0 %v235
    %470 = vmatprep.subr.bf16.mxu0 0
    %471 = vmatpush1.bf16.msra.mxu0 %v232
    %472 = vmatprep.subr.bf16.mxu0 0
    %473 = vmatpush1.bf16.msra.mxu0 %v229
    %474 = vmatprep.subr.bf16.mxu0 0
    %475 = vmatpush1.bf16.msra.mxu0 %v226
    %476 = vmatprep.subr.bf16.mxu0 0
    %477 = vmatpush1.bf16.msra.mxu0 %v223
    %478 = vmatprep.subr.bf16.mxu0 0
    %479 = vmatpush2.bf16.msra.mxu0 0
    %480 = vmatprep.subr.bf16.mxu0 0
    %481 = vmatpush2.bf16.msra.mxu0 0
    %482 = vmatprep.subr.bf16.mxu0 0
    %483 = vmatpush2.bf16.msra.mxu0 0
    %484 = vmatprep.subr.bf16.mxu0 0
    %485 = vmatpush2.bf16.msra.mxu0 0
    %486 = vmatprep.subr.bf16.mxu0 0
    %487 = vmatpush2.bf16.msra.mxu0 0
    %488 = vmatprep.subr.bf16.mxu0 0
    %489 = vmatpush2.bf16.msra.mxu0 0
    %490 = vmatprep.subr.bf16.mxu0 0
    %491 = vmatpush2.bf16.msra.mxu0 0
    %492 = vmatprep.subr.bf16.mxu0 0
    %493 = vmatpush2.bf16.msra.mxu0 0
    %494 = vmatprep.mubr.bf16.mxu0 0
    %495 = vmatmul.mubr.bf16.gmra.mxu0 %v76
    %v496 = vpop.f32.mrf.mxu0
    %v497 = vadd.f32 %v137, %v496
    %v498 = vpop.f32.mrf.mxu0
    %v499 = vpop.f32.mrf.mxu0
    %v500 = vadd.f32 %v137, %v499
    %v501 = vpop.f32.mrf.mxu0
    %502 = vmatprep.mubr.bf16.mxu0 0
    %503 = vmatmul.mubr.bf16.gmra.mxu0 %v77
    %v504 = vpop.f32.mrf.mxu0
    %v505 = vadd.f32 %v137, %v504
    %v506 = vpop.f32.mrf.mxu0
    %v507 = vpop.f32.mrf.mxu0
    %v508 = vadd.f32 %v137, %v507
    %v509 = vpop.f32.mrf.mxu0
    %510 = vmatprep.mubr.bf16.mxu0 0
    %511 = vmatmul.mubr.bf16.gmra.mxu0 %v78
    %v512 = vpop.f32.mrf.mxu0
    %v513 = vadd.f32 %v137, %v512
    %v514 = vpop.f32.mrf.mxu0
    %v515 = vpop.f32.mrf.mxu0
    %v516 = vadd.f32 %v137, %v515
    %v517 = vpop.f32.mrf.mxu0
    %518 = vmatprep.mubr.bf16.mxu0 0
    %519 = vmatmul.mubr.bf16.gmra.mxu0 %v79
    %v520 = vpop.f32.mrf.mxu0
    %v521 = vadd.f32 %v137, %v520
    %v522 = vpop.f32.mrf.mxu0
    %v523 = vpop.f32.mrf.mxu0
    %v524 = vadd.f32 %v137, %v523
    %v525 = vpop.f32.mrf.mxu0
    %526 = vmatprep.mubr.bf16.mxu0 0
    %527 = vmatmul.mubr.bf16.gmra.mxu0 %v80
    %v528 = vpop.f32.mrf.mxu0
    %v529 = vadd.f32 %v137, %v528
    %v530 = vpop.f32.mrf.mxu0
    %v531 = vpop.f32.mrf.mxu0
    %v532 = vadd.f32 %v137, %v531
    %v533 = vpop.f32.mrf.mxu0
    %534 = vmatprep.mubr.bf16.mxu0 0
    %535 = vmatmul.mubr.bf16.gmra.mxu0 %v81
    %v536 = vpop.f32.mrf.mxu0
    %v537 = vadd.f32 %v137, %v536
    %v538 = vpop.f32.mrf.mxu0
    %v539 = vpop.f32.mrf.mxu0
    %v540 = vadd.f32 %v137, %v539
    %v541 = vpop.f32.mrf.mxu0
    %542 = vmatprep.mubr.bf16.mxu0 0
    %543 = vmatmul.mubr.bf16.gmra.mxu0 %v82
    %v544 = vpop.f32.mrf.mxu0
    %v545 = vadd.f32 %v137, %v544
    %v546 = vpop.f32.mrf.mxu0
    %v547 = vpop.f32.mrf.mxu0
    %v548 = vadd.f32 %v137, %v547
    %v549 = vpop.f32.mrf.mxu0
    %550 = vmatprep.mubr.bf16.mxu0 0
    %551 = vmatmul.mubr.bf16.gmra.mxu0 %v83
    %v552 = vpop.f32.mrf.mxu0
    %v553 = vadd.f32 %v137, %v552
    %v554 = vpop.f32.mrf.mxu0
    %v555 = vpop.f32.mrf.mxu0
    %v556 = vadd.f32 %v137, %v555
    %v557 = vpop.f32.mrf.mxu0
    %558 = vmatprep.mubr.bf16.mxu0 0
    %559 = vmatmul.mubr.bf16.gmra.mxu0 %v84
    %v560 = vpop.f32.mrf.mxu0
    %v561 = vadd.f32 %v137, %v560
    %v562 = vpop.f32.mrf.mxu0
    %v563 = vpop.f32.mrf.mxu0
    %v564 = vadd.f32 %v137, %v563
    %v565 = vpop.f32.mrf.mxu0
    %566 = vmatprep.mubr.bf16.mxu0 0
    %567 = vmatmul.mubr.bf16.gmra.mxu0 %v85
    %v568 = vpop.f32.mrf.mxu0
    %v569 = vadd.f32 %v137, %v568
    %v570 = vpop.f32.mrf.mxu0
    %v571 = vpop.f32.mrf.mxu0
    %v572 = vadd.f32 %v137, %v571
    %v573 = vpop.f32.mrf.mxu0
    %574 = vmatprep.mubr.bf16.mxu0 0
    %575 = vmatmul.mubr.bf16.gmra.mxu0 %v86
    %v576 = vpop.f32.mrf.mxu0
    %v577 = vadd.f32 %v137, %v576
    %v578 = vpop.f32.mrf.mxu0
    %v579 = vpop.f32.mrf.mxu0
    %v580 = vadd.f32 %v137, %v579
    %v581 = vpop.f32.mrf.mxu0
    %582 = vmatprep.mubr.bf16.mxu0 0
    %583 = vmatmul.mubr.bf16.gmra.mxu0 %v87
    %v584 = vpop.f32.mrf.mxu0
    %v585 = vadd.f32 %v137, %v584
    %v586 = vpop.f32.mrf.mxu0
    %v587 = vpop.f32.mrf.mxu0
    %v588 = vadd.f32 %v137, %v587
    %v589 = vpop.f32.mrf.mxu0
    %590 = vmatprep.mubr.bf16.mxu0 0
    %591 = vmatmul.mubr.bf16.gmra.mxu0 %v88
    %v592 = vpop.f32.mrf.mxu0
    %v593 = vadd.f32 %v137, %v592
    %v594 = vpop.f32.mrf.mxu0
    %v595 = vpop.f32.mrf.mxu0
    %v596 = vadd.f32 %v137, %v595
    %v597 = vpop.f32.mrf.mxu0
    %598 = vmatprep.mubr.bf16.mxu0 0
    %599 = vmatmul.mubr.bf16.gmra.mxu0 %v89
    %v600 = vpop.f32.mrf.mxu0
    %v601 = vadd.f32 %v137, %v600
    %v602 = vpop.f32.mrf.mxu0
    %v603 = vpop.f32.mrf.mxu0
    %v604 = vadd.f32 %v137, %v603
    %v605 = vpop.f32.mrf.mxu0
    %606 = vmatprep.mubr.bf16.mxu0 0
    %607 = vmatmul.mubr.bf16.gmra.mxu0 %v90
    %v608 = vpop.f32.mrf.mxu0
    %v609 = vadd.f32 %v137, %v608
    %v610 = vpop.f32.mrf.mxu0
    %v611 = vpop.f32.mrf.mxu0
    %v612 = vadd.f32 %v137, %v611
    %v613 = vpop.f32.mrf.mxu0
    %614 = vmatprep.mubr.bf16.mxu0 0
    %615 = vmatmul.mubr.bf16.gmra.mxu0 %v91
    %v616 = vpop.f32.mrf.mxu0
    %v617 = vadd.f32 %v137, %v616
    %v618 = vpop.f32.mrf.mxu0
    %v619 = vpop.f32.mrf.mxu0
    %v620 = vadd.f32 %v137, %v619
    %v621 = vpop.f32.mrf.mxu0
    %622 = vdwg.mxu0
    %v623 = vpack.c.bf16 %v308, %v304
    %v624 = vpack.c.bf16 %v310, %v306
    %v625 = vpack.c.bf16 %v500, %v497
    %v626 = vpack.c.bf16 %v318, %v314
    %v627 = vpack.c.bf16 %v320, %v316
    %v628 = vpack.c.bf16 %v508, %v505
    %v629 = vpack.c.bf16 %v328, %v324
    %v630 = vpack.c.bf16 %v330, %v326
    %v631 = vpack.c.bf16 %v516, %v513
    %v632 = vpack.c.bf16 %v338, %v334
    %v633 = vpack.c.bf16 %v340, %v336
    %v634 = vpack.c.bf16 %v524, %v521
    %v635 = vpack.c.bf16 %v348, %v344
    %v636 = vpack.c.bf16 %v350, %v346
    %v637 = vpack.c.bf16 %v532, %v529
    %v638 = vpack.c.bf16 %v358, %v354
    %v639 = vpack.c.bf16 %v360, %v356
    %v640 = vpack.c.bf16 %v540, %v537
    %v641 = vpack.c.bf16 %v368, %v364
    %v642 = vpack.c.bf16 %v370, %v366
    %v643 = vpack.c.bf16 %v548, %v545
    %v644 = vpack.c.bf16 %v378, %v374
    %v645 = vpack.c.bf16 %v380, %v376
    %v646 = vpack.c.bf16 %v556, %v553
    %v647 = vpack.c.bf16 %v388, %v384
    %v648 = vpack.c.bf16 %v390, %v386
    %v649 = vpack.c.bf16 %v564, %v561
    %v650 = vpack.c.bf16 %v398, %v394
    %v651 = vpack.c.bf16 %v400, %v396
    %v652 = vpack.c.bf16 %v572, %v569
    %v653 = vpack.c.bf16 %v408, %v404
    %v654 = vpack.c.bf16 %v410, %v406
    %v655 = vpack.c.bf16 %v580, %v577
    %v656 = vpack.c.bf16 %v418, %v414
    %v657 = vpack.c.bf16 %v420, %v416
    %v658 = vpack.c.bf16 %v588, %v585
    %v659 = vpack.c.bf16 %v428, %v424
    %v660 = vpack.c.bf16 %v430, %v426
    %v661 = vpack.c.bf16 %v596, %v593
    %v662 = vpack.c.bf16 %v438, %v434
    %v663 = vpack.c.bf16 %v440, %v436
    %v664 = vpack.c.bf16 %v604, %v601
    %v665 = vpack.c.bf16 %v448, %v444
    %v666 = vpack.c.bf16 %v450, %v446
    %v667 = vpack.c.bf16 %v612, %v609
    %v668 = vpack.c.bf16 %v458, %v454
    %v669 = vpack.c.bf16 %v460, %v456
    %v670 = vpack.c.bf16 %v620, %v617
    %v719 = vunpack.c.l.b16 %v623
    %v720 = vunpack.c.l.b16 %v624
    %v721 = vunpack.c.l.b16 %v625
    %v722 = vunpack.c.h.b16 %v623
    %v723 = vunpack.c.h.b16 %v624
    %v724 = vunpack.c.h.b16 %v625
    %v725 = vunpack.c.l.b16 %v626
    %v726 = vunpack.c.l.b16 %v627
    %v727 = vunpack.c.l.b16 %v628
    %v728 = vunpack.c.h.b16 %v626
    %v729 = vunpack.c.h.b16 %v627
    %v730 = vunpack.c.h.b16 %v628
    %v731 = vunpack.c.l.b16 %v629
    %v732 = vunpack.c.l.b16 %v630
    %v733 = vunpack.c.l.b16 %v631
    %v734 = vunpack.c.h.b16 %v629
    %v735 = vunpack.c.h.b16 %v630
    %v736 = vunpack.c.h.b16 %v631
    %v737 = vunpack.c.l.b16 %v632
    %v738 = vunpack.c.l.b16 %v633
    %v739 = vunpack.c.l.b16 %v634
    %v740 = vunpack.c.h.b16 %v632
    %v741 = vunpack.c.h.b16 %v633
    %v742 = vunpack.c.h.b16 %v634
    %v743 = vunpack.c.l.b16 %v635
    %v744 = vunpack.c.l.b16 %v636
    %v745 = vunpack.c.l.b16 %v637
    %v746 = vunpack.c.h.b16 %v635
    %v747 = vunpack.c.h.b16 %v636
    %v748 = vunpack.c.h.b16 %v637
    %v749 = vunpack.c.l.b16 %v638
    %v750 = vunpack.c.l.b16 %v639
    %v751 = vunpack.c.l.b16 %v640
    %v752 = vunpack.c.h.b16 %v638
    %v753 = vunpack.c.h.b16 %v639
    %v754 = vunpack.c.h.b16 %v640
    %v755 = vunpack.c.l.b16 %v641
    %v756 = vunpack.c.l.b16 %v642
    %v757 = vunpack.c.l.b16 %v643
    %v758 = vunpack.c.h.b16 %v641
    %v759 = vunpack.c.h.b16 %v642
    %v760 = vunpack.c.h.b16 %v643
    %v761 = vunpack.c.l.b16 %v644
    %v762 = vunpack.c.l.b16 %v645
    %v763 = vunpack.c.l.b16 %v646
    %v764 = vunpack.c.h.b16 %v644
    %v765 = vunpack.c.h.b16 %v645
    %v766 = vunpack.c.h.b16 %v646
    %v767 = vunpack.c.l.b16 %v647
    %v768 = vunpack.c.l.b16 %v648
    %v769 = vunpack.c.l.b16 %v649
    %v770 = vunpack.c.h.b16 %v647
    %v771 = vunpack.c.h.b16 %v648
    %v772 = vunpack.c.h.b16 %v649
    %v773 = vunpack.c.l.b16 %v650
    %v774 = vunpack.c.l.b16 %v651
    %v775 = vunpack.c.l.b16 %v652
    %v776 = vunpack.c.h.b16 %v650
    %v777 = vunpack.c.h.b16 %v651
    %v778 = vunpack.c.h.b16 %v652
    %v779 = vunpack.c.l.b16 %v653
    %v780 = vunpack.c.l.b16 %v654
    %v781 = vunpack.c.l.b16 %v655
    %v782 = vunpack.c.h.b16 %v653
    %v783 = vunpack.c.h.b16 %v654
    %v784 = vunpack.c.h.b16 %v655
    %v785 = vunpack.c.l.b16 %v656
    %v786 = vunpack.c.l.b16 %v657
    %v787 = vunpack.c.l.b16 %v658
    %v788 = vunpack.c.h.b16 %v656
    %v789 = vunpack.c.h.b16 %v657
    %v790 = vunpack.c.h.b16 %v658
    %v791 = vunpack.c.l.b16 %v659
    %v792 = vunpack.c.l.b16 %v660
    %v793 = vunpack.c.l.b16 %v661
    %v794 = vunpack.c.h.b16 %v659
    %v795 = vunpack.c.h.b16 %v660
    %v796 = vunpack.c.h.b16 %v661
    %v797 = vunpack.c.l.b16 %v662
    %v798 = vunpack.c.l.b16 %v663
    %v799 = vunpack.c.l.b16 %v664
    %v800 = vunpack.c.h.b16 %v662
    %v801 = vunpack.c.h.b16 %v663
    %v802 = vunpack.c.h.b16 %v664
    %v803 = vunpack.c.l.b16 %v665
    %v804 = vunpack.c.l.b16 %v666
    %v805 = vunpack.c.l.b16 %v667
    %v806 = vunpack.c.h.b16 %v665
    %v807 = vunpack.c.h.b16 %v666
    %v808 = vunpack.c.h.b16 %v667
    %v809 = vunpack.c.l.b16 %v668
    %v810 = vunpack.c.l.b16 %v669
    %v811 = vunpack.c.l.b16 %v670
    %v812 = vunpack.c.h.b16 %v668
    %v813 = vunpack.c.h.b16 %v669
    %v814 = vunpack.c.h.b16 %v670
    %v815 = vpack.c.b16 %v720, %v719
    %v816 = vpack.c.b16 %v721, %v721
    %v817 = vpack.c.b16 %v723, %v722
    %v818 = vpack.c.b16 %v724, %v724
    %v819 = vpack.c.b16 %v726, %v725
    %v820 = vpack.c.b16 %v727, %v727
    %v821 = vpack.c.b16 %v729, %v728
    %v822 = vpack.c.b16 %v730, %v730
    %v823 = vpack.c.b16 %v732, %v731
    %v824 = vpack.c.b16 %v733, %v733
    %v825 = vpack.c.b16 %v735, %v734
    %v826 = vpack.c.b16 %v736, %v736
    %v827 = vpack.c.b16 %v738, %v737
    %v828 = vpack.c.b16 %v739, %v739
    %v829 = vpack.c.b16 %v741, %v740
    %v830 = vpack.c.b16 %v742, %v742
    %v831 = vpack.c.b16 %v744, %v743
    %v832 = vpack.c.b16 %v745, %v745
    %v833 = vpack.c.b16 %v747, %v746
    %v834 = vpack.c.b16 %v748, %v748
    %v835 = vpack.c.b16 %v750, %v749
    %v836 = vpack.c.b16 %v751, %v751
    %v837 = vpack.c.b16 %v753, %v752
    %v838 = vpack.c.b16 %v754, %v754
    %v839 = vpack.c.b16 %v756, %v755
    %v840 = vpack.c.b16 %v757, %v757
    %v841 = vpack.c.b16 %v759, %v758
    %v842 = vpack.c.b16 %v760, %v760
    %v843 = vpack.c.b16 %v762, %v761
    %v844 = vpack.c.b16 %v763, %v763
    %v845 = vpack.c.b16 %v765, %v764
    %v846 = vpack.c.b16 %v766, %v766
    %v847 = vpack.c.b16 %v768, %v767
    %v848 = vpack.c.b16 %v769, %v769
    %v849 = vpack.c.b16 %v771, %v770
    %v850 = vpack.c.b16 %v772, %v772
    %v851 = vpack.c.b16 %v774, %v773
    %v852 = vpack.c.b16 %v775, %v775
    %v853 = vpack.c.b16 %v777, %v776
    %v854 = vpack.c.b16 %v778, %v778
    %v855 = vpack.c.b16 %v780, %v779
    %v856 = vpack.c.b16 %v781, %v781
    %v857 = vpack.c.b16 %v783, %v782
    %v858 = vpack.c.b16 %v784, %v784
    %v859 = vpack.c.b16 %v786, %v785
    %v860 = vpack.c.b16 %v787, %v787
    %v861 = vpack.c.b16 %v789, %v788
    %v862 = vpack.c.b16 %v790, %v790
    %v863 = vpack.c.b16 %v792, %v791
    %v864 = vpack.c.b16 %v793, %v793
    %v865 = vpack.c.b16 %v795, %v794
    %v866 = vpack.c.b16 %v796, %v796
    %v867 = vpack.c.b16 %v798, %v797
    %v868 = vpack.c.b16 %v799, %v799
    %v869 = vpack.c.b16 %v801, %v800
    %v870 = vpack.c.b16 %v802, %v802
    %v871 = vpack.c.b16 %v804, %v803
    %v872 = vpack.c.b16 %v805, %v805
    %v873 = vpack.c.b16 %v807, %v806
    %v874 = vpack.c.b16 %v808, %v808
    %v875 = vpack.c.b16 %v810, %v809
    %v876 = vpack.c.b16 %v811, %v811
    %v877 = vpack.c.b16 %v813, %v812
    %v878 = vpack.c.b16 %v814, %v814
    %943 = vst [vmem:[#allocation2] sm:$0xff] %v815
    %944 = vst [vmem:[#allocation2 + $0x8] sm:$0xf] %v816
    %945 = vst [vmem:[#allocation2 + $0xc] sm:$0xff] %v817
    %946 = vst [vmem:[#allocation2 + $0x14] sm:$0xf] %v818
    %947 = vst [vmem:[#allocation2 + $0x18] sm:$0xff] %v819
    %948 = vst [vmem:[#allocation2 + $0x20] sm:$0xf] %v820
    %949 = vst [vmem:[#allocation2 + $0x24] sm:$0xff] %v821
    %950 = vst [vmem:[#allocation2 + $0x2c] sm:$0xf] %v822
    %951 = vst [vmem:[#allocation2 + $0x30] sm:$0xff] %v823
    %952 = vst [vmem:[#allocation2 + $0x38] sm:$0xf] %v824
    %953 = vst [vmem:[#allocation2 + $0x3c] sm:$0xff] %v825
    %954 = vst [vmem:[#allocation2 + $0x44] sm:$0xf] %v826
    %955 = vst [vmem:[#allocation2 + $0x48] sm:$0xff] %v827
    %956 = vst [vmem:[#allocation2 + $0x50] sm:$0xf] %v828
    %957 = vst [vmem:[#allocation2 + $0x54] sm:$0xff] %v829
    %958 = vst [vmem:[#allocation2 + $0x5c] sm:$0xf] %v830
    %959 = vst [vmem:[#allocation2 + $0x60] sm:$0xff] %v831
    %960 = vst [vmem:[#allocation2 + $0x68] sm:$0xf] %v832
    %961 = vst [vmem:[#allocation2 + $0x6c] sm:$0xff] %v833
    %962 = vst [vmem:[#allocation2 + $0x74] sm:$0xf] %v834
    %963 = vst [vmem:[#allocation2 + $0x78] sm:$0xff] %v835
    %964 = vst [vmem:[#allocation2 + $0x80] sm:$0xf] %v836
    %965 = vst [vmem:[#allocation2 + $0x84] sm:$0xff] %v837
    %966 = vst [vmem:[#allocation2 + $0x8c] sm:$0xf] %v838
    %967 = vst [vmem:[#allocation2 + $0x90] sm:$0xff] %v839
    %968 = vst [vmem:[#allocation2 + $0x98] sm:$0xf] %v840
    %969 = vst [vmem:[#allocation2 + $0x9c] sm:$0xff] %v841
    %970 = vst [vmem:[#allocation2 + $0xa4] sm:$0xf] %v842
    %971 = vst [vmem:[#allocation2 + $0xa8] sm:$0xff] %v843
    %972 = vst [vmem:[#allocation2 + $0xb0] sm:$0xf] %v844
    %973 = vst [vmem:[#allocation2 + $0xb4] sm:$0xff] %v845
    %974 = vst [vmem:[#allocation2 + $0xbc] sm:$0xf] %v846
    %975 = vst [vmem:[#allocation2 + $0xc0] sm:$0xff] %v847
    %976 = vst [vmem:[#allocation2 + $0xc8] sm:$0xf] %v848
    %977 = vst [vmem:[#allocation2 + $0xcc] sm:$0xff] %v849
    %978 = vst [vmem:[#allocation2 + $0xd4] sm:$0xf] %v850
    %979 = vst [vmem:[#allocation2 + $0xd8] sm:$0xff] %v851
    %980 = vst [vmem:[#allocation2 + $0xe0] sm:$0xf] %v852
    %981 = vst [vmem:[#allocation2 + $0xe4] sm:$0xff] %v853
    %982 = vst [vmem:[#allocation2 + $0xec] sm:$0xf] %v854
    %983 = vst [vmem:[#allocation2 + $0xf0] sm:$0xff] %v855
    %984 = vst [vmem:[#allocation2 + $0xf8] sm:$0xf] %v856
    %985 = vst [vmem:[#allocation2 + $0xfc] sm:$0xff] %v857
    %986 = vst [vmem:[#allocation2 + $0x104] sm:$0xf] %v858
    %987 = vst [vmem:[#allocation2 + $0x108] sm:$0xff] %v859
    %988 = vst [vmem:[#allocation2 + $0x110] sm:$0xf] %v860
    %989 = vst [vmem:[#allocation2 + $0x114] sm:$0xff] %v861
    %990 = vst [vmem:[#allocation2 + $0x11c] sm:$0xf] %v862
    %991 = vst [vmem:[#allocation2 + $0x120] sm:$0xff] %v863
    %992 = vst [vmem:[#allocation2 + $0x128] sm:$0xf] %v864
    %993 = vst [vmem:[#allocation2 + $0x12c] sm:$0xff] %v865
    %994 = vst [vmem:[#allocation2 + $0x134] sm:$0xf] %v866
    %995 = vst [vmem:[#allocation2 + $0x138] sm:$0xff] %v867
    %996 = vst [vmem:[#allocation2 + $0x140] sm:$0xf] %v868
    %997 = vst [vmem:[#allocation2 + $0x144] sm:$0xff] %v869
    %998 = vst [vmem:[#allocation2 + $0x14c] sm:$0xf] %v870
    %999 = vst [vmem:[#allocation2 + $0x150] sm:$0xff] %v871
    %1000 = vst [vmem:[#allocation2 + $0x158] sm:$0xf] %v872
    %1001 = vst [vmem:[#allocation2 + $0x15c] sm:$0xff] %v873
    %1002 = vst [vmem:[#allocation2 + $0x164] sm:$0xf] %v874
    %1003 = vst [vmem:[#allocation2 + $0x168] sm:$0xff] %v875
    %1004 = vst [vmem:[#allocation2 + $0x170] sm:$0xf] %v876
    %1005 = vst [vmem:[#allocation2 + $0x174] sm:$0xff] %v877
    %1006 = vst [vmem:[#allocation2 + $0x17c] sm:$0xf] %v878
    %v1007 = vld [vmem:[#allocation2] sm:$0xf]
    %v1008 = vld [vmem:[#allocation2 + $0xc] sm:$0xf]
    %v1009 = vld [vmem:[#allocation2 + $0x18] sm:$0xf]
    %v1010 = vld [vmem:[#allocation2 + $0x24] sm:$0xf]
    %v1011 = vld [vmem:[#allocation2 + $0x30] sm:$0xf]
    %v1012 = vld [vmem:[#allocation2 + $0x3c] sm:$0xf]
    %v1013 = vld [vmem:[#allocation2 + $0x48] sm:$0xf]
    %v1014 = vld [vmem:[#allocation2 + $0x54] sm:$0xf]
    %v1015 = vld [vmem:[#allocation2 + $0x60] sm:$0xf]
    %v1016 = vld [vmem:[#allocation2 + $0x6c] sm:$0xf]
    %v1017 = vld [vmem:[#allocation2 + $0x78] sm:$0xf]
    %v1018 = vld [vmem:[#allocation2 + $0x84] sm:$0xf]
    %v1019 = vld [vmem:[#allocation2 + $0x90] sm:$0xf]
    %v1020 = vld [vmem:[#allocation2 + $0x9c] sm:$0xf]
    %v1021 = vld [vmem:[#allocation2 + $0xa8] sm:$0xf]
    %v1022 = vld [vmem:[#allocation2 + $0xb4] sm:$0xf]
    %v1023 = vld [vmem:[#allocation2 + $0x4] sm:$0xf]
    %v1024 = vld [vmem:[#allocation2 + $0x10] sm:$0xf]
    %v1025 = vld [vmem:[#allocation2 + $0x1c] sm:$0xf]
    %v1026 = vld [vmem:[#allocation2 + $0x28] sm:$0xf]
    %v1027 = vld [vmem:[#allocation2 + $0x34] sm:$0xf]
    %v1028 = vld [vmem:[#allocation2 + $0x40] sm:$0xf]
    %v1029 = vld [vmem:[#allocation2 + $0x4c] sm:$0xf]
    %v1030 = vld [vmem:[#allocation2 + $0x58] sm:$0xf]
    %v1031 = vld [vmem:[#allocation2 + $0x64] sm:$0xf]
    %v1032 = vld [vmem:[#allocation2 + $0x70] sm:$0xf]
    %v1033 = vld [vmem:[#allocation2 + $0x7c] sm:$0xf]
    %v1034 = vld [vmem:[#allocation2 + $0x88] sm:$0xf]
    %v1035 = vld [vmem:[#allocation2 + $0x94] sm:$0xf]
    %v1036 = vld [vmem:[#allocation2 + $0xa0] sm:$0xf]
    %v1037 = vld [vmem:[#allocation2 + $0xac] sm:$0xf]
    %v1038 = vld [vmem:[#allocation2 + $0xb8] sm:$0xf]
    %v1039 = vld [vmem:[#allocation2 + $0x8] sm:$0xf]
    %v1040 = vld [vmem:[#allocation2 + $0x14] sm:$0xf]
    %v1041 = vld [vmem:[#allocation2 + $0x20] sm:$0xf]
    %v1042 = vld [vmem:[#allocation2 + $0x2c] sm:$0xf]
    %v1043 = vld [vmem:[#allocation2 + $0x38] sm:$0xf]
    %v1044 = vld [vmem:[#allocation2 + $0x44] sm:$0xf]
    %v1045 = vld [vmem:[#allocation2 + $0x50] sm:$0xf]
    %v1046 = vld [vmem:[#allocation2 + $0x5c] sm:$0xf]
    %v1047 = vld [vmem:[#allocation2 + $0x68] sm:$0xf]
    %v1048 = vld [vmem:[#allocation2 + $0x74] sm:$0xf]
    %v1049 = vld [vmem:[#allocation2 + $0x80] sm:$0xf]
    %v1050 = vld [vmem:[#allocation2 + $0x8c] sm:$0xf]
    %v1051 = vld [vmem:[#allocation2 + $0x98] sm:$0xf]
    %v1052 = vld [vmem:[#allocation2 + $0xa4] sm:$0xf]
    %v1053 = vld [vmem:[#allocation2 + $0xb0] sm:$0xf]
    %v1054 = vld [vmem:[#allocation2 + $0xbc] sm:$0xf]
    %v1071 = vunpack.c.l.b16 %v1007
    %v1072 = vunpack.c.l.b16 %v1008
    %v1073 = vunpack.c.l.b16 %v1009
    %v1074 = vunpack.c.l.b16 %v1010
    %v1075 = vunpack.c.l.b16 %v1011
    %v1076 = vunpack.c.l.b16 %v1012
    %v1077 = vunpack.c.l.b16 %v1013
    %v1078 = vunpack.c.l.b16 %v1014
    %v1079 = vunpack.c.l.b16 %v1015
    %v1080 = vunpack.c.l.b16 %v1016
    %v1081 = vunpack.c.l.b16 %v1017
    %v1082 = vunpack.c.l.b16 %v1018
    %v1083 = vunpack.c.l.b16 %v1019
    %v1084 = vunpack.c.l.b16 %v1020
    %v1085 = vunpack.c.l.b16 %v1021
    %v1086 = vunpack.c.l.b16 %v1022
    %v1087 = vpack.c.b16 %v1072, %v1071
    %v1088 = vpack.c.b16 %v1074, %v1073
    %v1089 = vpack.c.b16 %v1076, %v1075
    %v1090 = vpack.c.b16 %v1078, %v1077
    %v1091 = vpack.c.b16 %v1080, %v1079
    %v1092 = vpack.c.b16 %v1082, %v1081
    %v1093 = vpack.c.b16 %v1084, %v1083
    %v1094 = vpack.c.b16 %v1086, %v1085
    %v1111 = vunpack.c.l.b16 %v1023
    %v1112 = vunpack.c.l.b16 %v1024
    %v1113 = vunpack.c.l.b16 %v1025
    %v1114 = vunpack.c.l.b16 %v1026
    %v1115 = vunpack.c.l.b16 %v1027
    %v1116 = vunpack.c.l.b16 %v1028
    %v1117 = vunpack.c.l.b16 %v1029
    %v1118 = vunpack.c.l.b16 %v1030
    %v1119 = vunpack.c.l.b16 %v1031
    %v1120 = vunpack.c.l.b16 %v1032
    %v1121 = vunpack.c.l.b16 %v1033
    %v1122 = vunpack.c.l.b16 %v1034
    %v1123 = vunpack.c.l.b16 %v1035
    %v1124 = vunpack.c.l.b16 %v1036
    %v1125 = vunpack.c.l.b16 %v1037
    %v1126 = vunpack.c.l.b16 %v1038
    %v1127 = vpack.c.b16 %v1112, %v1111
    %v1128 = vpack.c.b16 %v1114, %v1113
    %v1129 = vpack.c.b16 %v1116, %v1115
    %v1130 = vpack.c.b16 %v1118, %v1117
    %v1131 = vpack.c.b16 %v1120, %v1119
    %v1132 = vpack.c.b16 %v1122, %v1121
    %v1133 = vpack.c.b16 %v1124, %v1123
    %v1134 = vpack.c.b16 %v1126, %v1125
    %vm1135 = vcmask 261120
    %v1137 = vsel %vm1135, %v1087, 0
    %v1140 = vsel %vm1135, %v1088, 0
    %v1143 = vsel %vm1135, %v1089, 0
    %v1146 = vsel %vm1135, %v1090, 0
    %v1149 = vsel %vm1135, %v1091, 0
    %v1152 = vsel %vm1135, %v1092, 0
    %v1155 = vsel %vm1135, %v1093, 0
    %v1158 = vsel %vm1135, %v1094, 0
    %v1161 = vsel %vm1135, %v1127, 0
    %v1164 = vsel %vm1135, %v1128, 0
    %v1167 = vsel %vm1135, %v1129, 0
    %v1170 = vsel %vm1135, %v1130, 0
    %v1173 = vsel %vm1135, %v1131, 0
    %v1176 = vsel %vm1135, %v1132, 0
    %v1179 = vsel %vm1135, %v1133, 0
    %v1182 = vsel %vm1135, %v1134, 0
    %1184 = vmatprep.subr.bf16.mxu0 0
    %1185 = vmatpush1.bf16.xpose.msra.mxu0 %v1182
    %1186 = vmatprep.subr.bf16.mxu0 0
    %1187 = vmatpush1.bf16.xpose.msra.mxu0 %v1179
    %1188 = vmatprep.subr.bf16.mxu0 0
    %1189 = vmatpush1.bf16.xpose.msra.mxu0 %v1176
    %1190 = vmatprep.subr.bf16.mxu0 0
    %1191 = vmatpush1.bf16.xpose.msra.mxu0 %v1173
    %1192 = vmatprep.subr.bf16.mxu0 0
    %1193 = vmatpush1.bf16.xpose.msra.mxu0 %v1170
    %1194 = vmatprep.subr.bf16.mxu0 0
    %1195 = vmatpush1.bf16.xpose.msra.mxu0 %v1167
    %1196 = vmatprep.subr.bf16.mxu0 0
    %1197 = vmatpush1.bf16.xpose.msra.mxu0 %v1164
    %1198 = vmatprep.subr.bf16.mxu0 0
    %1199 = vmatpush1.bf16.xpose.msra.mxu0 %v1161
    %1200 = vmatprep.subr.bf16.mxu0 0
    %1201 = vmatpush2.bf16.xpose.msra.mxu0 0
    %1202 = vmatprep.subr.bf16.mxu0 0
    %1203 = vmatpush2.bf16.xpose.msra.mxu0 0
    %1204 = vmatprep.subr.bf16.mxu0 0
    %1205 = vmatpush2.bf16.xpose.msra.mxu0 0
    %1206 = vmatprep.subr.bf16.mxu0 0
    %1207 = vmatpush2.bf16.xpose.msra.mxu0 0
    %1208 = vmatprep.subr.bf16.mxu0 0
    %1209 = vmatpush2.bf16.xpose.msra.mxu0 0
    %1210 = vmatprep.subr.bf16.mxu0 0
    %1211 = vmatpush2.bf16.xpose.msra.mxu0 0
    %1212 = vmatprep.subr.bf16.mxu0 0
    %1213 = vmatpush2.bf16.xpose.msra.mxu0 0
    %1214 = vmatprep.subr.bf16.mxu0 0
    %1215 = vmatpush2.bf16.xpose.msra.mxu0 0
    %1216 = vmatprep.mubr.bf16.mxu0 0
    %1217 = vmatmul.mubr.bf16.gmra.mxu0 %v1137
    %v1218 = vpop.f32.mrf.mxu0
    %v1219 = vadd.f32 0.0, %v1218
    %v1220 = vpop.f32.mrf.mxu0
    %v1221 = vpop.f32.mrf.mxu0
    %v1222 = vadd.f32 0.0, %v1221
    %v1223 = vpop.f32.mrf.mxu0
    %1224 = vmatprep.mubr.bf16.mxu0 0
    %1225 = vmatmul.mubr.bf16.gmra.mxu0 %v1140
    %v1226 = vpop.f32.mrf.mxu0
    %v1227 = vadd.f32 0.0, %v1226
    %v1228 = vpop.f32.mrf.mxu0
    %v1229 = vpop.f32.mrf.mxu0
    %v1230 = vadd.f32 0.0, %v1229
    %v1231 = vpop.f32.mrf.mxu0
    %1232 = vmatprep.mubr.bf16.mxu0 0
    %1233 = vmatmul.mubr.bf16.gmra.mxu0 %v1143
    %v1234 = vpop.f32.mrf.mxu0
    %v1235 = vadd.f32 0.0, %v1234
    %v1236 = vpop.f32.mrf.mxu0
    %v1237 = vpop.f32.mrf.mxu0
    %v1238 = vadd.f32 0.0, %v1237
    %v1239 = vpop.f32.mrf.mxu0
    %1240 = vmatprep.mubr.bf16.mxu0 0
    %1241 = vmatmul.mubr.bf16.gmra.mxu0 %v1146
    %v1242 = vpop.f32.mrf.mxu0
    %v1243 = vadd.f32 0.0, %v1242
    %v1244 = vpop.f32.mrf.mxu0
    %v1245 = vpop.f32.mrf.mxu0
    %v1246 = vadd.f32 0.0, %v1245
    %v1247 = vpop.f32.mrf.mxu0
    %1248 = vmatprep.mubr.bf16.mxu0 0
    %1249 = vmatmul.mubr.bf16.gmra.mxu0 %v1149
    %v1250 = vpop.f32.mrf.mxu0
    %v1251 = vadd.f32 0.0, %v1250
    %v1252 = vpop.f32.mrf.mxu0
    %v1253 = vpop.f32.mrf.mxu0
    %v1254 = vadd.f32 0.0, %v1253
    %v1255 = vpop.f32.mrf.mxu0
    %1256 = vmatprep.mubr.bf16.mxu0 0
    %1257 = vmatmul.mubr.bf16.gmra.mxu0 %v1152
    %v1258 = vpop.f32.mrf.mxu0
    %v1259 = vadd.f32 0.0, %v1258
    %v1260 = vpop.f32.mrf.mxu0
    %v1261 = vpop.f32.mrf.mxu0
    %v1262 = vadd.f32 0.0, %v1261
    %v1263 = vpop.f32.mrf.mxu0
    %1264 = vmatprep.mubr.bf16.mxu0 0
    %1265 = vmatmul.mubr.bf16.gmra.mxu0 %v1155
    %v1266 = vpop.f32.mrf.mxu0
    %v1267 = vadd.f32 0.0, %v1266
    %v1268 = vpop.f32.mrf.mxu0
    %v1269 = vpop.f32.mrf.mxu0
    %v1270 = vadd.f32 0.0, %v1269
    %v1271 = vpop.f32.mrf.mxu0
    %1272 = vmatprep.mubr.bf16.mxu0 0
    %1273 = vmatmul.mubr.bf16.gmra.mxu0 %v1158
    %v1274 = vpop.f32.mrf.mxu0
    %v1275 = vadd.f32 0.0, %v1274
    %v1276 = vpop.f32.mrf.mxu0
    %v1277 = vpop.f32.mrf.mxu0
    %v1278 = vadd.f32 0.0, %v1277
    %v1279 = vpop.f32.mrf.mxu0
    %1280 = vdwg.mxu0
    %1281 = vmax.xlane.f32.xlu0 %v1219
    %v1282 = vpop.xlane.xlu0 %1281
    %1283 = vmax.xlane.f32.xlu0 %v1222
    %v1284 = vpop.xlane.xlu0 %1283
    %1285 = vmax.xlane.f32.xlu0 %v1227
    %v1286 = vpop.xlane.xlu0 %1285
    %1287 = vmax.xlane.f32.xlu0 %v1230
    %v1288 = vpop.xlane.xlu0 %1287
    %1289 = vmax.xlane.f32.xlu0 %v1235
    %v1290 = vpop.xlane.xlu0 %1289
    %1291 = vmax.xlane.f32.xlu0 %v1238
    %v1292 = vpop.xlane.xlu0 %1291
    %1293 = vmax.xlane.f32.xlu0 %v1243
    %v1294 = vpop.xlane.xlu0 %1293
    %1295 = vmax.xlane.f32.xlu0 %v1246
    %v1296 = vpop.xlane.xlu0 %1295
    %1297 = vmax.xlane.f32.xlu0 %v1251
    %v1298 = vpop.xlane.xlu0 %1297
    %1299 = vmax.xlane.f32.xlu0 %v1254
    %v1300 = vpop.xlane.xlu0 %1299
    %1301 = vmax.xlane.f32.xlu0 %v1259
    %v1302 = vpop.xlane.xlu0 %1301
    %1303 = vmax.xlane.f32.xlu0 %v1262
    %v1304 = vpop.xlane.xlu0 %1303
    %1305 = vmax.xlane.f32.xlu0 %v1267
    %v1306 = vpop.xlane.xlu0 %1305
    %1307 = vmax.xlane.f32.xlu0 %v1270
    %v1308 = vpop.xlane.xlu0 %1307
    %1309 = vmax.xlane.f32.xlu0 %v1275
    %v1310 = vpop.xlane.xlu0 %1309
    %1311 = vmax.xlane.f32.xlu0 %v1278
    %v1312 = vpop.xlane.xlu0 %1311
    %v1313 = vsub.f32 %v1219, %v1282
    %v1314 = vsub.f32 %v1222, %v1284
    %v1315 = vsub.f32 %v1227, %v1286
    %v1316 = vsub.f32 %v1230, %v1288
    %v1317 = vsub.f32 %v1235, %v1290
    %v1318 = vsub.f32 %v1238, %v1292
    %v1319 = vsub.f32 %v1243, %v1294
    %v1320 = vsub.f32 %v1246, %v1296
    %v1321 = vsub.f32 %v1251, %v1298
    %v1322 = vsub.f32 %v1254, %v1300
    %v1323 = vsub.f32 %v1259, %v1302
    %v1324 = vsub.f32 %v1262, %v1304
    %v1325 = vsub.f32 %v1267, %v1306
    %v1326 = vsub.f32 %v1270, %v1308
    %v1327 = vsub.f32 %v1275, %v1310
    %v1328 = vsub.f32 %v1278, %v1312
    %v1329 = vmul.f32 %v1313, 1.442695
    %v1330 = vpow.pop %v1329
    %v1331 = vmul.f32 %v1314, 1.442695
    %v1332 = vpow.pop %v1331
    %v1333 = vmul.f32 %v1315, 1.442695
    %v1334 = vpow.pop %v1333
    %v1335 = vmul.f32 %v1316, 1.442695
    %v1336 = vpow.pop %v1335
    %v1337 = vmul.f32 %v1317, 1.442695
    %v1338 = vpow.pop %v1337
    %v1339 = vmul.f32 %v1318, 1.442695
    %v1340 = vpow.pop %v1339
    %v1341 = vmul.f32 %v1319, 1.442695
    %v1342 = vpow.pop %v1341
    %v1343 = vmul.f32 %v1320, 1.442695
    %v1344 = vpow.pop %v1343
    %v1345 = vmul.f32 %v1321, 1.442695
    %v1346 = vpow.pop %v1345
    %v1347 = vmul.f32 %v1322, 1.442695
    %v1348 = vpow.pop %v1347
    %v1349 = vmul.f32 %v1323, 1.442695
    %v1350 = vpow.pop %v1349
    %v1351 = vmul.f32 %v1324, 1.442695
    %v1352 = vpow.pop %v1351
    %v1353 = vmul.f32 %v1325, 1.442695
    %v1354 = vpow.pop %v1353
    %v1355 = vmul.f32 %v1326, 1.442695
    %v1356 = vpow.pop %v1355
    %v1357 = vmul.f32 %v1327, 1.442695
    %v1358 = vpow.pop %v1357
    %v1359 = vmul.f32 %v1328, 1.442695
    %v1360 = vpow.pop %v1359
    %1361 = vadd.xlane.f32.xlu0 %v1330
    %v1362 = vpop.xlane.xlu0 %1361
    %1363 = vadd.xlane.f32.xlu0 %v1332
    %v1364 = vpop.xlane.xlu0 %1363
    %1365 = vadd.xlane.f32.xlu0 %v1334
    %v1366 = vpop.xlane.xlu0 %1365
    %1367 = vadd.xlane.f32.xlu0 %v1336
    %v1368 = vpop.xlane.xlu0 %1367
    %1369 = vadd.xlane.f32.xlu0 %v1338
    %v1370 = vpop.xlane.xlu0 %1369
    %1371 = vadd.xlane.f32.xlu0 %v1340
    %v1372 = vpop.xlane.xlu0 %1371
    %1373 = vadd.xlane.f32.xlu0 %v1342
    %v1374 = vpop.xlane.xlu0 %1373
    %1375 = vadd.xlane.f32.xlu0 %v1344
    %v1376 = vpop.xlane.xlu0 %1375
    %1377 = vadd.xlane.f32.xlu0 %v1346
    %v1378 = vpop.xlane.xlu0 %1377
    %1379 = vadd.xlane.f32.xlu0 %v1348
    %v1380 = vpop.xlane.xlu0 %1379
    %1381 = vadd.xlane.f32.xlu0 %v1350
    %v1382 = vpop.xlane.xlu0 %1381
    %1383 = vadd.xlane.f32.xlu0 %v1352
    %v1384 = vpop.xlane.xlu0 %1383
    %1385 = vadd.xlane.f32.xlu0 %v1354
    %v1386 = vpop.xlane.xlu0 %1385
    %1387 = vadd.xlane.f32.xlu0 %v1356
    %v1388 = vpop.xlane.xlu0 %1387
    %1389 = vadd.xlane.f32.xlu0 %v1358
    %v1390 = vpop.xlane.xlu0 %1389
    %1391 = vadd.xlane.f32.xlu0 %v1360
    %v1392 = vpop.xlane.xlu0 %1391
    %v1393 = vrcp.pop %v1362
    %v1394 = vrcp.pop %v1364
    %v1395 = vrcp.pop %v1366
    %v1396 = vrcp.pop %v1368
    %v1397 = vrcp.pop %v1370
    %v1398 = vrcp.pop %v1372
    %v1399 = vrcp.pop %v1374
    %v1400 = vrcp.pop %v1376
    %v1401 = vrcp.pop %v1378
    %v1402 = vrcp.pop %v1380
    %v1403 = vrcp.pop %v1382
    %v1404 = vrcp.pop %v1384
    %v1405 = vrcp.pop %v1386
    %v1406 = vrcp.pop %v1388
    %v1407 = vrcp.pop %v1390
    %v1408 = vrcp.pop %v1392
    %v1409 = vmul.f32 %v1330, %v1393
    %v1410 = vmul.f32 %v1332, %v1394
    %v1411 = vmul.f32 %v1334, %v1395
    %v1412 = vmul.f32 %v1336, %v1396
    %v1413 = vmul.f32 %v1338, %v1397
    %v1414 = vmul.f32 %v1340, %v1398
    %v1415 = vmul.f32 %v1342, %v1399
    %v1416 = vmul.f32 %v1344, %v1400
    %v1417 = vmul.f32 %v1346, %v1401
    %v1418 = vmul.f32 %v1348, %v1402
    %v1419 = vmul.f32 %v1350, %v1403
    %v1420 = vmul.f32 %v1352, %v1404
    %v1421 = vmul.f32 %v1354, %v1405
    %v1422 = vmul.f32 %v1356, %v1406
    %v1423 = vmul.f32 %v1358, %v1407
    %v1424 = vmul.f32 %v1360, %v1408
    %v1425 = vpack.c.bf16 %v1410, %v1409
    %v1426 = vpack.c.bf16 %v1412, %v1411
    %v1427 = vpack.c.bf16 %v1414, %v1413
    %v1428 = vpack.c.bf16 %v1416, %v1415
    %v1429 = vpack.c.bf16 %v1418, %v1417
    %v1430 = vpack.c.bf16 %v1420, %v1419
    %v1431 = vpack.c.bf16 %v1422, %v1421
    %v1432 = vpack.c.bf16 %v1424, %v1423
    %v1449 = vunpack.c.l.b16 %v1039
    %v1450 = vunpack.c.l.b16 %v1040
    %v1451 = vunpack.c.l.b16 %v1041
    %v1452 = vunpack.c.l.b16 %v1042
    %v1453 = vunpack.c.l.b16 %v1043
    %v1454 = vunpack.c.l.b16 %v1044
    %v1455 = vunpack.c.l.b16 %v1045
    %v1456 = vunpack.c.l.b16 %v1046
    %v1457 = vunpack.c.l.b16 %v1047
    %v1458 = vunpack.c.l.b16 %v1048
    %v1459 = vunpack.c.l.b16 %v1049
    %v1460 = vunpack.c.l.b16 %v1050
    %v1461 = vunpack.c.l.b16 %v1051
    %v1462 = vunpack.c.l.b16 %v1052
    %v1463 = vunpack.c.l.b16 %v1053
    %v1464 = vunpack.c.l.b16 %v1054
    %v1465 = vpack.c.b16 %v1450, %v1449
    %v1466 = vpack.c.b16 %v1452, %v1451
    %v1467 = vpack.c.b16 %v1454, %v1453
    %v1468 = vpack.c.b16 %v1456, %v1455
    %v1469 = vpack.c.b16 %v1458, %v1457
    %v1470 = vpack.c.b16 %v1460, %v1459
    %v1471 = vpack.c.b16 %v1462, %v1461
    %v1472 = vpack.c.b16 %v1464, %v1463
    %1481 = vmatprep.subr.bf16.mxu0 0
    %1482 = vmatpush1.bf16.msra.mxu0 %v1472
    %1483 = vmatprep.subr.bf16.mxu0 0
    %1484 = vmatpush1.bf16.msra.mxu0 %v1471
    %1485 = vmatprep.subr.bf16.mxu0 0
    %1486 = vmatpush1.bf16.msra.mxu0 %v1470
    %1487 = vmatprep.subr.bf16.mxu0 0
    %1488 = vmatpush1.bf16.msra.mxu0 %v1469
    %1489 = vmatprep.subr.bf16.mxu0 0
    %1490 = vmatpush1.bf16.msra.mxu0 %v1468
    %1491 = vmatprep.subr.bf16.mxu0 0
    %1492 = vmatpush1.bf16.msra.mxu0 %v1467
    %1493 = vmatprep.subr.bf16.mxu0 0
    %1494 = vmatpush1.bf16.msra.mxu0 %v1466
    %1495 = vmatprep.subr.bf16.mxu0 0
    %1496 = vmatpush1.bf16.msra.mxu0 %v1465
    %1497 = vmatprep.subr.bf16.mxu0 0
    %1498 = vmatpush2.bf16.msra.mxu0 0
    %1499 = vmatprep.subr.bf16.mxu0 0
    %1500 = vmatpush2.bf16.msra.mxu0 0
    %1501 = vmatprep.subr.bf16.mxu0 0
    %1502 = vmatpush2.bf16.msra.mxu0 0
    %1503 = vmatprep.subr.bf16.mxu0 0
    %1504 = vmatpush2.bf16.msra.mxu0 0
    %1505 = vmatprep.subr.bf16.mxu0 0
    %1506 = vmatpush2.bf16.msra.mxu0 0
    %1507 = vmatprep.subr.bf16.mxu0 0
    %1508 = vmatpush2.bf16.msra.mxu0 0
    %1509 = vmatprep.subr.bf16.mxu0 0
    %1510 = vmatpush2.bf16.msra.mxu0 0
    %1511 = vmatprep.subr.bf16.mxu0 0
    %1512 = vmatpush2.bf16.msra.mxu0 0
    %1513 = vmatprep.mubr.bf16.mxu0 0
    %1514 = vmatmul.mubr.bf16.gmra.mxu0 %v1425
    %v1515 = vpop.f32.mrf.mxu0
    %v1516 = vadd.f32 0.0, %v1515
    %v1517 = vpop.f32.mrf.mxu0
    %v1518 = vpop.f32.mrf.mxu0
    %v1519 = vadd.f32 0.0, %v1518
    %v1520 = vpop.f32.mrf.mxu0
    %1521 = vmatprep.mubr.bf16.mxu0 0
    %1522 = vmatmul.mubr.bf16.gmra.mxu0 %v1426
    %v1523 = vpop.f32.mrf.mxu0
    %v1524 = vadd.f32 0.0, %v1523
    %v1525 = vpop.f32.mrf.mxu0
    %v1526 = vpop.f32.mrf.mxu0
    %v1527 = vadd.f32 0.0, %v1526
    %v1528 = vpop.f32.mrf.mxu0
    %1529 = vmatprep.mubr.bf16.mxu0 0
    %1530 = vmatmul.mubr.bf16.gmra.mxu0 %v1427
    %v1531 = vpop.f32.mrf.mxu0
    %v1532 = vadd.f32 0.0, %v1531
    %v1533 = vpop.f32.mrf.mxu0
    %v1534 = vpop.f32.mrf.mxu0
    %v1535 = vadd.f32 0.0, %v1534
    %v1536 = vpop.f32.mrf.mxu0
    %1537 = vmatprep.mubr.bf16.mxu0 0
    %1538 = vmatmul.mubr.bf16.gmra.mxu0 %v1428
    %v1539 = vpop.f32.mrf.mxu0
    %v1540 = vadd.f32 0.0, %v1539
    %v1541 = vpop.f32.mrf.mxu0
    %v1542 = vpop.f32.mrf.mxu0
    %v1543 = vadd.f32 0.0, %v1542
    %v1544 = vpop.f32.mrf.mxu0
    %1545 = vmatprep.mubr.bf16.mxu0 0
    %1546 = vmatmul.mubr.bf16.gmra.mxu0 %v1429
    %v1547 = vpop.f32.mrf.mxu0
    %v1548 = vadd.f32 0.0, %v1547
    %v1549 = vpop.f32.mrf.mxu0
    %v1550 = vpop.f32.mrf.mxu0
    %v1551 = vadd.f32 0.0, %v1550
    %v1552 = vpop.f32.mrf.mxu0
    %1553 = vmatprep.mubr.bf16.mxu0 0
    %1554 = vmatmul.mubr.bf16.gmra.mxu0 %v1430
    %v1555 = vpop.f32.mrf.mxu0
    %v1556 = vadd.f32 0.0, %v1555
    %v1557 = vpop.f32.mrf.mxu0
    %v1558 = vpop.f32.mrf.mxu0
    %v1559 = vadd.f32 0.0, %v1558
    %v1560 = vpop.f32.mrf.mxu0
    %1561 = vmatprep.mubr.bf16.mxu0 0
    %1562 = vmatmul.mubr.bf16.gmra.mxu0 %v1431
    %v1563 = vpop.f32.mrf.mxu0
    %v1564 = vadd.f32 0.0, %v1563
    %v1565 = vpop.f32.mrf.mxu0
    %v1566 = vpop.f32.mrf.mxu0
    %v1567 = vadd.f32 0.0, %v1566
    %v1568 = vpop.f32.mrf.mxu0
    %1569 = vmatprep.mubr.bf16.mxu0 0
    %1570 = vmatmul.mubr.bf16.gmra.mxu0 %v1432
    %v1571 = vpop.f32.mrf.mxu0
    %v1572 = vadd.f32 0.0, %v1571
    %v1573 = vpop.f32.mrf.mxu0
    %v1574 = vpop.f32.mrf.mxu0
    %v1575 = vadd.f32 0.0, %v1574
    %v1576 = vpop.f32.mrf.mxu0
    %1577 = vdwg.mxu0
    %1578 = vst.msk [vmem:[#allocation8] sm:$0xff] %vm1135, %v1516
    %1579 = vst.msk [vmem:[#allocation8 + $0x8] sm:$0xff] %vm1135, %v1519
    %1580 = vst.msk [vmem:[#allocation8 + $0x10] sm:$0xff] %vm1135, %v1524
    %1581 = vst.msk [vmem:[#allocation8 + $0x18] sm:$0xff] %vm1135, %v1527
    %1582 = vst.msk [vmem:[#allocation8 + $0x20] sm:$0xff] %vm1135, %v1532
    %1583 = vst.msk [vmem:[#allocation8 + $0x28] sm:$0xff] %vm1135, %v1535
    %1584 = vst.msk [vmem:[#allocation8 + $0x30] sm:$0xff] %vm1135, %v1540
    %1585 = vst.msk [vmem:[#allocation8 + $0x38] sm:$0xff] %vm1135, %v1543
    %1586 = vst.msk [vmem:[#allocation8 + $0x40] sm:$0xff] %vm1135, %v1548
    %1587 = vst.msk [vmem:[#allocation8 + $0x48] sm:$0xff] %vm1135, %v1551
    %1588 = vst.msk [vmem:[#allocation8 + $0x50] sm:$0xff] %vm1135, %v1556
    %1589 = vst.msk [vmem:[#allocation8 + $0x58] sm:$0xff] %vm1135, %v1559
    %1590 = vst.msk [vmem:[#allocation8 + $0x60] sm:$0xff] %vm1135, %v1564
    %1591 = vst.msk [vmem:[#allocation8 + $0x68] sm:$0xff] %vm1135, %v1567
    %1592 = vst.msk [vmem:[#allocation8 + $0x70] sm:$0xff] %vm1135, %v1572
    %1593 = vst.msk [vmem:[#allocation8 + $0x78] sm:$0xff] %vm1135, %v1575
    %v1594 = vld [vmem:[#allocation2] sm:$0xf]
    %v1595 = vld [vmem:[#allocation2 + $0xc] sm:$0xf]
    %v1596 = vld [vmem:[#allocation2 + $0x18] sm:$0xf]
    %v1597 = vld [vmem:[#allocation2 + $0x24] sm:$0xf]
    %v1598 = vld [vmem:[#allocation2 + $0x30] sm:$0xf]
    %v1599 = vld [vmem:[#allocation2 + $0x3c] sm:$0xf]
    %v1600 = vld [vmem:[#allocation2 + $0x48] sm:$0xf]
    %v1601 = vld [vmem:[#allocation2 + $0x54] sm:$0xf]
    %v1602 = vld [vmem:[#allocation2 + $0x60] sm:$0xf]
    %v1603 = vld [vmem:[#allocation2 + $0x6c] sm:$0xf]
    %v1604 = vld [vmem:[#allocation2 + $0x78] sm:$0xf]
    %v1605 = vld [vmem:[#allocation2 + $0x84] sm:$0xf]
    %v1606 = vld [vmem:[#allocation2 + $0x90] sm:$0xf]
    %v1607 = vld [vmem:[#allocation2 + $0x9c] sm:$0xf]
    %v1608 = vld [vmem:[#allocation2 + $0xa8] sm:$0xf]
    %v1609 = vld [vmem:[#allocation2 + $0xb4] sm:$0xf]
    %v1610 = vld [vmem:[#allocation2 + $0x4] sm:$0xf]
    %v1611 = vld [vmem:[#allocation2 + $0x10] sm:$0xf]
    %v1612 = vld [vmem:[#allocation2 + $0x1c] sm:$0xf]
    %v1613 = vld [vmem:[#allocation2 + $0x28] sm:$0xf]
    %v1614 = vld [vmem:[#allocation2 + $0x34] sm:$0xf]
    %v1615 = vld [vmem:[#allocation2 + $0x40] sm:$0xf]
    %v1616 = vld [vmem:[#allocation2 + $0x4c] sm:$0xf]
    %v1617 = vld [vmem:[#allocation2 + $0x58] sm:$0xf]
    %v1618 = vld [vmem:[#allocation2 + $0x64] sm:$0xf]
    %v1619 = vld [vmem:[#allocation2 + $0x70] sm:$0xf]
    %v1620 = vld [vmem:[#allocation2 + $0x7c] sm:$0xf]
    %v1621 = vld [vmem:[#allocation2 + $0x88] sm:$0xf]
    %v1622 = vld [vmem:[#allocation2 + $0x94] sm:$0xf]
    %v1623 = vld [vmem:[#allocation2 + $0xa0] sm:$0xf]
    %v1624 = vld [vmem:[#allocation2 + $0xac] sm:$0xf]
    %v1625 = vld [vmem:[#allocation2 + $0xb8] sm:$0xf]
    %v1626 = vld [vmem:[#allocation2 + $0x8] sm:$0xf]
    %v1627 = vld [vmem:[#allocation2 + $0x14] sm:$0xf]
    %v1628 = vld [vmem:[#allocation2 + $0x20] sm:$0xf]
    %v1629 = vld [vmem:[#allocation2 + $0x2c] sm:$0xf]
    %v1630 = vld [vmem:[#allocation2 + $0x38] sm:$0xf]
    %v1631 = vld [vmem:[#allocation2 + $0x44] sm:$0xf]
    %v1632 = vld [vmem:[#allocation2 + $0x50] sm:$0xf]
    %v1633 = vld [vmem:[#allocation2 + $0x5c] sm:$0xf]
    %v1634 = vld [vmem:[#allocation2 + $0x68] sm:$0xf]
    %v1635 = vld [vmem:[#allocation2 + $0x74] sm:$0xf]
    %v1636 = vld [vmem:[#allocation2 + $0x80] sm:$0xf]
    %v1637 = vld [vmem:[#allocation2 + $0x8c] sm:$0xf]
    %v1638 = vld [vmem:[#allocation2 + $0x98] sm:$0xf]
    %v1639 = vld [vmem:[#allocation2 + $0xa4] sm:$0xf]
    %v1640 = vld [vmem:[#allocation2 + $0xb0] sm:$0xf]
    %v1641 = vld [vmem:[#allocation2 + $0xbc] sm:$0xf]
    %v1658 = vunpack.c.l.b16 %v1594
    %v1659 = vunpack.c.l.b16 %v1595
    %v1660 = vunpack.c.l.b16 %v1596
    %v1661 = vunpack.c.l.b16 %v1597
    %v1662 = vunpack.c.l.b16 %v1598
    %v1663 = vunpack.c.l.b16 %v1599
    %v1664 = vunpack.c.l.b16 %v1600
    %v1665 = vunpack.c.l.b16 %v1601
    %v1666 = vunpack.c.l.b16 %v1602
    %v1667 = vunpack.c.l.b16 %v1603
    %v1668 = vunpack.c.l.b16 %v1604
    %v1669 = vunpack.c.l.b16 %v1605
    %v1670 = vunpack.c.l.b16 %v1606
    %v1671 = vunpack.c.l.b16 %v1607
    %v1672 = vunpack.c.l.b16 %v1608
    %v1673 = vunpack.c.l.b16 %v1609
    %v1674 = vpack.c.b16 %v1659, %v1658
    %v1675 = vpack.c.b16 %v1661, %v1660
    %v1676 = vpack.c.b16 %v1663, %v1662
    %v1677 = vpack.c.b16 %v1665, %v1664
    %v1678 = vpack.c.b16 %v1667, %v1666
    %v1679 = vpack.c.b16 %v1669, %v1668
    %v1680 = vpack.c.b16 %v1671, %v1670
    %v1681 = vpack.c.b16 %v1673, %v1672
    %1682 = vrot.lane.b32.xlu0 %v1674, 96
    %v1683 = vpop.permute.xlu0 %1682
    %1684 = vrot.lane.b32.xlu0 %v1675, 96
    %v1685 = vpop.permute.xlu0 %1684
    %1686 = vrot.lane.b32.xlu0 %v1676, 96
    %v1687 = vpop.permute.xlu0 %1686
    %1688 = vrot.lane.b32.xlu0 %v1677, 96
    %v1689 = vpop.permute.xlu0 %1688
    %1690 = vrot.lane.b32.xlu0 %v1678, 96
    %v1691 = vpop.permute.xlu0 %1690
    %1692 = vrot.lane.b32.xlu0 %v1679, 96
    %v1693 = vpop.permute.xlu0 %1692
    %1694 = vrot.lane.b32.xlu0 %v1680, 96
    %v1695 = vpop.permute.xlu0 %1694
    %1696 = vrot.lane.b32.xlu0 %v1681, 96
    %v1697 = vpop.permute.xlu0 %1696
    %v1714 = vunpack.c.l.b16 %v1610
    %v1715 = vunpack.c.l.b16 %v1611
    %v1716 = vunpack.c.l.b16 %v1612
    %v1717 = vunpack.c.l.b16 %v1613
    %v1718 = vunpack.c.l.b16 %v1614
    %v1719 = vunpack.c.l.b16 %v1615
    %v1720 = vunpack.c.l.b16 %v1616
    %v1721 = vunpack.c.l.b16 %v1617
    %v1722 = vunpack.c.l.b16 %v1618
    %v1723 = vunpack.c.l.b16 %v1619
    %v1724 = vunpack.c.l.b16 %v1620
    %v1725 = vunpack.c.l.b16 %v1621
    %v1726 = vunpack.c.l.b16 %v1622
    %v1727 = vunpack.c.l.b16 %v1623
    %v1728 = vunpack.c.l.b16 %v1624
    %v1729 = vunpack.c.l.b16 %v1625
    %v1730 = vpack.c.b16 %v1715, %v1714
    %v1731 = vpack.c.b16 %v1717, %v1716
    %v1732 = vpack.c.b16 %v1719, %v1718
    %v1733 = vpack.c.b16 %v1721, %v1720
    %v1734 = vpack.c.b16 %v1723, %v1722
    %v1735 = vpack.c.b16 %v1725, %v1724
    %v1736 = vpack.c.b16 %v1727, %v1726
    %v1737 = vpack.c.b16 %v1729, %v1728
    %1738 = vrot.lane.b32.xlu0 %v1730, 96
    %v1739 = vpop.permute.xlu0 %1738
    %1740 = vrot.lane.b32.xlu0 %v1731, 96
    %v1741 = vpop.permute.xlu0 %1740
    %1742 = vrot.lane.b32.xlu0 %v1732, 96
    %v1743 = vpop.permute.xlu0 %1742
    %1744 = vrot.lane.b32.xlu0 %v1733, 96
    %v1745 = vpop.permute.xlu0 %1744
    %1746 = vrot.lane.b32.xlu0 %v1734, 96
    %v1747 = vpop.permute.xlu0 %1746
    %1748 = vrot.lane.b32.xlu0 %v1735, 96
    %v1749 = vpop.permute.xlu0 %1748
    %1750 = vrot.lane.b32.xlu0 %v1736, 96
    %v1751 = vpop.permute.xlu0 %1750
    %1752 = vrot.lane.b32.xlu0 %v1737, 96
    %v1753 = vpop.permute.xlu0 %1752
    %v1755 = vsel %vm1135, %v1683, 0
    %v1758 = vsel %vm1135, %v1685, 0
    %v1761 = vsel %vm1135, %v1687, 0
    %v1764 = vsel %vm1135, %v1689, 0
    %v1767 = vsel %vm1135, %v1691, 0
    %v1770 = vsel %vm1135, %v1693, 0
    %v1773 = vsel %vm1135, %v1695, 0
    %v1776 = vsel %vm1135, %v1697, 0
    %v1779 = vsel %vm1135, %v1739, 0
    %v1782 = vsel %vm1135, %v1741, 0
    %v1785 = vsel %vm1135, %v1743, 0
    %v1788 = vsel %vm1135, %v1745, 0
    %v1791 = vsel %vm1135, %v1747, 0
    %v1794 = vsel %vm1135, %v1749, 0
    %v1797 = vsel %vm1135, %v1751, 0
    %v1800 = vsel %vm1135, %v1753, 0
    %1802 = vmatprep.subr.bf16.mxu0 0
    %1803 = vmatpush1.bf16.xpose.msra.mxu0 %v1800
    %1804 = vmatprep.subr.bf16.mxu0 0
    %1805 = vmatpush1.bf16.xpose.msra.mxu0 %v1797
    %1806 = vmatprep.subr.bf16.mxu0 0
    %1807 = vmatpush1.bf16.xpose.msra.mxu0 %v1794
    %1808 = vmatprep.subr.bf16.mxu0 0
    %1809 = vmatpush1.bf16.xpose.msra.mxu0 %v1791
    %1810 = vmatprep.subr.bf16.mxu0 0
    %1811 = vmatpush1.bf16.xpose.msra.mxu0 %v1788
    %1812 = vmatprep.subr.bf16.mxu0 0
    %1813 = vmatpush1.bf16.xpose.msra.mxu0 %v1785
    %1814 = vmatprep.subr.bf16.mxu0 0
    %1815 = vmatpush1.bf16.xpose.msra.mxu0 %v1782
    %1816 = vmatprep.subr.bf16.mxu0 0
    %1817 = vmatpush1.bf16.xpose.msra.mxu0 %v1779
    %1818 = vmatprep.subr.bf16.mxu0 0
    %1819 = vmatpush2.bf16.xpose.msra.mxu0 0
    %1820 = vmatprep.subr.bf16.mxu0 0
    %1821 = vmatpush2.bf16.xpose.msra.mxu0 0
    %1822 = vmatprep.subr.bf16.mxu0 0
    %1823 = vmatpush2.bf16.xpose.msra.mxu0 0
    %1824 = vmatprep.subr.bf16.mxu0 0
    %1825 = vmatpush2.bf16.xpose.msra.mxu0 0
    %1826 = vmatprep.subr.bf16.mxu0 0
    %1827 = vmatpush2.bf16.xpose.msra.mxu0 0
    %1828 = vmatprep.subr.bf16.mxu0 0
    %1829 = vmatpush2.bf16.xpose.msra.mxu0 0
    %1830 = vmatprep.subr.bf16.mxu0 0
    %1831 = vmatpush2.bf16.xpose.msra.mxu0 0
    %1832 = vmatprep.subr.bf16.mxu0 0
    %1833 = vmatpush2.bf16.xpose.msra.mxu0 0
    %1834 = vmatprep.mubr.bf16.mxu0 0
    %1835 = vmatmul.mubr.bf16.gmra.mxu0 %v1755
    %v1836 = vpop.f32.mrf.mxu0
    %v1837 = vadd.f32 0.0, %v1836
    %v1838 = vpop.f32.mrf.mxu0
    %v1839 = vpop.f32.mrf.mxu0
    %v1840 = vadd.f32 0.0, %v1839
    %v1841 = vpop.f32.mrf.mxu0
    %1842 = vmatprep.mubr.bf16.mxu0 0
    %1843 = vmatmul.mubr.bf16.gmra.mxu0 %v1758
    %v1844 = vpop.f32.mrf.mxu0
    %v1845 = vadd.f32 0.0, %v1844
    %v1846 = vpop.f32.mrf.mxu0
    %v1847 = vpop.f32.mrf.mxu0
    %v1848 = vadd.f32 0.0, %v1847
    %v1849 = vpop.f32.mrf.mxu0
    %1850 = vmatprep.mubr.bf16.mxu0 0
    %1851 = vmatmul.mubr.bf16.gmra.mxu0 %v1761
    %v1852 = vpop.f32.mrf.mxu0
    %v1853 = vadd.f32 0.0, %v1852
    %v1854 = vpop.f32.mrf.mxu0
    %v1855 = vpop.f32.mrf.mxu0
    %v1856 = vadd.f32 0.0, %v1855
    %v1857 = vpop.f32.mrf.mxu0
    %1858 = vmatprep.mubr.bf16.mxu0 0
    %1859 = vmatmul.mubr.bf16.gmra.mxu0 %v1764
    %v1860 = vpop.f32.mrf.mxu0
    %v1861 = vadd.f32 0.0, %v1860
    %v1862 = vpop.f32.mrf.mxu0
    %v1863 = vpop.f32.mrf.mxu0
    %v1864 = vadd.f32 0.0, %v1863
    %v1865 = vpop.f32.mrf.mxu0
    %1866 = vmatprep.mubr.bf16.mxu0 0
    %1867 = vmatmul.mubr.bf16.gmra.mxu0 %v1767
    %v1868 = vpop.f32.mrf.mxu0
    %v1869 = vadd.f32 0.0, %v1868
    %v1870 = vpop.f32.mrf.mxu0
    %v1871 = vpop.f32.mrf.mxu0
    %v1872 = vadd.f32 0.0, %v1871
    %v1873 = vpop.f32.mrf.mxu0
    %1874 = vmatprep.mubr.bf16.mxu0 0
    %1875 = vmatmul.mubr.bf16.gmra.mxu0 %v1770
    %v1876 = vpop.f32.mrf.mxu0
    %v1877 = vadd.f32 0.0, %v1876
    %v1878 = vpop.f32.mrf.mxu0
    %v1879 = vpop.f32.mrf.mxu0
    %v1880 = vadd.f32 0.0, %v1879
    %v1881 = vpop.f32.mrf.mxu0
    %1882 = vmatprep.mubr.bf16.mxu0 0
    %1883 = vmatmul.mubr.bf16.gmra.mxu0 %v1773
    %v1884 = vpop.f32.mrf.mxu0
    %v1885 = vadd.f32 0.0, %v1884
    %v1886 = vpop.f32.mrf.mxu0
    %v1887 = vpop.f32.mrf.mxu0
    %v1888 = vadd.f32 0.0, %v1887
    %v1889 = vpop.f32.mrf.mxu0
    %1890 = vmatprep.mubr.bf16.mxu0 0
    %1891 = vmatmul.mubr.bf16.gmra.mxu0 %v1776
    %v1892 = vpop.f32.mrf.mxu0
    %v1893 = vadd.f32 0.0, %v1892
    %v1894 = vpop.f32.mrf.mxu0
    %v1895 = vpop.f32.mrf.mxu0
    %v1896 = vadd.f32 0.0, %v1895
    %v1897 = vpop.f32.mrf.mxu0
    %1898 = vdwg.mxu0
    %1899 = vmax.xlane.f32.xlu0 %v1837
    %v1900 = vpop.xlane.xlu0 %1899
    %1901 = vmax.xlane.f32.xlu0 %v1840
    %v1902 = vpop.xlane.xlu0 %1901
    %1903 = vmax.xlane.f32.xlu0 %v1845
    %v1904 = vpop.xlane.xlu0 %1903
    %1905 = vmax.xlane.f32.xlu0 %v1848
    %v1906 = vpop.xlane.xlu0 %1905
    %1907 = vmax.xlane.f32.xlu0 %v1853
    %v1908 = vpop.xlane.xlu0 %1907
    %1909 = vmax.xlane.f32.xlu0 %v1856
    %v1910 = vpop.xlane.xlu0 %1909
    %1911 = vmax.xlane.f32.xlu0 %v1861
    %v1912 = vpop.xlane.xlu0 %1911
    %1913 = vmax.xlane.f32.xlu0 %v1864
    %v1914 = vpop.xlane.xlu0 %1913
    %1915 = vmax.xlane.f32.xlu0 %v1869
    %v1916 = vpop.xlane.xlu0 %1915
    %1917 = vmax.xlane.f32.xlu0 %v1872
    %v1918 = vpop.xlane.xlu0 %1917
    %1919 = vmax.xlane.f32.xlu0 %v1877
    %v1920 = vpop.xlane.xlu0 %1919
    %1921 = vmax.xlane.f32.xlu0 %v1880
    %v1922 = vpop.xlane.xlu0 %1921
    %1923 = vmax.xlane.f32.xlu0 %v1885
    %v1924 = vpop.xlane.xlu0 %1923
    %1925 = vmax.xlane.f32.xlu0 %v1888
    %v1926 = vpop.xlane.xlu0 %1925
    %1927 = vmax.xlane.f32.xlu0 %v1893
    %v1928 = vpop.xlane.xlu0 %1927
    %1929 = vmax.xlane.f32.xlu0 %v1896
    %v1930 = vpop.xlane.xlu0 %1929
    %v1931 = vsub.f32 %v1837, %v1900
    %v1932 = vsub.f32 %v1840, %v1902
    %v1933 = vsub.f32 %v1845, %v1904
    %v1934 = vsub.f32 %v1848, %v1906
    %v1935 = vsub.f32 %v1853, %v1908
    %v1936 = vsub.f32 %v1856, %v1910
    %v1937 = vsub.f32 %v1861, %v1912
    %v1938 = vsub.f32 %v1864, %v1914
    %v1939 = vsub.f32 %v1869, %v1916
    %v1940 = vsub.f32 %v1872, %v1918
    %v1941 = vsub.f32 %v1877, %v1920
    %v1942 = vsub.f32 %v1880, %v1922
    %v1943 = vsub.f32 %v1885, %v1924
    %v1944 = vsub.f32 %v1888, %v1926
    %v1945 = vsub.f32 %v1893, %v1928
    %v1946 = vsub.f32 %v1896, %v1930
    %v1947 = vmul.f32 %v1931, 1.442695
    %v1948 = vpow.pop %v1947
    %v1949 = vmul.f32 %v1932, 1.442695
    %v1950 = vpow.pop %v1949
    %v1951 = vmul.f32 %v1933, 1.442695
    %v1952 = vpow.pop %v1951
    %v1953 = vmul.f32 %v1934, 1.442695
    %v1954 = vpow.pop %v1953
    %v1955 = vmul.f32 %v1935, 1.442695
    %v1956 = vpow.pop %v1955
    %v1957 = vmul.f32 %v1936, 1.442695
    %v1958 = vpow.pop %v1957
    %v1959 = vmul.f32 %v1937, 1.442695
    %v1960 = vpow.pop %v1959
    %v1961 = vmul.f32 %v1938, 1.442695
    %v1962 = vpow.pop %v1961
    %v1963 = vmul.f32 %v1939, 1.442695
    %v1964 = vpow.pop %v1963
    %v1965 = vmul.f32 %v1940, 1.442695
    %v1966 = vpow.pop %v1965
    %v1967 = vmul.f32 %v1941, 1.442695
    %v1968 = vpow.pop %v1967
    %v1969 = vmul.f32 %v1942, 1.442695
    %v1970 = vpow.pop %v1969
    %v1971 = vmul.f32 %v1943, 1.442695
    %v1972 = vpow.pop %v1971
    %v1973 = vmul.f32 %v1944, 1.442695
    %v1974 = vpow.pop %v1973
    %v1975 = vmul.f32 %v1945, 1.442695
    %v1976 = vpow.pop %v1975
    %v1977 = vmul.f32 %v1946, 1.442695
    %v1978 = vpow.pop %v1977
    %1979 = vadd.xlane.f32.xlu0 %v1948
    %v1980 = vpop.xlane.xlu0 %1979
    %1981 = vadd.xlane.f32.xlu0 %v1950
    %v1982 = vpop.xlane.xlu0 %1981
    %1983 = vadd.xlane.f32.xlu0 %v1952
    %v1984 = vpop.xlane.xlu0 %1983
    %1985 = vadd.xlane.f32.xlu0 %v1954
    %v1986 = vpop.xlane.xlu0 %1985
    %1987 = vadd.xlane.f32.xlu0 %v1956
    %v1988 = vpop.xlane.xlu0 %1987
    %1989 = vadd.xlane.f32.xlu0 %v1958
    %v1990 = vpop.xlane.xlu0 %1989
    %1991 = vadd.xlane.f32.xlu0 %v1960
    %v1992 = vpop.xlane.xlu0 %1991
    %1993 = vadd.xlane.f32.xlu0 %v1962
    %v1994 = vpop.xlane.xlu0 %1993
    %1995 = vadd.xlane.f32.xlu0 %v1964
    %v1996 = vpop.xlane.xlu0 %1995
    %1997 = vadd.xlane.f32.xlu0 %v1966
    %v1998 = vpop.xlane.xlu0 %1997
    %1999 = vadd.xlane.f32.xlu0 %v1968
    %v2000 = vpop.xlane.xlu0 %1999
    %2001 = vadd.xlane.f32.xlu0 %v1970
    %v2002 = vpop.xlane.xlu0 %2001
    %2003 = vadd.xlane.f32.xlu0 %v1972
    %v2004 = vpop.xlane.xlu0 %2003
    %2005 = vadd.xlane.f32.xlu0 %v1974
    %v2006 = vpop.xlane.xlu0 %2005
    %2007 = vadd.xlane.f32.xlu0 %v1976
    %v2008 = vpop.xlane.xlu0 %2007
    %2009 = vadd.xlane.f32.xlu0 %v1978
    %v2010 = vpop.xlane.xlu0 %2009
    %v2011 = vrcp.pop %v1980
    %v2012 = vrcp.pop %v1982
    %v2013 = vrcp.pop %v1984
    %v2014 = vrcp.pop %v1986
    %v2015 = vrcp.pop %v1988
    %v2016 = vrcp.pop %v1990
    %v2017 = vrcp.pop %v1992
    %v2018 = vrcp.pop %v1994
    %v2019 = vrcp.pop %v1996
    %v2020 = vrcp.pop %v1998
    %v2021 = vrcp.pop %v2000
    %v2022 = vrcp.pop %v2002
    %v2023 = vrcp.pop %v2004
    %v2024 = vrcp.pop %v2006
    %v2025 = vrcp.pop %v2008
    %v2026 = vrcp.pop %v2010
    %v2027 = vmul.f32 %v1948, %v2011
    %v2028 = vmul.f32 %v1950, %v2012
    %v2029 = vmul.f32 %v1952, %v2013
    %v2030 = vmul.f32 %v1954, %v2014
    %v2031 = vmul.f32 %v1956, %v2015
    %v2032 = vmul.f32 %v1958, %v2016
    %v2033 = vmul.f32 %v1960, %v2017
    %v2034 = vmul.f32 %v1962, %v2018
    %v2035 = vmul.f32 %v1964, %v2019
    %v2036 = vmul.f32 %v1966, %v2020
    %v2037 = vmul.f32 %v1968, %v2021
    %v2038 = vmul.f32 %v1970, %v2022
    %v2039 = vmul.f32 %v1972, %v2023
    %v2040 = vmul.f32 %v1974, %v2024
    %v2041 = vmul.f32 %v1976, %v2025
    %v2042 = vmul.f32 %v1978, %v2026
    %v2043 = vpack.c.bf16 %v2028, %v2027
    %v2044 = vpack.c.bf16 %v2030, %v2029
    %v2045 = vpack.c.bf16 %v2032, %v2031
    %v2046 = vpack.c.bf16 %v2034, %v2033
    %v2047 = vpack.c.bf16 %v2036, %v2035
    %v2048 = vpack.c.bf16 %v2038, %v2037
    %v2049 = vpack.c.bf16 %v2040, %v2039
    %v2050 = vpack.c.bf16 %v2042, %v2041
    %v2067 = vunpack.c.l.b16 %v1626
    %v2068 = vunpack.c.l.b16 %v1627
    %v2069 = vunpack.c.l.b16 %v1628
    %v2070 = vunpack.c.l.b16 %v1629
    %v2071 = vunpack.c.l.b16 %v1630
    %v2072 = vunpack.c.l.b16 %v1631
    %v2073 = vunpack.c.l.b16 %v1632
    %v2074 = vunpack.c.l.b16 %v1633
    %v2075 = vunpack.c.l.b16 %v1634
    %v2076 = vunpack.c.l.b16 %v1635
    %v2077 = vunpack.c.l.b16 %v1636
    %v2078 = vunpack.c.l.b16 %v1637
    %v2079 = vunpack.c.l.b16 %v1638
    %v2080 = vunpack.c.l.b16 %v1639
    %v2081 = vunpack.c.l.b16 %v1640
    %v2082 = vunpack.c.l.b16 %v1641
    %v2083 = vpack.c.b16 %v2068, %v2067
    %v2084 = vpack.c.b16 %v2070, %v2069
    %v2085 = vpack.c.b16 %v2072, %v2071
    %v2086 = vpack.c.b16 %v2074, %v2073
    %v2087 = vpack.c.b16 %v2076, %v2075
    %v2088 = vpack.c.b16 %v2078, %v2077
    %v2089 = vpack.c.b16 %v2080, %v2079
    %v2090 = vpack.c.b16 %v2082, %v2081
    %2091 = vrot.lane.b32.xlu0 %v2083, 96
    %v2092 = vpop.permute.xlu0 %2091
    %2093 = vrot.lane.b32.xlu0 %v2084, 96
    %v2094 = vpop.permute.xlu0 %2093
    %2095 = vrot.lane.b32.xlu0 %v2085, 96
    %v2096 = vpop.permute.xlu0 %2095
    %2097 = vrot.lane.b32.xlu0 %v2086, 96
    %v2098 = vpop.permute.xlu0 %2097
    %2099 = vrot.lane.b32.xlu0 %v2087, 96
    %v2100 = vpop.permute.xlu0 %2099
    %2101 = vrot.lane.b32.xlu0 %v2088, 96
    %v2102 = vpop.permute.xlu0 %2101
    %2103 = vrot.lane.b32.xlu0 %v2089, 96
    %v2104 = vpop.permute.xlu0 %2103
    %2105 = vrot.lane.b32.xlu0 %v2090, 96
    %v2106 = vpop.permute.xlu0 %2105
    %2115 = vmatprep.subr.bf16.mxu0 0
    %2116 = vmatpush1.bf16.msra.mxu0 %v2106
    %2117 = vmatprep.subr.bf16.mxu0 0
    %2118 = vmatpush1.bf16.msra.mxu0 %v2104
    %2119 = vmatprep.subr.bf16.mxu0 0
    %2120 = vmatpush1.bf16.msra.mxu0 %v2102
    %2121 = vmatprep.subr.bf16.mxu0 0
    %2122 = vmatpush1.bf16.msra.mxu0 %v2100
    %2123 = vmatprep.subr.bf16.mxu0 0
    %2124 = vmatpush1.bf16.msra.mxu0 %v2098
    %2125 = vmatprep.subr.bf16.mxu0 0
    %2126 = vmatpush1.bf16.msra.mxu0 %v2096
    %2127 = vmatprep.subr.bf16.mxu0 0
    %2128 = vmatpush1.bf16.msra.mxu0 %v2094
    %2129 = vmatprep.subr.bf16.mxu0 0
    %2130 = vmatpush1.bf16.msra.mxu0 %v2092
    %2131 = vmatprep.subr.bf16.mxu0 0
    %2132 = vmatpush2.bf16.msra.mxu0 0
    %2133 = vmatprep.subr.bf16.mxu0 0
    %2134 = vmatpush2.bf16.msra.mxu0 0
    %2135 = vmatprep.subr.bf16.mxu0 0
    %2136 = vmatpush2.bf16.msra.mxu0 0
    %2137 = vmatprep.subr.bf16.mxu0 0
    %2138 = vmatpush2.bf16.msra.mxu0 0
    %2139 = vmatprep.subr.bf16.mxu0 0
    %2140 = vmatpush2.bf16.msra.mxu0 0
    %2141 = vmatprep.subr.bf16.mxu0 0
    %2142 = vmatpush2.bf16.msra.mxu0 0
    %2143 = vmatprep.subr.bf16.mxu0 0
    %2144 = vmatpush2.bf16.msra.mxu0 0
    %2145 = vmatprep.subr.bf16.mxu0 0
    %2146 = vmatpush2.bf16.msra.mxu0 0
    %2147 = vmatprep.mubr.bf16.mxu0 0
    %2148 = vmatmul.mubr.bf16.gmra.mxu0 %v2043
    %v2149 = vpop.f32.mrf.mxu0
    %v2150 = vadd.f32 0.0, %v2149
    %v2151 = vpop.f32.mrf.mxu0
    %v2152 = vpop.f32.mrf.mxu0
    %v2153 = vadd.f32 0.0, %v2152
    %v2154 = vpop.f32.mrf.mxu0
    %2155 = vmatprep.mubr.bf16.mxu0 0
    %2156 = vmatmul.mubr.bf16.gmra.mxu0 %v2044
    %v2157 = vpop.f32.mrf.mxu0
    %v2158 = vadd.f32 0.0, %v2157
    %v2159 = vpop.f32.mrf.mxu0
    %v2160 = vpop.f32.mrf.mxu0
    %v2161 = vadd.f32 0.0, %v2160
    %v2162 = vpop.f32.mrf.mxu0
    %2163 = vmatprep.mubr.bf16.mxu0 0
    %2164 = vmatmul.mubr.bf16.gmra.mxu0 %v2045
    %v2165 = vpop.f32.mrf.mxu0
    %v2166 = vadd.f32 0.0, %v2165
    %v2167 = vpop.f32.mrf.mxu0
    %v2168 = vpop.f32.mrf.mxu0
    %v2169 = vadd.f32 0.0, %v2168
    %v2170 = vpop.f32.mrf.mxu0
    %2171 = vmatprep.mubr.bf16.mxu0 0
    %2172 = vmatmul.mubr.bf16.gmra.mxu0 %v2046
    %v2173 = vpop.f32.mrf.mxu0
    %v2174 = vadd.f32 0.0, %v2173
    %v2175 = vpop.f32.mrf.mxu0
    %v2176 = vpop.f32.mrf.mxu0
    %v2177 = vadd.f32 0.0, %v2176
    %v2178 = vpop.f32.mrf.mxu0
    %2179 = vmatprep.mubr.bf16.mxu0 0
    %2180 = vmatmul.mubr.bf16.gmra.mxu0 %v2047
    %v2181 = vpop.f32.mrf.mxu0
    %v2182 = vadd.f32 0.0, %v2181
    %v2183 = vpop.f32.mrf.mxu0
    %v2184 = vpop.f32.mrf.mxu0
    %v2185 = vadd.f32 0.0, %v2184
    %v2186 = vpop.f32.mrf.mxu0
    %2187 = vmatprep.mubr.bf16.mxu0 0
    %2188 = vmatmul.mubr.bf16.gmra.mxu0 %v2048
    %v2189 = vpop.f32.mrf.mxu0
    %v2190 = vadd.f32 0.0, %v2189
    %v2191 = vpop.f32.mrf.mxu0
    %v2192 = vpop.f32.mrf.mxu0
    %v2193 = vadd.f32 0.0, %v2192
    %v2194 = vpop.f32.mrf.mxu0
    %2195 = vmatprep.mubr.bf16.mxu0 0
    %2196 = vmatmul.mubr.bf16.gmra.mxu0 %v2049
    %v2197 = vpop.f32.mrf.mxu0
    %v2198 = vadd.f32 0.0, %v2197
    %v2199 = vpop.f32.mrf.mxu0
    %v2200 = vpop.f32.mrf.mxu0
    %v2201 = vadd.f32 0.0, %v2200
    %v2202 = vpop.f32.mrf.mxu0
    %2203 = vmatprep.mubr.bf16.mxu0 0
    %2204 = vmatmul.mubr.bf16.gmra.mxu0 %v2050
    %v2205 = vpop.f32.mrf.mxu0
    %v2206 = vadd.f32 0.0, %v2205
    %v2207 = vpop.f32.mrf.mxu0
    %v2208 = vpop.f32.mrf.mxu0
    %v2209 = vadd.f32 0.0, %v2208
    %v2210 = vpop.f32.mrf.mxu0
    %2211 = vdwg.mxu0
    %2228 = vrot.lane.b32.xlu0 %v2150, 32
    %v2229 = vpop.permute.xlu0 %2228
    %2230 = vrot.lane.b32.xlu0 %v2153, 32
    %v2231 = vpop.permute.xlu0 %2230
    %2232 = vrot.lane.b32.xlu0 %v2158, 32
    %v2233 = vpop.permute.xlu0 %2232
    %2234 = vrot.lane.b32.xlu0 %v2161, 32
    %v2235 = vpop.permute.xlu0 %2234
    %2236 = vrot.lane.b32.xlu0 %v2166, 32
    %v2237 = vpop.permute.xlu0 %2236
    %2238 = vrot.lane.b32.xlu0 %v2169, 32
    %v2239 = vpop.permute.xlu0 %2238
    %2240 = vrot.lane.b32.xlu0 %v2174, 32
    %v2241 = vpop.permute.xlu0 %2240
    %2242 = vrot.lane.b32.xlu0 %v2177, 32
    %v2243 = vpop.permute.xlu0 %2242
    %2244 = vrot.lane.b32.xlu0 %v2182, 32
    %v2245 = vpop.permute.xlu0 %2244
    %2246 = vrot.lane.b32.xlu0 %v2185, 32
    %v2247 = vpop.permute.xlu0 %2246
    %2248 = vrot.lane.b32.xlu0 %v2190, 32
    %v2249 = vpop.permute.xlu0 %2248
    %2250 = vrot.lane.b32.xlu0 %v2193, 32
    %v2251 = vpop.permute.xlu0 %2250
    %2252 = vrot.lane.b32.xlu0 %v2198, 32
    %v2253 = vpop.permute.xlu0 %2252
    %2254 = vrot.lane.b32.xlu0 %v2201, 32
    %v2255 = vpop.permute.xlu0 %2254
    %2256 = vrot.lane.b32.xlu0 %v2206, 32
    %v2257 = vpop.permute.xlu0 %2256
    %2258 = vrot.lane.b32.xlu0 %v2209, 32
    %v2259 = vpop.permute.xlu0 %2258
    %vm2276 = vcmask 523520
    %2277 = vst.msk [vmem:[#allocation8] sm:$0xff] %vm2276, %v2229
    %2278 = vst.msk [vmem:[#allocation8 + $0x8] sm:$0xff] %vm2276, %v2231
    %2279 = vst.msk [vmem:[#allocation8 + $0x10] sm:$0xff] %vm2276, %v2233
    %2280 = vst.msk [vmem:[#allocation8 + $0x18] sm:$0xff] %vm2276, %v2235
    %2281 = vst.msk [vmem:[#allocation8 + $0x20] sm:$0xff] %vm2276, %v2237
    %2282 = vst.msk [vmem:[#allocation8 + $0x28] sm:$0xff] %vm2276, %v2239
    %2283 = vst.msk [vmem:[#allocation8 + $0x30] sm:$0xff] %vm2276, %v2241
    %2284 = vst.msk [vmem:[#allocation8 + $0x38] sm:$0xff] %vm2276, %v2243
    %2285 = vst.msk [vmem:[#allocation8 + $0x40] sm:$0xff] %vm2276, %v2245
    %2286 = vst.msk [vmem:[#allocation8 + $0x48] sm:$0xff] %vm2276, %v2247
    %2287 = vst.msk [vmem:[#allocation8 + $0x50] sm:$0xff] %vm2276, %v2249
    %2288 = vst.msk [vmem:[#allocation8 + $0x58] sm:$0xff] %vm2276, %v2251
    %2289 = vst.msk [vmem:[#allocation8 + $0x60] sm:$0xff] %vm2276, %v2253
    %2290 = vst.msk [vmem:[#allocation8 + $0x68] sm:$0xff] %vm2276, %v2255
    %2291 = vst.msk [vmem:[#allocation8 + $0x70] sm:$0xff] %vm2276, %v2257
    %2292 = vst.msk [vmem:[#allocation8 + $0x78] sm:$0xff] %vm2276, %v2259
    %v2293 = vld [vmem:[#allocation2] sm:$0xf]
    %v2294 = vld [vmem:[#allocation2 + $0xc] sm:$0xf]
    %v2295 = vld [vmem:[#allocation2 + $0x18] sm:$0xf]
    %v2296 = vld [vmem:[#allocation2 + $0x24] sm:$0xf]
    %v2297 = vld [vmem:[#allocation2 + $0x30] sm:$0xf]
    %v2298 = vld [vmem:[#allocation2 + $0x3c] sm:$0xf]
    %v2299 = vld [vmem:[#allocation2 + $0x48] sm:$0xf]
    %v2300 = vld [vmem:[#allocation2 + $0x54] sm:$0xf]
    %v2301 = vld [vmem:[#allocation2 + $0x60] sm:$0xf]
    %v2302 = vld [vmem:[#allocation2 + $0x6c] sm:$0xf]
    %v2303 = vld [vmem:[#allocation2 + $0x78] sm:$0xf]
    %v2304 = vld [vmem:[#allocation2 + $0x84] sm:$0xf]
    %v2305 = vld [vmem:[#allocation2 + $0x90] sm:$0xf]
    %v2306 = vld [vmem:[#allocation2 + $0x9c] sm:$0xf]
    %v2307 = vld [vmem:[#allocation2 + $0xa8] sm:$0xf]
    %v2308 = vld [vmem:[#allocation2 + $0xb4] sm:$0xf]
    %v2309 = vld [vmem:[#allocation2 + $0x4] sm:$0xf]
    %v2310 = vld [vmem:[#allocation2 + $0x10] sm:$0xf]
    %v2311 = vld [vmem:[#allocation2 + $0x1c] sm:$0xf]
    %v2312 = vld [vmem:[#allocation2 + $0x28] sm:$0xf]
    %v2313 = vld [vmem:[#allocation2 + $0x34] sm:$0xf]
    %v2314 = vld [vmem:[#allocation2 + $0x40] sm:$0xf]
    %v2315 = vld [vmem:[#allocation2 + $0x4c] sm:$0xf]
    %v2316 = vld [vmem:[#allocation2 + $0x58] sm:$0xf]
    %v2317 = vld [vmem:[#allocation2 + $0x64] sm:$0xf]
    %v2318 = vld [vmem:[#allocation2 + $0x70] sm:$0xf]
    %v2319 = vld [vmem:[#allocation2 + $0x7c] sm:$0xf]
    %v2320 = vld [vmem:[#allocation2 + $0x88] sm:$0xf]
    %v2321 = vld [vmem:[#allocation2 + $0x94] sm:$0xf]
    %v2322 = vld [vmem:[#allocation2 + $0xa0] sm:$0xf]
    %v2323 = vld [vmem:[#allocation2 + $0xac] sm:$0xf]
    %v2324 = vld [vmem:[#allocation2 + $0xb8] sm:$0xf]
    %v2325 = vld [vmem:[#allocation2 + $0x8] sm:$0xf]
    %v2326 = vld [vmem:[#allocation2 + $0x14] sm:$0xf]
    %v2327 = vld [vmem:[#allocation2 + $0x20] sm:$0xf]
    %v2328 = vld [vmem:[#allocation2 + $0x2c] sm:$0xf]
    %v2329 = vld [vmem:[#allocation2 + $0x38] sm:$0xf]
    %v2330 = vld [vmem:[#allocation2 + $0x44] sm:$0xf]
    %v2331 = vld [vmem:[#allocation2 + $0x50] sm:$0xf]
    %v2332 = vld [vmem:[#allocation2 + $0x5c] sm:$0xf]
    %v2333 = vld [vmem:[#allocation2 + $0x68] sm:$0xf]
    %v2334 = vld [vmem:[#allocation2 + $0x74] sm:$0xf]
    %v2335 = vld [vmem:[#allocation2 + $0x80] sm:$0xf]
    %v2336 = vld [vmem:[#allocation2 + $0x8c] sm:$0xf]
    %v2337 = vld [vmem:[#allocation2 + $0x98] sm:$0xf]
    %v2338 = vld [vmem:[#allocation2 + $0xa4] sm:$0xf]
    %v2339 = vld [vmem:[#allocation2 + $0xb0] sm:$0xf]
    %v2340 = vld [vmem:[#allocation2 + $0xbc] sm:$0xf]
    %v2357 = vunpack.c.l.b16 %v2293
    %v2358 = vunpack.c.l.b16 %v2294
    %v2359 = vunpack.c.l.b16 %v2295
    %v2360 = vunpack.c.l.b16 %v2296
    %v2361 = vunpack.c.l.b16 %v2297
    %v2362 = vunpack.c.l.b16 %v2298
    %v2363 = vunpack.c.l.b16 %v2299
    %v2364 = vunpack.c.l.b16 %v2300
    %v2365 = vunpack.c.l.b16 %v2301
    %v2366 = vunpack.c.l.b16 %v2302
    %v2367 = vunpack.c.l.b16 %v2303
    %v2368 = vunpack.c.l.b16 %v2304
    %v2369 = vunpack.c.l.b16 %v2305
    %v2370 = vunpack.c.l.b16 %v2306
    %v2371 = vunpack.c.l.b16 %v2307
    %v2372 = vunpack.c.l.b16 %v2308
    %v2373 = vpack.c.b16 %v2358, %v2357
    %v2374 = vpack.c.b16 %v2360, %v2359
    %v2375 = vpack.c.b16 %v2362, %v2361
    %v2376 = vpack.c.b16 %v2364, %v2363
    %v2377 = vpack.c.b16 %v2366, %v2365
    %v2378 = vpack.c.b16 %v2368, %v2367
    %v2379 = vpack.c.b16 %v2370, %v2369
    %v2380 = vpack.c.b16 %v2372, %v2371
    %2381 = vrot.lane.b32.xlu0 %v2373, 64
    %v2382 = vpop.permute.xlu0 %2381
    %2383 = vrot.lane.b32.xlu0 %v2374, 64
    %v2384 = vpop.permute.xlu0 %2383
    %2385 = vrot.lane.b32.xlu0 %v2375, 64
    %v2386 = vpop.permute.xlu0 %2385
    %2387 = vrot.lane.b32.xlu0 %v2376, 64
    %v2388 = vpop.permute.xlu0 %2387
    %2389 = vrot.lane.b32.xlu0 %v2377, 64
    %v2390 = vpop.permute.xlu0 %2389
    %2391 = vrot.lane.b32.xlu0 %v2378, 64
    %v2392 = vpop.permute.xlu0 %2391
    %2393 = vrot.lane.b32.xlu0 %v2379, 64
    %v2394 = vpop.permute.xlu0 %2393
    %2395 = vrot.lane.b32.xlu0 %v2380, 64
    %v2396 = vpop.permute.xlu0 %2395
    %v2413 = vunpack.c.l.b16 %v2309
    %v2414 = vunpack.c.l.b16 %v2310
    %v2415 = vunpack.c.l.b16 %v2311
    %v2416 = vunpack.c.l.b16 %v2312
    %v2417 = vunpack.c.l.b16 %v2313
    %v2418 = vunpack.c.l.b16 %v2314
    %v2419 = vunpack.c.l.b16 %v2315
    %v2420 = vunpack.c.l.b16 %v2316
    %v2421 = vunpack.c.l.b16 %v2317
    %v2422 = vunpack.c.l.b16 %v2318
    %v2423 = vunpack.c.l.b16 %v2319
    %v2424 = vunpack.c.l.b16 %v2320
    %v2425 = vunpack.c.l.b16 %v2321
    %v2426 = vunpack.c.l.b16 %v2322
    %v2427 = vunpack.c.l.b16 %v2323
    %v2428 = vunpack.c.l.b16 %v2324
    %v2429 = vpack.c.b16 %v2414, %v2413
    %v2430 = vpack.c.b16 %v2416, %v2415
    %v2431 = vpack.c.b16 %v2418, %v2417
    %v2432 = vpack.c.b16 %v2420, %v2419
    %v2433 = vpack.c.b16 %v2422, %v2421
    %v2434 = vpack.c.b16 %v2424, %v2423
    %v2435 = vpack.c.b16 %v2426, %v2425
    %v2436 = vpack.c.b16 %v2428, %v2427
    %2437 = vrot.lane.b32.xlu0 %v2429, 64
    %v2438 = vpop.permute.xlu0 %2437
    %2439 = vrot.lane.b32.xlu0 %v2430, 64
    %v2440 = vpop.permute.xlu0 %2439
    %2441 = vrot.lane.b32.xlu0 %v2431, 64
    %v2442 = vpop.permute.xlu0 %2441
    %2443 = vrot.lane.b32.xlu0 %v2432, 64
    %v2444 = vpop.permute.xlu0 %2443
    %2445 = vrot.lane.b32.xlu0 %v2433, 64
    %v2446 = vpop.permute.xlu0 %2445
    %2447 = vrot.lane.b32.xlu0 %v2434, 64
    %v2448 = vpop.permute.xlu0 %2447
    %2449 = vrot.lane.b32.xlu0 %v2435, 64
    %v2450 = vpop.permute.xlu0 %2449
    %2451 = vrot.lane.b32.xlu0 %v2436, 64
    %v2452 = vpop.permute.xlu0 %2451
    %v2454 = vsel %vm1135, %v2382, 0
    %v2457 = vsel %vm1135, %v2384, 0
    %v2460 = vsel %vm1135, %v2386, 0
    %v2463 = vsel %vm1135, %v2388, 0
    %v2466 = vsel %vm1135, %v2390, 0
    %v2469 = vsel %vm1135, %v2392, 0
    %v2472 = vsel %vm1135, %v2394, 0
    %v2475 = vsel %vm1135, %v2396, 0
    %v2478 = vsel %vm1135, %v2438, 0
    %v2481 = vsel %vm1135, %v2440, 0
    %v2484 = vsel %vm1135, %v2442, 0
    %v2487 = vsel %vm1135, %v2444, 0
    %v2490 = vsel %vm1135, %v2446, 0
    %v2493 = vsel %vm1135, %v2448, 0
    %v2496 = vsel %vm1135, %v2450, 0
    %v2499 = vsel %vm1135, %v2452, 0
    %2501 = vmatprep.subr.bf16.mxu0 0
    %2502 = vmatpush1.bf16.xpose.msra.mxu0 %v2499
    %2503 = vmatprep.subr.bf16.mxu0 0
    %2504 = vmatpush1.bf16.xpose.msra.mxu0 %v2496
    %2505 = vmatprep.subr.bf16.mxu0 0
    %2506 = vmatpush1.bf16.xpose.msra.mxu0 %v2493
    %2507 = vmatprep.subr.bf16.mxu0 0
    %2508 = vmatpush1.bf16.xpose.msra.mxu0 %v2490
    %2509 = vmatprep.subr.bf16.mxu0 0
    %2510 = vmatpush1.bf16.xpose.msra.mxu0 %v2487
    %2511 = vmatprep.subr.bf16.mxu0 0
    %2512 = vmatpush1.bf16.xpose.msra.mxu0 %v2484
    %2513 = vmatprep.subr.bf16.mxu0 0
    %2514 = vmatpush1.bf16.xpose.msra.mxu0 %v2481
    %2515 = vmatprep.subr.bf16.mxu0 0
    %2516 = vmatpush1.bf16.xpose.msra.mxu0 %v2478
    %2517 = vmatprep.subr.bf16.mxu0 0
    %2518 = vmatpush2.bf16.xpose.msra.mxu0 0
    %2519 = vmatprep.subr.bf16.mxu0 0
    %2520 = vmatpush2.bf16.xpose.msra.mxu0 0
    %2521 = vmatprep.subr.bf16.mxu0 0
    %2522 = vmatpush2.bf16.xpose.msra.mxu0 0
    %2523 = vmatprep.subr.bf16.mxu0 0
    %2524 = vmatpush2.bf16.xpose.msra.mxu0 0
    %2525 = vmatprep.subr.bf16.mxu0 0
    %2526 = vmatpush2.bf16.xpose.msra.mxu0 0
    %2527 = vmatprep.subr.bf16.mxu0 0
    %2528 = vmatpush2.bf16.xpose.msra.mxu0 0
    %2529 = vmatprep.subr.bf16.mxu0 0
    %2530 = vmatpush2.bf16.xpose.msra.mxu0 0
    %2531 = vmatprep.subr.bf16.mxu0 0
    %2532 = vmatpush2.bf16.xpose.msra.mxu0 0
    %2533 = vmatprep.mubr.bf16.mxu0 0
    %2534 = vmatmul.mubr.bf16.gmra.mxu0 %v2454
    %v2535 = vpop.f32.mrf.mxu0
    %v2536 = vadd.f32 0.0, %v2535
    %v2537 = vpop.f32.mrf.mxu0
    %v2538 = vpop.f32.mrf.mxu0
    %v2539 = vadd.f32 0.0, %v2538
    %v2540 = vpop.f32.mrf.mxu0
    %2541 = vmatprep.mubr.bf16.mxu0 0
    %2542 = vmatmul.mubr.bf16.gmra.mxu0 %v2457
    %v2543 = vpop.f32.mrf.mxu0
    %v2544 = vadd.f32 0.0, %v2543
    %v2545 = vpop.f32.mrf.mxu0
    %v2546 = vpop.f32.mrf.mxu0
    %v2547 = vadd.f32 0.0, %v2546
    %v2548 = vpop.f32.mrf.mxu0
    %2549 = vmatprep.mubr.bf16.mxu0 0
    %2550 = vmatmul.mubr.bf16.gmra.mxu0 %v2460
    %v2551 = vpop.f32.mrf.mxu0
    %v2552 = vadd.f32 0.0, %v2551
    %v2553 = vpop.f32.mrf.mxu0
    %v2554 = vpop.f32.mrf.mxu0
    %v2555 = vadd.f32 0.0, %v2554
    %v2556 = vpop.f32.mrf.mxu0
    %2557 = vmatprep.mubr.bf16.mxu0 0
    %2558 = vmatmul.mubr.bf16.gmra.mxu0 %v2463
    %v2559 = vpop.f32.mrf.mxu0
    %v2560 = vadd.f32 0.0, %v2559
    %v2561 = vpop.f32.mrf.mxu0
    %v2562 = vpop.f32.mrf.mxu0
    %v2563 = vadd.f32 0.0, %v2562
    %v2564 = vpop.f32.mrf.mxu0
    %2565 = vmatprep.mubr.bf16.mxu0 0
    %2566 = vmatmul.mubr.bf16.gmra.mxu0 %v2466
    %v2567 = vpop.f32.mrf.mxu0
    %v2568 = vadd.f32 0.0, %v2567
    %v2569 = vpop.f32.mrf.mxu0
    %v2570 = vpop.f32.mrf.mxu0
    %v2571 = vadd.f32 0.0, %v2570
    %v2572 = vpop.f32.mrf.mxu0
    %2573 = vmatprep.mubr.bf16.mxu0 0
    %2574 = vmatmul.mubr.bf16.gmra.mxu0 %v2469
    %v2575 = vpop.f32.mrf.mxu0
    %v2576 = vadd.f32 0.0, %v2575
    %v2577 = vpop.f32.mrf.mxu0
    %v2578 = vpop.f32.mrf.mxu0
    %v2579 = vadd.f32 0.0, %v2578
    %v2580 = vpop.f32.mrf.mxu0
    %2581 = vmatprep.mubr.bf16.mxu0 0
    %2582 = vmatmul.mubr.bf16.gmra.mxu0 %v2472
    %v2583 = vpop.f32.mrf.mxu0
    %v2584 = vadd.f32 0.0, %v2583
    %v2585 = vpop.f32.mrf.mxu0
    %v2586 = vpop.f32.mrf.mxu0
    %v2587 = vadd.f32 0.0, %v2586
    %v2588 = vpop.f32.mrf.mxu0
    %2589 = vmatprep.mubr.bf16.mxu0 0
    %2590 = vmatmul.mubr.bf16.gmra.mxu0 %v2475
    %v2591 = vpop.f32.mrf.mxu0
    %v2592 = vadd.f32 0.0, %v2591
    %v2593 = vpop.f32.mrf.mxu0
    %v2594 = vpop.f32.mrf.mxu0
    %v2595 = vadd.f32 0.0, %v2594
    %v2596 = vpop.f32.mrf.mxu0
    %2597 = vdwg.mxu0
    %2598 = vmax.xlane.f32.xlu0 %v2536
    %v2599 = vpop.xlane.xlu0 %2598
    %2600 = vmax.xlane.f32.xlu0 %v2539
    %v2601 = vpop.xlane.xlu0 %2600
    %2602 = vmax.xlane.f32.xlu0 %v2544
    %v2603 = vpop.xlane.xlu0 %2602
    %2604 = vmax.xlane.f32.xlu0 %v2547
    %v2605 = vpop.xlane.xlu0 %2604
    %2606 = vmax.xlane.f32.xlu0 %v2552
    %v2607 = vpop.xlane.xlu0 %2606
    %2608 = vmax.xlane.f32.xlu0 %v2555
    %v2609 = vpop.xlane.xlu0 %2608
    %2610 = vmax.xlane.f32.xlu0 %v2560
    %v2611 = vpop.xlane.xlu0 %2610
    %2612 = vmax.xlane.f32.xlu0 %v2563
    %v2613 = vpop.xlane.xlu0 %2612
    %2614 = vmax.xlane.f32.xlu0 %v2568
    %v2615 = vpop.xlane.xlu0 %2614
    %2616 = vmax.xlane.f32.xlu0 %v2571
    %v2617 = vpop.xlane.xlu0 %2616
    %2618 = vmax.xlane.f32.xlu0 %v2576
    %v2619 = vpop.xlane.xlu0 %2618
    %2620 = vmax.xlane.f32.xlu0 %v2579
    %v2621 = vpop.xlane.xlu0 %2620
    %2622 = vmax.xlane.f32.xlu0 %v2584
    %v2623 = vpop.xlane.xlu0 %2622
    %2624 = vmax.xlane.f32.xlu0 %v2587
    %v2625 = vpop.xlane.xlu0 %2624
    %2626 = vmax.xlane.f32.xlu0 %v2592
    %v2627 = vpop.xlane.xlu0 %2626
    %2628 = vmax.xlane.f32.xlu0 %v2595
    %v2629 = vpop.xlane.xlu0 %2628
    %v2630 = vsub.f32 %v2536, %v2599
    %v2631 = vsub.f32 %v2539, %v2601
    %v2632 = vsub.f32 %v2544, %v2603
    %v2633 = vsub.f32 %v2547, %v2605
    %v2634 = vsub.f32 %v2552, %v2607
    %v2635 = vsub.f32 %v2555, %v2609
    %v2636 = vsub.f32 %v2560, %v2611
    %v2637 = vsub.f32 %v2563, %v2613
    %v2638 = vsub.f32 %v2568, %v2615
    %v2639 = vsub.f32 %v2571, %v2617
    %v2640 = vsub.f32 %v2576, %v2619
    %v2641 = vsub.f32 %v2579, %v2621
    %v2642 = vsub.f32 %v2584, %v2623
    %v2643 = vsub.f32 %v2587, %v2625
    %v2644 = vsub.f32 %v2592, %v2627
    %v2645 = vsub.f32 %v2595, %v2629
    %v2646 = vmul.f32 %v2630, 1.442695
    %v2647 = vpow.pop %v2646
    %v2648 = vmul.f32 %v2631, 1.442695
    %v2649 = vpow.pop %v2648
    %v2650 = vmul.f32 %v2632, 1.442695
    %v2651 = vpow.pop %v2650
    %v2652 = vmul.f32 %v2633, 1.442695
    %v2653 = vpow.pop %v2652
    %v2654 = vmul.f32 %v2634, 1.442695
    %v2655 = vpow.pop %v2654
    %v2656 = vmul.f32 %v2635, 1.442695
    %v2657 = vpow.pop %v2656
    %v2658 = vmul.f32 %v2636, 1.442695
    %v2659 = vpow.pop %v2658
    %v2660 = vmul.f32 %v2637, 1.442695
    %v2661 = vpow.pop %v2660
    %v2662 = vmul.f32 %v2638, 1.442695
    %v2663 = vpow.pop %v2662
    %v2664 = vmul.f32 %v2639, 1.442695
    %v2665 = vpow.pop %v2664
    %v2666 = vmul.f32 %v2640, 1.442695
    %v2667 = vpow.pop %v2666
    %v2668 = vmul.f32 %v2641, 1.442695
    %v2669 = vpow.pop %v2668
    %v2670 = vmul.f32 %v2642, 1.442695
    %v2671 = vpow.pop %v2670
    %v2672 = vmul.f32 %v2643, 1.442695
    %v2673 = vpow.pop %v2672
    %v2674 = vmul.f32 %v2644, 1.442695
    %v2675 = vpow.pop %v2674
    %v2676 = vmul.f32 %v2645, 1.442695
    %v2677 = vpow.pop %v2676
    %2678 = vadd.xlane.f32.xlu0 %v2647
    %v2679 = vpop.xlane.xlu0 %2678
    %2680 = vadd.xlane.f32.xlu0 %v2649
    %v2681 = vpop.xlane.xlu0 %2680
    %2682 = vadd.xlane.f32.xlu0 %v2651
    %v2683 = vpop.xlane.xlu0 %2682
    %2684 = vadd.xlane.f32.xlu0 %v2653
    %v2685 = vpop.xlane.xlu0 %2684
    %2686 = vadd.xlane.f32.xlu0 %v2655
    %v2687 = vpop.xlane.xlu0 %2686
    %2688 = vadd.xlane.f32.xlu0 %v2657
    %v2689 = vpop.xlane.xlu0 %2688
    %2690 = vadd.xlane.f32.xlu0 %v2659
    %v2691 = vpop.xlane.xlu0 %2690
    %2692 = vadd.xlane.f32.xlu0 %v2661
    %v2693 = vpop.xlane.xlu0 %2692
    %2694 = vadd.xlane.f32.xlu0 %v2663
    %v2695 = vpop.xlane.xlu0 %2694
    %2696 = vadd.xlane.f32.xlu0 %v2665
    %v2697 = vpop.xlane.xlu0 %2696
    %2698 = vadd.xlane.f32.xlu0 %v2667
    %v2699 = vpop.xlane.xlu0 %2698
    %2700 = vadd.xlane.f32.xlu0 %v2669
    %v2701 = vpop.xlane.xlu0 %2700
    %2702 = vadd.xlane.f32.xlu0 %v2671
    %v2703 = vpop.xlane.xlu0 %2702
    %2704 = vadd.xlane.f32.xlu0 %v2673
    %v2705 = vpop.xlane.xlu0 %2704
    %2706 = vadd.xlane.f32.xlu0 %v2675
    %v2707 = vpop.xlane.xlu0 %2706
    %2708 = vadd.xlane.f32.xlu0 %v2677
    %v2709 = vpop.xlane.xlu0 %2708
    %v2710 = vrcp.pop %v2679
    %v2711 = vrcp.pop %v2681
    %v2712 = vrcp.pop %v2683
    %v2713 = vrcp.pop %v2685
    %v2714 = vrcp.pop %v2687
    %v2715 = vrcp.pop %v2689
    %v2716 = vrcp.pop %v2691
    %v2717 = vrcp.pop %v2693
    %v2718 = vrcp.pop %v2695
    %v2719 = vrcp.pop %v2697
    %v2720 = vrcp.pop %v2699
    %v2721 = vrcp.pop %v2701
    %v2722 = vrcp.pop %v2703
    %v2723 = vrcp.pop %v2705
    %v2724 = vrcp.pop %v2707
    %v2725 = vrcp.pop %v2709
    %v2726 = vmul.f32 %v2647, %v2710
    %v2727 = vmul.f32 %v2649, %v2711
    %v2728 = vmul.f32 %v2651, %v2712
    %v2729 = vmul.f32 %v2653, %v2713
    %v2730 = vmul.f32 %v2655, %v2714
    %v2731 = vmul.f32 %v2657, %v2715
    %v2732 = vmul.f32 %v2659, %v2716
    %v2733 = vmul.f32 %v2661, %v2717
    %v2734 = vmul.f32 %v2663, %v2718
    %v2735 = vmul.f32 %v2665, %v2719
    %v2736 = vmul.f32 %v2667, %v2720
    %v2737 = vmul.f32 %v2669, %v2721
    %v2738 = vmul.f32 %v2671, %v2722
    %v2739 = vmul.f32 %v2673, %v2723
    %v2740 = vmul.f32 %v2675, %v2724
    %v2741 = vmul.f32 %v2677, %v2725
    %v2742 = vpack.c.bf16 %v2727, %v2726
    %v2743 = vpack.c.bf16 %v2729, %v2728
    %v2744 = vpack.c.bf16 %v2731, %v2730
    %v2745 = vpack.c.bf16 %v2733, %v2732
    %v2746 = vpack.c.bf16 %v2735, %v2734
    %v2747 = vpack.c.bf16 %v2737, %v2736
    %v2748 = vpack.c.bf16 %v2739, %v2738
    %v2749 = vpack.c.bf16 %v2741, %v2740
    %v2766 = vunpack.c.l.b16 %v2325
    %v2767 = vunpack.c.l.b16 %v2326
    %v2768 = vunpack.c.l.b16 %v2327
    %v2769 = vunpack.c.l.b16 %v2328
    %v2770 = vunpack.c.l.b16 %v2329
    %v2771 = vunpack.c.l.b16 %v2330
    %v2772 = vunpack.c.l.b16 %v2331
    %v2773 = vunpack.c.l.b16 %v2332
    %v2774 = vunpack.c.l.b16 %v2333
    %v2775 = vunpack.c.l.b16 %v2334
    %v2776 = vunpack.c.l.b16 %v2335
    %v2777 = vunpack.c.l.b16 %v2336
    %v2778 = vunpack.c.l.b16 %v2337
    %v2779 = vunpack.c.l.b16 %v2338
    %v2780 = vunpack.c.l.b16 %v2339
    %v2781 = vunpack.c.l.b16 %v2340
    %v2782 = vpack.c.b16 %v2767, %v2766
    %v2783 = vpack.c.b16 %v2769, %v2768
    %v2784 = vpack.c.b16 %v2771, %v2770
    %v2785 = vpack.c.b16 %v2773, %v2772
    %v2786 = vpack.c.b16 %v2775, %v2774
    %v2787 = vpack.c.b16 %v2777, %v2776
    %v2788 = vpack.c.b16 %v2779, %v2778
    %v2789 = vpack.c.b16 %v2781, %v2780
    %2790 = vrot.lane.b32.xlu0 %v2782, 64
    %v2791 = vpop.permute.xlu0 %2790
    %2792 = vrot.lane.b32.xlu0 %v2783, 64
    %v2793 = vpop.permute.xlu0 %2792
    %2794 = vrot.lane.b32.xlu0 %v2784, 64
    %v2795 = vpop.permute.xlu0 %2794
    %2796 = vrot.lane.b32.xlu0 %v2785, 64
    %v2797 = vpop.permute.xlu0 %2796
    %2798 = vrot.lane.b32.xlu0 %v2786, 64
    %v2799 = vpop.permute.xlu0 %2798
    %2800 = vrot.lane.b32.xlu0 %v2787, 64
    %v2801 = vpop.permute.xlu0 %2800
    %2802 = vrot.lane.b32.xlu0 %v2788, 64
    %v2803 = vpop.permute.xlu0 %2802
    %2804 = vrot.lane.b32.xlu0 %v2789, 64
    %v2805 = vpop.permute.xlu0 %2804
    %2814 = vmatprep.subr.bf16.mxu0 0
    %2815 = vmatpush1.bf16.msra.mxu0 %v2805
    %2816 = vmatprep.subr.bf16.mxu0 0
    %2817 = vmatpush1.bf16.msra.mxu0 %v2803
    %2818 = vmatprep.subr.bf16.mxu0 0
    %2819 = vmatpush1.bf16.msra.mxu0 %v2801
    %2820 = vmatprep.subr.bf16.mxu0 0
    %2821 = vmatpush1.bf16.msra.mxu0 %v2799
    %2822 = vmatprep.subr.bf16.mxu0 0
    %2823 = vmatpush1.bf16.msra.mxu0 %v2797
    %2824 = vmatprep.subr.bf16.mxu0 0
    %2825 = vmatpush1.bf16.msra.mxu0 %v2795
    %2826 = vmatprep.subr.bf16.mxu0 0
    %2827 = vmatpush1.bf16.msra.mxu0 %v2793
    %2828 = vmatprep.subr.bf16.mxu0 0
    %2829 = vmatpush1.bf16.msra.mxu0 %v2791
    %2830 = vmatprep.subr.bf16.mxu0 0
    %2831 = vmatpush2.bf16.msra.mxu0 0
    %2832 = vmatprep.subr.bf16.mxu0 0
    %2833 = vmatpush2.bf16.msra.mxu0 0
    %2834 = vmatprep.subr.bf16.mxu0 0
    %2835 = vmatpush2.bf16.msra.mxu0 0
    %2836 = vmatprep.subr.bf16.mxu0 0
    %2837 = vmatpush2.bf16.msra.mxu0 0
    %2838 = vmatprep.subr.bf16.mxu0 0
    %2839 = vmatpush2.bf16.msra.mxu0 0
    %2840 = vmatprep.subr.bf16.mxu0 0
    %2841 = vmatpush2.bf16.msra.mxu0 0
    %2842 = vmatprep.subr.bf16.mxu0 0
    %2843 = vmatpush2.bf16.msra.mxu0 0
    %2844 = vmatprep.subr.bf16.mxu0 0
    %2845 = vmatpush2.bf16.msra.mxu0 0
    %2846 = vmatprep.mubr.bf16.mxu0 0
    %2847 = vmatmul.mubr.bf16.gmra.mxu0 %v2742
    %v2848 = vpop.f32.mrf.mxu0
    %v2849 = vadd.f32 0.0, %v2848
    %v2850 = vpop.f32.mrf.mxu0
    %v2851 = vpop.f32.mrf.mxu0
    %v2852 = vadd.f32 0.0, %v2851
    %v2853 = vpop.f32.mrf.mxu0
    %2854 = vmatprep.mubr.bf16.mxu0 0
    %2855 = vmatmul.mubr.bf16.gmra.mxu0 %v2743
    %v2856 = vpop.f32.mrf.mxu0
    %v2857 = vadd.f32 0.0, %v2856
    %v2858 = vpop.f32.mrf.mxu0
    %v2859 = vpop.f32.mrf.mxu0
    %v2860 = vadd.f32 0.0, %v2859
    %v2861 = vpop.f32.mrf.mxu0
    %2862 = vmatprep.mubr.bf16.mxu0 0
    %2863 = vmatmul.mubr.bf16.gmra.mxu0 %v2744
    %v2864 = vpop.f32.mrf.mxu0
    %v2865 = vadd.f32 0.0, %v2864
    %v2866 = vpop.f32.mrf.mxu0
    %v2867 = vpop.f32.mrf.mxu0
    %v2868 = vadd.f32 0.0, %v2867
    %v2869 = vpop.f32.mrf.mxu0
    %2870 = vmatprep.mubr.bf16.mxu0 0
    %2871 = vmatmul.mubr.bf16.gmra.mxu0 %v2745
    %v2872 = vpop.f32.mrf.mxu0
    %v2873 = vadd.f32 0.0, %v2872
    %v2874 = vpop.f32.mrf.mxu0
    %v2875 = vpop.f32.mrf.mxu0
    %v2876 = vadd.f32 0.0, %v2875
    %v2877 = vpop.f32.mrf.mxu0
    %2878 = vmatprep.mubr.bf16.mxu0 0
    %2879 = vmatmul.mubr.bf16.gmra.mxu0 %v2746
    %v2880 = vpop.f32.mrf.mxu0
    %v2881 = vadd.f32 0.0, %v2880
    %v2882 = vpop.f32.mrf.mxu0
    %v2883 = vpop.f32.mrf.mxu0
    %v2884 = vadd.f32 0.0, %v2883
    %v2885 = vpop.f32.mrf.mxu0
    %2886 = vmatprep.mubr.bf16.mxu0 0
    %2887 = vmatmul.mubr.bf16.gmra.mxu0 %v2747
    %v2888 = vpop.f32.mrf.mxu0
    %v2889 = vadd.f32 0.0, %v2888
    %v2890 = vpop.f32.mrf.mxu0
    %v2891 = vpop.f32.mrf.mxu0
    %v2892 = vadd.f32 0.0, %v2891
    %v2893 = vpop.f32.mrf.mxu0
    %2894 = vmatprep.mubr.bf16.mxu0 0
    %2895 = vmatmul.mubr.bf16.gmra.mxu0 %v2748
    %v2896 = vpop.f32.mrf.mxu0
    %v2897 = vadd.f32 0.0, %v2896
    %v2898 = vpop.f32.mrf.mxu0
    %v2899 = vpop.f32.mrf.mxu0
    %v2900 = vadd.f32 0.0, %v2899
    %v2901 = vpop.f32.mrf.mxu0
    %2902 = vmatprep.mubr.bf16.mxu0 0
    %2903 = vmatmul.mubr.bf16.gmra.mxu0 %v2749
    %v2904 = vpop.f32.mrf.mxu0
    %v2905 = vadd.f32 0.0, %v2904
    %v2906 = vpop.f32.mrf.mxu0
    %v2907 = vpop.f32.mrf.mxu0
    %v2908 = vadd.f32 0.0, %v2907
    %v2909 = vpop.f32.mrf.mxu0
    %2910 = vdwg.mxu0
    %2927 = vrot.lane.b32.xlu0 %v2849, 64
    %v2928 = vpop.permute.xlu0 %2927
    %2929 = vrot.lane.b32.xlu0 %v2852, 64
    %v2930 = vpop.permute.xlu0 %2929
    %2931 = vrot.lane.b32.xlu0 %v2857, 64
    %v2932 = vpop.permute.xlu0 %2931
    %2933 = vrot.lane.b32.xlu0 %v2860, 64
    %v2934 = vpop.permute.xlu0 %2933
    %2935 = vrot.lane.b32.xlu0 %v2865, 64
    %v2936 = vpop.permute.xlu0 %2935
    %2937 = vrot.lane.b32.xlu0 %v2868, 64
    %v2938 = vpop.permute.xlu0 %2937
    %2939 = vrot.lane.b32.xlu0 %v2873, 64
    %v2940 = vpop.permute.xlu0 %2939
    %2941 = vrot.lane.b32.xlu0 %v2876, 64
    %v2942 = vpop.permute.xlu0 %2941
    %2943 = vrot.lane.b32.xlu0 %v2881, 64
    %v2944 = vpop.permute.xlu0 %2943
    %2945 = vrot.lane.b32.xlu0 %v2884, 64
    %v2946 = vpop.permute.xlu0 %2945
    %2947 = vrot.lane.b32.xlu0 %v2889, 64
    %v2948 = vpop.permute.xlu0 %2947
    %2949 = vrot.lane.b32.xlu0 %v2892, 64
    %v2950 = vpop.permute.xlu0 %2949
    %2951 = vrot.lane.b32.xlu0 %v2897, 64
    %v2952 = vpop.permute.xlu0 %2951
    %2953 = vrot.lane.b32.xlu0 %v2900, 64
    %v2954 = vpop.permute.xlu0 %2953
    %2955 = vrot.lane.b32.xlu0 %v2905, 64
    %v2956 = vpop.permute.xlu0 %2955
    %2957 = vrot.lane.b32.xlu0 %v2908, 64
    %v2958 = vpop.permute.xlu0 %2957
    %vm2975 = vcmask 785920
    %2976 = vst.msk [vmem:[#allocation8] sm:$0xff] %vm2975, %v2928
    %2977 = vst.msk [vmem:[#allocation8 + $0x8] sm:$0xff] %vm2975, %v2930
    %2978 = vst.msk [vmem:[#allocation8 + $0x10] sm:$0xff] %vm2975, %v2932
    %2979 = vst.msk [vmem:[#allocation8 + $0x18] sm:$0xff] %vm2975, %v2934
    %2980 = vst.msk [vmem:[#allocation8 + $0x20] sm:$0xff] %vm2975, %v2936
    %2981 = vst.msk [vmem:[#allocation8 + $0x28] sm:$0xff] %vm2975, %v2938
    %2982 = vst.msk [vmem:[#allocation8 + $0x30] sm:$0xff] %vm2975, %v2940
    %2983 = vst.msk [vmem:[#allocation8 + $0x38] sm:$0xff] %vm2975, %v2942
    %2984 = vst.msk [vmem:[#allocation8 + $0x40] sm:$0xff] %vm2975, %v2944
    %2985 = vst.msk [vmem:[#allocation8 + $0x48] sm:$0xff] %vm2975, %v2946
    %2986 = vst.msk [vmem:[#allocation8 + $0x50] sm:$0xff] %vm2975, %v2948
    %2987 = vst.msk [vmem:[#allocation8 + $0x58] sm:$0xff] %vm2975, %v2950
    %2988 = vst.msk [vmem:[#allocation8 + $0x60] sm:$0xff] %vm2975, %v2952
    %2989 = vst.msk [vmem:[#allocation8 + $0x68] sm:$0xff] %vm2975, %v2954
    %2990 = vst.msk [vmem:[#allocation8 + $0x70] sm:$0xff] %vm2975, %v2956
    %2991 = vst.msk [vmem:[#allocation8 + $0x78] sm:$0xff] %vm2975, %v2958
    %v2992 = vld [vmem:[#allocation2] sm:$0xf]
    %v2993 = vld [vmem:[#allocation2 + $0xc] sm:$0xf]
    %v2994 = vld [vmem:[#allocation2 + $0x18] sm:$0xf]
    %v2995 = vld [vmem:[#allocation2 + $0x24] sm:$0xf]
    %v2996 = vld [vmem:[#allocation2 + $0x30] sm:$0xf]
    %v2997 = vld [vmem:[#allocation2 + $0x3c] sm:$0xf]
    %v2998 = vld [vmem:[#allocation2 + $0x48] sm:$0xf]
    %v2999 = vld [vmem:[#allocation2 + $0x54] sm:$0xf]
    %v3000 = vld [vmem:[#allocation2 + $0x60] sm:$0xf]
    %v3001 = vld [vmem:[#allocation2 + $0x6c] sm:$0xf]
    %v3002 = vld [vmem:[#allocation2 + $0x78] sm:$0xf]
    %v3003 = vld [vmem:[#allocation2 + $0x84] sm:$0xf]
    %v3004 = vld [vmem:[#allocation2 + $0x90] sm:$0xf]
    %v3005 = vld [vmem:[#allocation2 + $0x9c] sm:$0xf]
    %v3006 = vld [vmem:[#allocation2 + $0xa8] sm:$0xf]
    %v3007 = vld [vmem:[#allocation2 + $0xb4] sm:$0xf]
    %v3008 = vld [vmem:[#allocation2 + $0x4] sm:$0xf]
    %v3009 = vld [vmem:[#allocation2 + $0x10] sm:$0xf]
    %v3010 = vld [vmem:[#allocation2 + $0x1c] sm:$0xf]
    %v3011 = vld [vmem:[#allocation2 + $0x28] sm:$0xf]
    %v3012 = vld [vmem:[#allocation2 + $0x34] sm:$0xf]
    %v3013 = vld [vmem:[#allocation2 + $0x40] sm:$0xf]
    %v3014 = vld [vmem:[#allocation2 + $0x4c] sm:$0xf]
    %v3015 = vld [vmem:[#allocation2 + $0x58] sm:$0xf]
    %v3016 = vld [vmem:[#allocation2 + $0x64] sm:$0xf]
    %v3017 = vld [vmem:[#allocation2 + $0x70] sm:$0xf]
    %v3018 = vld [vmem:[#allocation2 + $0x7c] sm:$0xf]
    %v3019 = vld [vmem:[#allocation2 + $0x88] sm:$0xf]
    %v3020 = vld [vmem:[#allocation2 + $0x94] sm:$0xf]
    %v3021 = vld [vmem:[#allocation2 + $0xa0] sm:$0xf]
    %v3022 = vld [vmem:[#allocation2 + $0xac] sm:$0xf]
    %v3023 = vld [vmem:[#allocation2 + $0xb8] sm:$0xf]
    %v3024 = vld [vmem:[#allocation2 + $0x8] sm:$0xf]
    %v3025 = vld [vmem:[#allocation2 + $0x14] sm:$0xf]
    %v3026 = vld [vmem:[#allocation2 + $0x20] sm:$0xf]
    %v3027 = vld [vmem:[#allocation2 + $0x2c] sm:$0xf]
    %v3028 = vld [vmem:[#allocation2 + $0x38] sm:$0xf]
    %v3029 = vld [vmem:[#allocation2 + $0x44] sm:$0xf]
    %v3030 = vld [vmem:[#allocation2 + $0x50] sm:$0xf]
    %v3031 = vld [vmem:[#allocation2 + $0x5c] sm:$0xf]
    %v3032 = vld [vmem:[#allocation2 + $0x68] sm:$0xf]
    %v3033 = vld [vmem:[#allocation2 + $0x74] sm:$0xf]
    %v3034 = vld [vmem:[#allocation2 + $0x80] sm:$0xf]
    %v3035 = vld [vmem:[#allocation2 + $0x8c] sm:$0xf]
    %v3036 = vld [vmem:[#allocation2 + $0x98] sm:$0xf]
    %v3037 = vld [vmem:[#allocation2 + $0xa4] sm:$0xf]
    %v3038 = vld [vmem:[#allocation2 + $0xb0] sm:$0xf]
    %v3039 = vld [vmem:[#allocation2 + $0xbc] sm:$0xf]
    %v3056 = vunpack.c.l.b16 %v2992
    %v3057 = vunpack.c.l.b16 %v2993
    %v3058 = vunpack.c.l.b16 %v2994
    %v3059 = vunpack.c.l.b16 %v2995
    %v3060 = vunpack.c.l.b16 %v2996
    %v3061 = vunpack.c.l.b16 %v2997
    %v3062 = vunpack.c.l.b16 %v2998
    %v3063 = vunpack.c.l.b16 %v2999
    %v3064 = vunpack.c.l.b16 %v3000
    %v3065 = vunpack.c.l.b16 %v3001
    %v3066 = vunpack.c.l.b16 %v3002
    %v3067 = vunpack.c.l.b16 %v3003
    %v3068 = vunpack.c.l.b16 %v3004
    %v3069 = vunpack.c.l.b16 %v3005
    %v3070 = vunpack.c.l.b16 %v3006
    %v3071 = vunpack.c.l.b16 %v3007
    %v3072 = vpack.c.b16 %v3057, %v3056
    %v3073 = vpack.c.b16 %v3059, %v3058
    %v3074 = vpack.c.b16 %v3061, %v3060
    %v3075 = vpack.c.b16 %v3063, %v3062
    %v3076 = vpack.c.b16 %v3065, %v3064
    %v3077 = vpack.c.b16 %v3067, %v3066
    %v3078 = vpack.c.b16 %v3069, %v3068
    %v3079 = vpack.c.b16 %v3071, %v3070
    %3080 = vrot.lane.b32.xlu0 %v3072, 32
    %v3081 = vpop.permute.xlu0 %3080
    %3082 = vrot.lane.b32.xlu0 %v3073, 32
    %v3083 = vpop.permute.xlu0 %3082
    %3084 = vrot.lane.b32.xlu0 %v3074, 32
    %v3085 = vpop.permute.xlu0 %3084
    %3086 = vrot.lane.b32.xlu0 %v3075, 32
    %v3087 = vpop.permute.xlu0 %3086
    %3088 = vrot.lane.b32.xlu0 %v3076, 32
    %v3089 = vpop.permute.xlu0 %3088
    %3090 = vrot.lane.b32.xlu0 %v3077, 32
    %v3091 = vpop.permute.xlu0 %3090
    %3092 = vrot.lane.b32.xlu0 %v3078, 32
    %v3093 = vpop.permute.xlu0 %3092
    %3094 = vrot.lane.b32.xlu0 %v3079, 32
    %v3095 = vpop.permute.xlu0 %3094
    %v3112 = vunpack.c.l.b16 %v3008
    %v3113 = vunpack.c.l.b16 %v3009
    %v3114 = vunpack.c.l.b16 %v3010
    %v3115 = vunpack.c.l.b16 %v3011
    %v3116 = vunpack.c.l.b16 %v3012
    %v3117 = vunpack.c.l.b16 %v3013
    %v3118 = vunpack.c.l.b16 %v3014
    %v3119 = vunpack.c.l.b16 %v3015
    %v3120 = vunpack.c.l.b16 %v3016
    %v3121 = vunpack.c.l.b16 %v3017
    %v3122 = vunpack.c.l.b16 %v3018
    %v3123 = vunpack.c.l.b16 %v3019
    %v3124 = vunpack.c.l.b16 %v3020
    %v3125 = vunpack.c.l.b16 %v3021
    %v3126 = vunpack.c.l.b16 %v3022
    %v3127 = vunpack.c.l.b16 %v3023
    %v3128 = vpack.c.b16 %v3113, %v3112
    %v3129 = vpack.c.b16 %v3115, %v3114
    %v3130 = vpack.c.b16 %v3117, %v3116
    %v3131 = vpack.c.b16 %v3119, %v3118
    %v3132 = vpack.c.b16 %v3121, %v3120
    %v3133 = vpack.c.b16 %v3123, %v3122
    %v3134 = vpack.c.b16 %v3125, %v3124
    %v3135 = vpack.c.b16 %v3127, %v3126
    %3136 = vrot.lane.b32.xlu0 %v3128, 32
    %v3137 = vpop.permute.xlu0 %3136
    %3138 = vrot.lane.b32.xlu0 %v3129, 32
    %v3139 = vpop.permute.xlu0 %3138
    %3140 = vrot.lane.b32.xlu0 %v3130, 32
    %v3141 = vpop.permute.xlu0 %3140
    %3142 = vrot.lane.b32.xlu0 %v3131, 32
    %v3143 = vpop.permute.xlu0 %3142
    %3144 = vrot.lane.b32.xlu0 %v3132, 32
    %v3145 = vpop.permute.xlu0 %3144
    %3146 = vrot.lane.b32.xlu0 %v3133, 32
    %v3147 = vpop.permute.xlu0 %3146
    %3148 = vrot.lane.b32.xlu0 %v3134, 32
    %v3149 = vpop.permute.xlu0 %3148
    %3150 = vrot.lane.b32.xlu0 %v3135, 32
    %v3151 = vpop.permute.xlu0 %3150
    %v3153 = vsel %vm1135, %v3081, 0
    %v3156 = vsel %vm1135, %v3083, 0
    %v3159 = vsel %vm1135, %v3085, 0
    %v3162 = vsel %vm1135, %v3087, 0
    %v3165 = vsel %vm1135, %v3089, 0
    %v3168 = vsel %vm1135, %v3091, 0
    %v3171 = vsel %vm1135, %v3093, 0
    %v3174 = vsel %vm1135, %v3095, 0
    %v3177 = vsel %vm1135, %v3137, 0
    %v3180 = vsel %vm1135, %v3139, 0
    %v3183 = vsel %vm1135, %v3141, 0
    %v3186 = vsel %vm1135, %v3143, 0
    %v3189 = vsel %vm1135, %v3145, 0
    %v3192 = vsel %vm1135, %v3147, 0
    %v3195 = vsel %vm1135, %v3149, 0
    %v3198 = vsel %vm1135, %v3151, 0
    %3200 = vmatprep.subr.bf16.mxu0 0
    %3201 = vmatpush1.bf16.xpose.msra.mxu0 %v3198
    %3202 = vmatprep.subr.bf16.mxu0 0
    %3203 = vmatpush1.bf16.xpose.msra.mxu0 %v3195
    %3204 = vmatprep.subr.bf16.mxu0 0
    %3205 = vmatpush1.bf16.xpose.msra.mxu0 %v3192
    %3206 = vmatprep.subr.bf16.mxu0 0
    %3207 = vmatpush1.bf16.xpose.msra.mxu0 %v3189
    %3208 = vmatprep.subr.bf16.mxu0 0
    %3209 = vmatpush1.bf16.xpose.msra.mxu0 %v3186
    %3210 = vmatprep.subr.bf16.mxu0 0
    %3211 = vmatpush1.bf16.xpose.msra.mxu0 %v3183
    %3212 = vmatprep.subr.bf16.mxu0 0
    %3213 = vmatpush1.bf16.xpose.msra.mxu0 %v3180
    %3214 = vmatprep.subr.bf16.mxu0 0
    %3215 = vmatpush1.bf16.xpose.msra.mxu0 %v3177
    %3216 = vmatprep.subr.bf16.mxu0 0
    %3217 = vmatpush2.bf16.xpose.msra.mxu0 0
    %3218 = vmatprep.subr.bf16.mxu0 0
    %3219 = vmatpush2.bf16.xpose.msra.mxu0 0
    %3220 = vmatprep.subr.bf16.mxu0 0
    %3221 = vmatpush2.bf16.xpose.msra.mxu0 0
    %3222 = vmatprep.subr.bf16.mxu0 0
    %3223 = vmatpush2.bf16.xpose.msra.mxu0 0
    %3224 = vmatprep.subr.bf16.mxu0 0
    %3225 = vmatpush2.bf16.xpose.msra.mxu0 0
    %3226 = vmatprep.subr.bf16.mxu0 0
    %3227 = vmatpush2.bf16.xpose.msra.mxu0 0
    %3228 = vmatprep.subr.bf16.mxu0 0
    %3229 = vmatpush2.bf16.xpose.msra.mxu0 0
    %3230 = vmatprep.subr.bf16.mxu0 0
    %3231 = vmatpush2.bf16.xpose.msra.mxu0 0
    %3232 = vmatprep.mubr.bf16.mxu0 0
    %3233 = vmatmul.mubr.bf16.gmra.mxu0 %v3153
    %v3234 = vpop.f32.mrf.mxu0
    %v3235 = vadd.f32 0.0, %v3234
    %v3236 = vpop.f32.mrf.mxu0
    %v3237 = vpop.f32.mrf.mxu0
    %v3238 = vadd.f32 0.0, %v3237
    %v3239 = vpop.f32.mrf.mxu0
    %3240 = vmatprep.mubr.bf16.mxu0 0
    %3241 = vmatmul.mubr.bf16.gmra.mxu0 %v3156
    %v3242 = vpop.f32.mrf.mxu0
    %v3243 = vadd.f32 0.0, %v3242
    %v3244 = vpop.f32.mrf.mxu0
    %v3245 = vpop.f32.mrf.mxu0
    %v3246 = vadd.f32 0.0, %v3245
    %v3247 = vpop.f32.mrf.mxu0
    %3248 = vmatprep.mubr.bf16.mxu0 0
    %3249 = vmatmul.mubr.bf16.gmra.mxu0 %v3159
    %v3250 = vpop.f32.mrf.mxu0
    %v3251 = vadd.f32 0.0, %v3250
    %v3252 = vpop.f32.mrf.mxu0
    %v3253 = vpop.f32.mrf.mxu0
    %v3254 = vadd.f32 0.0, %v3253
    %v3255 = vpop.f32.mrf.mxu0
    %3256 = vmatprep.mubr.bf16.mxu0 0
    %3257 = vmatmul.mubr.bf16.gmra.mxu0 %v3162
    %v3258 = vpop.f32.mrf.mxu0
    %v3259 = vadd.f32 0.0, %v3258
    %v3260 = vpop.f32.mrf.mxu0
    %v3261 = vpop.f32.mrf.mxu0
    %v3262 = vadd.f32 0.0, %v3261
    %v3263 = vpop.f32.mrf.mxu0
    %3264 = vmatprep.mubr.bf16.mxu0 0
    %3265 = vmatmul.mubr.bf16.gmra.mxu0 %v3165
    %v3266 = vpop.f32.mrf.mxu0
    %v3267 = vadd.f32 0.0, %v3266
    %v3268 = vpop.f32.mrf.mxu0
    %v3269 = vpop.f32.mrf.mxu0
    %v3270 = vadd.f32 0.0, %v3269
    %v3271 = vpop.f32.mrf.mxu0
    %3272 = vmatprep.mubr.bf16.mxu0 0
    %3273 = vmatmul.mubr.bf16.gmra.mxu0 %v3168
    %v3274 = vpop.f32.mrf.mxu0
    %v3275 = vadd.f32 0.0, %v3274
    %v3276 = vpop.f32.mrf.mxu0
    %v3277 = vpop.f32.mrf.mxu0
    %v3278 = vadd.f32 0.0, %v3277
    %v3279 = vpop.f32.mrf.mxu0
    %3280 = vmatprep.mubr.bf16.mxu0 0
    %3281 = vmatmul.mubr.bf16.gmra.mxu0 %v3171
    %v3282 = vpop.f32.mrf.mxu0
    %v3283 = vadd.f32 0.0, %v3282
    %v3284 = vpop.f32.mrf.mxu0
    %v3285 = vpop.f32.mrf.mxu0
    %v3286 = vadd.f32 0.0, %v3285
    %v3287 = vpop.f32.mrf.mxu0
    %3288 = vmatprep.mubr.bf16.mxu0 0
    %3289 = vmatmul.mubr.bf16.gmra.mxu0 %v3174
    %v3290 = vpop.f32.mrf.mxu0
    %v3291 = vadd.f32 0.0, %v3290
    %v3292 = vpop.f32.mrf.mxu0
    %v3293 = vpop.f32.mrf.mxu0
    %v3294 = vadd.f32 0.0, %v3293
    %v3295 = vpop.f32.mrf.mxu0
    %3296 = vdwg.mxu0
    %3297 = vmax.xlane.f32.xlu0 %v3235
    %v3298 = vpop.xlane.xlu0 %3297
    %3299 = vmax.xlane.f32.xlu0 %v3238
    %v3300 = vpop.xlane.xlu0 %3299
    %3301 = vmax.xlane.f32.xlu0 %v3243
    %v3302 = vpop.xlane.xlu0 %3301
    %3303 = vmax.xlane.f32.xlu0 %v3246
    %v3304 = vpop.xlane.xlu0 %3303
    %3305 = vmax.xlane.f32.xlu0 %v3251
    %v3306 = vpop.xlane.xlu0 %3305
    %3307 = vmax.xlane.f32.xlu0 %v3254
    %v3308 = vpop.xlane.xlu0 %3307
    %3309 = vmax.xlane.f32.xlu0 %v3259
    %v3310 = vpop.xlane.xlu0 %3309
    %3311 = vmax.xlane.f32.xlu0 %v3262
    %v3312 = vpop.xlane.xlu0 %3311
    %3313 = vmax.xlane.f32.xlu0 %v3267
    %v3314 = vpop.xlane.xlu0 %3313
    %3315 = vmax.xlane.f32.xlu0 %v3270
    %v3316 = vpop.xlane.xlu0 %3315
    %3317 = vmax.xlane.f32.xlu0 %v3275
    %v3318 = vpop.xlane.xlu0 %3317
    %3319 = vmax.xlane.f32.xlu0 %v3278
    %v3320 = vpop.xlane.xlu0 %3319
    %3321 = vmax.xlane.f32.xlu0 %v3283
    %v3322 = vpop.xlane.xlu0 %3321
    %3323 = vmax.xlane.f32.xlu0 %v3286
    %v3324 = vpop.xlane.xlu0 %3323
    %3325 = vmax.xlane.f32.xlu0 %v3291
    %v3326 = vpop.xlane.xlu0 %3325
    %3327 = vmax.xlane.f32.xlu0 %v3294
    %v3328 = vpop.xlane.xlu0 %3327
    %v3329 = vsub.f32 %v3235, %v3298
    %v3330 = vsub.f32 %v3238, %v3300
    %v3331 = vsub.f32 %v3243, %v3302
    %v3332 = vsub.f32 %v3246, %v3304
    %v3333 = vsub.f32 %v3251, %v3306
    %v3334 = vsub.f32 %v3254, %v3308
    %v3335 = vsub.f32 %v3259, %v3310
    %v3336 = vsub.f32 %v3262, %v3312
    %v3337 = vsub.f32 %v3267, %v3314
    %v3338 = vsub.f32 %v3270, %v3316
    %v3339 = vsub.f32 %v3275, %v3318
    %v3340 = vsub.f32 %v3278, %v3320
    %v3341 = vsub.f32 %v3283, %v3322
    %v3342 = vsub.f32 %v3286, %v3324
    %v3343 = vsub.f32 %v3291, %v3326
    %v3344 = vsub.f32 %v3294, %v3328
    %v3345 = vmul.f32 %v3329, 1.442695
    %v3346 = vpow.pop %v3345
    %v3347 = vmul.f32 %v3330, 1.442695
    %v3348 = vpow.pop %v3347
    %v3349 = vmul.f32 %v3331, 1.442695
    %v3350 = vpow.pop %v3349
    %v3351 = vmul.f32 %v3332, 1.442695
    %v3352 = vpow.pop %v3351
    %v3353 = vmul.f32 %v3333, 1.442695
    %v3354 = vpow.pop %v3353
    %v3355 = vmul.f32 %v3334, 1.442695
    %v3356 = vpow.pop %v3355
    %v3357 = vmul.f32 %v3335, 1.442695
    %v3358 = vpow.pop %v3357
    %v3359 = vmul.f32 %v3336, 1.442695
    %v3360 = vpow.pop %v3359
    %v3361 = vmul.f32 %v3337, 1.442695
    %v3362 = vpow.pop %v3361
    %v3363 = vmul.f32 %v3338, 1.442695
    %v3364 = vpow.pop %v3363
    %v3365 = vmul.f32 %v3339, 1.442695
    %v3366 = vpow.pop %v3365
    %v3367 = vmul.f32 %v3340, 1.442695
    %v3368 = vpow.pop %v3367
    %v3369 = vmul.f32 %v3341, 1.442695
    %v3370 = vpow.pop %v3369
    %v3371 = vmul.f32 %v3342, 1.442695
    %v3372 = vpow.pop %v3371
    %v3373 = vmul.f32 %v3343, 1.442695
    %v3374 = vpow.pop %v3373
    %v3375 = vmul.f32 %v3344, 1.442695
    %v3376 = vpow.pop %v3375
    %3377 = vadd.xlane.f32.xlu0 %v3346
    %v3378 = vpop.xlane.xlu0 %3377
    %3379 = vadd.xlane.f32.xlu0 %v3348
    %v3380 = vpop.xlane.xlu0 %3379
    %3381 = vadd.xlane.f32.xlu0 %v3350
    %v3382 = vpop.xlane.xlu0 %3381
    %3383 = vadd.xlane.f32.xlu0 %v3352
    %v3384 = vpop.xlane.xlu0 %3383
    %3385 = vadd.xlane.f32.xlu0 %v3354
    %v3386 = vpop.xlane.xlu0 %3385
    %3387 = vadd.xlane.f32.xlu0 %v3356
    %v3388 = vpop.xlane.xlu0 %3387
    %3389 = vadd.xlane.f32.xlu0 %v3358
    %v3390 = vpop.xlane.xlu0 %3389
    %3391 = vadd.xlane.f32.xlu0 %v3360
    %v3392 = vpop.xlane.xlu0 %3391
    %3393 = vadd.xlane.f32.xlu0 %v3362
    %v3394 = vpop.xlane.xlu0 %3393
    %3395 = vadd.xlane.f32.xlu0 %v3364
    %v3396 = vpop.xlane.xlu0 %3395
    %3397 = vadd.xlane.f32.xlu0 %v3366
    %v3398 = vpop.xlane.xlu0 %3397
    %3399 = vadd.xlane.f32.xlu0 %v3368
    %v3400 = vpop.xlane.xlu0 %3399
    %3401 = vadd.xlane.f32.xlu0 %v3370
    %v3402 = vpop.xlane.xlu0 %3401
    %3403 = vadd.xlane.f32.xlu0 %v3372
    %v3404 = vpop.xlane.xlu0 %3403
    %3405 = vadd.xlane.f32.xlu0 %v3374
    %v3406 = vpop.xlane.xlu0 %3405
    %3407 = vadd.xlane.f32.xlu0 %v3376
    %v3408 = vpop.xlane.xlu0 %3407
    %v3409 = vrcp.pop %v3378
    %v3410 = vrcp.pop %v3380
    %v3411 = vrcp.pop %v3382
    %v3412 = vrcp.pop %v3384
    %v3413 = vrcp.pop %v3386
    %v3414 = vrcp.pop %v3388
    %v3415 = vrcp.pop %v3390
    %v3416 = vrcp.pop %v3392
    %v3417 = vrcp.pop %v3394
    %v3418 = vrcp.pop %v3396
    %v3419 = vrcp.pop %v3398
    %v3420 = vrcp.pop %v3400
    %v3421 = vrcp.pop %v3402
    %v3422 = vrcp.pop %v3404
    %v3423 = vrcp.pop %v3406
    %v3424 = vrcp.pop %v3408
    %v3425 = vmul.f32 %v3346, %v3409
    %v3426 = vmul.f32 %v3348, %v3410
    %v3427 = vmul.f32 %v3350, %v3411
    %v3428 = vmul.f32 %v3352, %v3412
    %v3429 = vmul.f32 %v3354, %v3413
    %v3430 = vmul.f32 %v3356, %v3414
    %v3431 = vmul.f32 %v3358, %v3415
    %v3432 = vmul.f32 %v3360, %v3416
    %v3433 = vmul.f32 %v3362, %v3417
    %v3434 = vmul.f32 %v3364, %v3418
    %v3435 = vmul.f32 %v3366, %v3419
    %v3436 = vmul.f32 %v3368, %v3420
    %v3437 = vmul.f32 %v3370, %v3421
    %v3438 = vmul.f32 %v3372, %v3422
    %v3439 = vmul.f32 %v3374, %v3423
    %v3440 = vmul.f32 %v3376, %v3424
    %v3441 = vpack.c.bf16 %v3426, %v3425
    %v3442 = vpack.c.bf16 %v3428, %v3427
    %v3443 = vpack.c.bf16 %v3430, %v3429
    %v3444 = vpack.c.bf16 %v3432, %v3431
    %v3445 = vpack.c.bf16 %v3434, %v3433
    %v3446 = vpack.c.bf16 %v3436, %v3435
    %v3447 = vpack.c.bf16 %v3438, %v3437
    %v3448 = vpack.c.bf16 %v3440, %v3439
    %v3465 = vunpack.c.l.b16 %v3024
    %v3466 = vunpack.c.l.b16 %v3025
    %v3467 = vunpack.c.l.b16 %v3026
    %v3468 = vunpack.c.l.b16 %v3027
    %v3469 = vunpack.c.l.b16 %v3028
    %v3470 = vunpack.c.l.b16 %v3029
    %v3471 = vunpack.c.l.b16 %v3030
    %v3472 = vunpack.c.l.b16 %v3031
    %v3473 = vunpack.c.l.b16 %v3032
    %v3474 = vunpack.c.l.b16 %v3033
    %v3475 = vunpack.c.l.b16 %v3034
    %v3476 = vunpack.c.l.b16 %v3035
    %v3477 = vunpack.c.l.b16 %v3036
    %v3478 = vunpack.c.l.b16 %v3037
    %v3479 = vunpack.c.l.b16 %v3038
    %v3480 = vunpack.c.l.b16 %v3039
    %v3481 = vpack.c.b16 %v3466, %v3465
    %v3482 = vpack.c.b16 %v3468, %v3467
    %v3483 = vpack.c.b16 %v3470, %v3469
    %v3484 = vpack.c.b16 %v3472, %v3471
    %v3485 = vpack.c.b16 %v3474, %v3473
    %v3486 = vpack.c.b16 %v3476, %v3475
    %v3487 = vpack.c.b16 %v3478, %v3477
    %v3488 = vpack.c.b16 %v3480, %v3479
    %3489 = vrot.lane.b32.xlu0 %v3481, 32
    %v3490 = vpop.permute.xlu0 %3489
    %3491 = vrot.lane.b32.xlu0 %v3482, 32
    %v3492 = vpop.permute.xlu0 %3491
    %3493 = vrot.lane.b32.xlu0 %v3483, 32
    %v3494 = vpop.permute.xlu0 %3493
    %3495 = vrot.lane.b32.xlu0 %v3484, 32
    %v3496 = vpop.permute.xlu0 %3495
    %3497 = vrot.lane.b32.xlu0 %v3485, 32
    %v3498 = vpop.permute.xlu0 %3497
    %3499 = vrot.lane.b32.xlu0 %v3486, 32
    %v3500 = vpop.permute.xlu0 %3499
    %3501 = vrot.lane.b32.xlu0 %v3487, 32
    %v3502 = vpop.permute.xlu0 %3501
    %3503 = vrot.lane.b32.xlu0 %v3488, 32
    %v3504 = vpop.permute.xlu0 %3503
    %3513 = vmatprep.subr.bf16.mxu0 0
    %3514 = vmatpush1.bf16.msra.mxu0 %v3504
    %3515 = vmatprep.subr.bf16.mxu0 0
    %3516 = vmatpush1.bf16.msra.mxu0 %v3502
    %3517 = vmatprep.subr.bf16.mxu0 0
    %3518 = vmatpush1.bf16.msra.mxu0 %v3500
    %3519 = vmatprep.subr.bf16.mxu0 0
    %3520 = vmatpush1.bf16.msra.mxu0 %v3498
    %3521 = vmatprep.subr.bf16.mxu0 0
    %3522 = vmatpush1.bf16.msra.mxu0 %v3496
    %3523 = vmatprep.subr.bf16.mxu0 0
    %3524 = vmatpush1.bf16.msra.mxu0 %v3494
    %3525 = vmatprep.subr.bf16.mxu0 0
    %3526 = vmatpush1.bf16.msra.mxu0 %v3492
    %3527 = vmatprep.subr.bf16.mxu0 0
    %3528 = vmatpush1.bf16.msra.mxu0 %v3490
    %3529 = vmatprep.subr.bf16.mxu0 0
    %3530 = vmatpush2.bf16.msra.mxu0 0
    %3531 = vmatprep.subr.bf16.mxu0 0
    %3532 = vmatpush2.bf16.msra.mxu0 0
    %3533 = vmatprep.subr.bf16.mxu0 0
    %3534 = vmatpush2.bf16.msra.mxu0 0
    %3535 = vmatprep.subr.bf16.mxu0 0
    %3536 = vmatpush2.bf16.msra.mxu0 0
    %3537 = vmatprep.subr.bf16.mxu0 0
    %3538 = vmatpush2.bf16.msra.mxu0 0
    %3539 = vmatprep.subr.bf16.mxu0 0
    %3540 = vmatpush2.bf16.msra.mxu0 0
    %3541 = vmatprep.subr.bf16.mxu0 0
    %3542 = vmatpush2.bf16.msra.mxu0 0
    %3543 = vmatprep.subr.bf16.mxu0 0
    %3544 = vmatpush2.bf16.msra.mxu0 0
    %3545 = vmatprep.mubr.bf16.mxu0 0
    %3546 = vmatmul.mubr.bf16.gmra.mxu0 %v3441
    %v3547 = vpop.f32.mrf.mxu0
    %v3548 = vadd.f32 0.0, %v3547
    %v3549 = vpop.f32.mrf.mxu0
    %v3550 = vpop.f32.mrf.mxu0
    %v3551 = vadd.f32 0.0, %v3550
    %v3552 = vpop.f32.mrf.mxu0
    %3553 = vmatprep.mubr.bf16.mxu0 0
    %3554 = vmatmul.mubr.bf16.gmra.mxu0 %v3442
    %v3555 = vpop.f32.mrf.mxu0
    %v3556 = vadd.f32 0.0, %v3555
    %v3557 = vpop.f32.mrf.mxu0
    %v3558 = vpop.f32.mrf.mxu0
    %v3559 = vadd.f32 0.0, %v3558
    %v3560 = vpop.f32.mrf.mxu0
    %3561 = vmatprep.mubr.bf16.mxu0 0
    %3562 = vmatmul.mubr.bf16.gmra.mxu0 %v3443
    %v3563 = vpop.f32.mrf.mxu0
    %v3564 = vadd.f32 0.0, %v3563
    %v3565 = vpop.f32.mrf.mxu0
    %v3566 = vpop.f32.mrf.mxu0
    %v3567 = vadd.f32 0.0, %v3566
    %v3568 = vpop.f32.mrf.mxu0
    %3569 = vmatprep.mubr.bf16.mxu0 0
    %3570 = vmatmul.mubr.bf16.gmra.mxu0 %v3444
    %v3571 = vpop.f32.mrf.mxu0
    %v3572 = vadd.f32 0.0, %v3571
    %v3573 = vpop.f32.mrf.mxu0
    %v3574 = vpop.f32.mrf.mxu0
    %v3575 = vadd.f32 0.0, %v3574
    %v3576 = vpop.f32.mrf.mxu0
    %3577 = vmatprep.mubr.bf16.mxu0 0
    %3578 = vmatmul.mubr.bf16.gmra.mxu0 %v3445
    %v3579 = vpop.f32.mrf.mxu0
    %v3580 = vadd.f32 0.0, %v3579
    %v3581 = vpop.f32.mrf.mxu0
    %v3582 = vpop.f32.mrf.mxu0
    %v3583 = vadd.f32 0.0, %v3582
    %v3584 = vpop.f32.mrf.mxu0
    %3585 = vmatprep.mubr.bf16.mxu0 0
    %3586 = vmatmul.mubr.bf16.gmra.mxu0 %v3446
    %v3587 = vpop.f32.mrf.mxu0
    %v3588 = vadd.f32 0.0, %v3587
    %v3589 = vpop.f32.mrf.mxu0
    %v3590 = vpop.f32.mrf.mxu0
    %v3591 = vadd.f32 0.0, %v3590
    %v3592 = vpop.f32.mrf.mxu0
    %3593 = vmatprep.mubr.bf16.mxu0 0
    %3594 = vmatmul.mubr.bf16.gmra.mxu0 %v3447
    %v3595 = vpop.f32.mrf.mxu0
    %v3596 = vadd.f32 0.0, %v3595
    %v3597 = vpop.f32.mrf.mxu0
    %v3598 = vpop.f32.mrf.mxu0
    %v3599 = vadd.f32 0.0, %v3598
    %v3600 = vpop.f32.mrf.mxu0
    %3601 = vmatprep.mubr.bf16.mxu0 0
    %3602 = vmatmul.mubr.bf16.gmra.mxu0 %v3448
    %v3603 = vpop.f32.mrf.mxu0
    %v3604 = vadd.f32 0.0, %v3603
    %v3605 = vpop.f32.mrf.mxu0
    %v3606 = vpop.f32.mrf.mxu0
    %v3607 = vadd.f32 0.0, %v3606
    %v3608 = vpop.f32.mrf.mxu0
    %3609 = vdwg.mxu0
    %3626 = vrot.lane.b32.xlu0 %v3548, 96
    %v3627 = vpop.permute.xlu0 %3626
    %3628 = vrot.lane.b32.xlu0 %v3551, 96
    %v3629 = vpop.permute.xlu0 %3628
    %3630 = vrot.lane.b32.xlu0 %v3556, 96
    %v3631 = vpop.permute.xlu0 %3630
    %3632 = vrot.lane.b32.xlu0 %v3559, 96
    %v3633 = vpop.permute.xlu0 %3632
    %3634 = vrot.lane.b32.xlu0 %v3564, 96
    %v3635 = vpop.permute.xlu0 %3634
    %3636 = vrot.lane.b32.xlu0 %v3567, 96
    %v3637 = vpop.permute.xlu0 %3636
    %3638 = vrot.lane.b32.xlu0 %v3572, 96
    %v3639 = vpop.permute.xlu0 %3638
    %3640 = vrot.lane.b32.xlu0 %v3575, 96
    %v3641 = vpop.permute.xlu0 %3640
    %3642 = vrot.lane.b32.xlu0 %v3580, 96
    %v3643 = vpop.permute.xlu0 %3642
    %3644 = vrot.lane.b32.xlu0 %v3583, 96
    %v3645 = vpop.permute.xlu0 %3644
    %3646 = vrot.lane.b32.xlu0 %v3588, 96
    %v3647 = vpop.permute.xlu0 %3646
    %3648 = vrot.lane.b32.xlu0 %v3591, 96
    %v3649 = vpop.permute.xlu0 %3648
    %3650 = vrot.lane.b32.xlu0 %v3596, 96
    %v3651 = vpop.permute.xlu0 %3650
    %3652 = vrot.lane.b32.xlu0 %v3599, 96
    %v3653 = vpop.permute.xlu0 %3652
    %3654 = vrot.lane.b32.xlu0 %v3604, 96
    %v3655 = vpop.permute.xlu0 %3654
    %3656 = vrot.lane.b32.xlu0 %v3607, 96
    %v3657 = vpop.permute.xlu0 %3656
    %vm3674 = vcmask 1048320
    %3675 = vst.msk [vmem:[#allocation8] sm:$0xff] %vm3674, %v3627
    %3676 = vst.msk [vmem:[#allocation8 + $0x8] sm:$0xff] %vm3674, %v3629
    %3677 = vst.msk [vmem:[#allocation8 + $0x10] sm:$0xff] %vm3674, %v3631
    %3678 = vst.msk [vmem:[#allocation8 + $0x18] sm:$0xff] %vm3674, %v3633
    %3679 = vst.msk [vmem:[#allocation8 + $0x20] sm:$0xff] %vm3674, %v3635
    %3680 = vst.msk [vmem:[#allocation8 + $0x28] sm:$0xff] %vm3674, %v3637
    %3681 = vst.msk [vmem:[#allocation8 + $0x30] sm:$0xff] %vm3674, %v3639
    %3682 = vst.msk [vmem:[#allocation8 + $0x38] sm:$0xff] %vm3674, %v3641
    %3683 = vst.msk [vmem:[#allocation8 + $0x40] sm:$0xff] %vm3674, %v3643
    %3684 = vst.msk [vmem:[#allocation8 + $0x48] sm:$0xff] %vm3674, %v3645
    %3685 = vst.msk [vmem:[#allocation8 + $0x50] sm:$0xff] %vm3674, %v3647
    %3686 = vst.msk [vmem:[#allocation8 + $0x58] sm:$0xff] %vm3674, %v3649
    %3687 = vst.msk [vmem:[#allocation8 + $0x60] sm:$0xff] %vm3674, %v3651
    %3688 = vst.msk [vmem:[#allocation8 + $0x68] sm:$0xff] %vm3674, %v3653
    %3689 = vst.msk [vmem:[#allocation8 + $0x70] sm:$0xff] %vm3674, %v3655
    %3690 = vst.msk [vmem:[#allocation8 + $0x78] sm:$0xff] %vm3674, %v3657
    %v3691 = vld [vmem:[#allocation2 + $0xc0] sm:$0xf]
    %v3692 = vld [vmem:[#allocation2 + $0xcc] sm:$0xf]
    %v3693 = vld [vmem:[#allocation2 + $0xd8] sm:$0xf]
    %v3694 = vld [vmem:[#allocation2 + $0xe4] sm:$0xf]
    %v3695 = vld [vmem:[#allocation2 + $0xf0] sm:$0xf]
    %v3696 = vld [vmem:[#allocation2 + $0xfc] sm:$0xf]
    %v3697 = vld [vmem:[#allocation2 + $0x108] sm:$0xf]
    %v3698 = vld [vmem:[#allocation2 + $0x114] sm:$0xf]
    %v3699 = vld [vmem:[#allocation2 + $0x120] sm:$0xf]
    %v3700 = vld [vmem:[#allocation2 + $0x12c] sm:$0xf]
    %v3701 = vld [vmem:[#allocation2 + $0x138] sm:$0xf]
    %v3702 = vld [vmem:[#allocation2 + $0x144] sm:$0xf]
    %v3703 = vld [vmem:[#allocation2 + $0x150] sm:$0xf]
    %v3704 = vld [vmem:[#allocation2 + $0x15c] sm:$0xf]
    %v3705 = vld [vmem:[#allocation2 + $0x168] sm:$0xf]
    %v3706 = vld [vmem:[#allocation2 + $0x174] sm:$0xf]
    %v3707 = vld [vmem:[#allocation2 + $0xc4] sm:$0xf]
    %v3708 = vld [vmem:[#allocation2 + $0xd0] sm:$0xf]
    %v3709 = vld [vmem:[#allocation2 + $0xdc] sm:$0xf]
    %v3710 = vld [vmem:[#allocation2 + $0xe8] sm:$0xf]
    %v3711 = vld [vmem:[#allocation2 + $0xf4] sm:$0xf]
    %v3712 = vld [vmem:[#allocation2 + $0x100] sm:$0xf]
    %v3713 = vld [vmem:[#allocation2 + $0x10c] sm:$0xf]
    %v3714 = vld [vmem:[#allocation2 + $0x118] sm:$0xf]
    %v3715 = vld [vmem:[#allocation2 + $0x124] sm:$0xf]
    %v3716 = vld [vmem:[#allocation2 + $0x130] sm:$0xf]
    %v3717 = vld [vmem:[#allocation2 + $0x13c] sm:$0xf]
    %v3718 = vld [vmem:[#allocation2 + $0x148] sm:$0xf]
    %v3719 = vld [vmem:[#allocation2 + $0x154] sm:$0xf]
    %v3720 = vld [vmem:[#allocation2 + $0x160] sm:$0xf]
    %v3721 = vld [vmem:[#allocation2 + $0x16c] sm:$0xf]
    %v3722 = vld [vmem:[#allocation2 + $0x178] sm:$0xf]
    %v3723 = vld [vmem:[#allocation2 + $0xc8] sm:$0xf]
    %v3724 = vld [vmem:[#allocation2 + $0xd4] sm:$0xf]
    %v3725 = vld [vmem:[#allocation2 + $0xe0] sm:$0xf]
    %v3726 = vld [vmem:[#allocation2 + $0xec] sm:$0xf]
    %v3727 = vld [vmem:[#allocation2 + $0xf8] sm:$0xf]
    %v3728 = vld [vmem:[#allocation2 + $0x104] sm:$0xf]
    %v3729 = vld [vmem:[#allocation2 + $0x110] sm:$0xf]
    %v3730 = vld [vmem:[#allocation2 + $0x11c] sm:$0xf]
    %v3731 = vld [vmem:[#allocation2 + $0x128] sm:$0xf]
    %v3732 = vld [vmem:[#allocation2 + $0x134] sm:$0xf]
    %v3733 = vld [vmem:[#allocation2 + $0x140] sm:$0xf]
    %v3734 = vld [vmem:[#allocation2 + $0x14c] sm:$0xf]
    %v3735 = vld [vmem:[#allocation2 + $0x158] sm:$0xf]
    %v3736 = vld [vmem:[#allocation2 + $0x164] sm:$0xf]
    %v3737 = vld [vmem:[#allocation2 + $0x170] sm:$0xf]
    %v3738 = vld [vmem:[#allocation2 + $0x17c] sm:$0xf]
    %v3755 = vunpack.c.l.b16 %v3691
    %v3756 = vunpack.c.l.b16 %v3692
    %v3757 = vunpack.c.l.b16 %v3693
    %v3758 = vunpack.c.l.b16 %v3694
    %v3759 = vunpack.c.l.b16 %v3695
    %v3760 = vunpack.c.l.b16 %v3696
    %v3761 = vunpack.c.l.b16 %v3697
    %v3762 = vunpack.c.l.b16 %v3698
    %v3763 = vunpack.c.l.b16 %v3699
    %v3764 = vunpack.c.l.b16 %v3700
    %v3765 = vunpack.c.l.b16 %v3701
    %v3766 = vunpack.c.l.b16 %v3702
    %v3767 = vunpack.c.l.b16 %v3703
    %v3768 = vunpack.c.l.b16 %v3704
    %v3769 = vunpack.c.l.b16 %v3705
    %v3770 = vunpack.c.l.b16 %v3706
    %v3771 = vpack.c.b16 %v3756, %v3755
    %v3772 = vpack.c.b16 %v3758, %v3757
    %v3773 = vpack.c.b16 %v3760, %v3759
    %v3774 = vpack.c.b16 %v3762, %v3761
    %v3775 = vpack.c.b16 %v3764, %v3763
    %v3776 = vpack.c.b16 %v3766, %v3765
    %v3777 = vpack.c.b16 %v3768, %v3767
    %v3778 = vpack.c.b16 %v3770, %v3769
    %v3795 = vunpack.c.l.b16 %v3707
    %v3796 = vunpack.c.l.b16 %v3708
    %v3797 = vunpack.c.l.b16 %v3709
    %v3798 = vunpack.c.l.b16 %v3710
    %v3799 = vunpack.c.l.b16 %v3711
    %v3800 = vunpack.c.l.b16 %v3712
    %v3801 = vunpack.c.l.b16 %v3713
    %v3802 = vunpack.c.l.b16 %v3714
    %v3803 = vunpack.c.l.b16 %v3715
    %v3804 = vunpack.c.l.b16 %v3716
    %v3805 = vunpack.c.l.b16 %v3717
    %v3806 = vunpack.c.l.b16 %v3718
    %v3807 = vunpack.c.l.b16 %v3719
    %v3808 = vunpack.c.l.b16 %v3720
    %v3809 = vunpack.c.l.b16 %v3721
    %v3810 = vunpack.c.l.b16 %v3722
    %v3811 = vpack.c.b16 %v3796, %v3795
    %v3812 = vpack.c.b16 %v3798, %v3797
    %v3813 = vpack.c.b16 %v3800, %v3799
    %v3814 = vpack.c.b16 %v3802, %v3801
    %v3815 = vpack.c.b16 %v3804, %v3803
    %v3816 = vpack.c.b16 %v3806, %v3805
    %v3817 = vpack.c.b16 %v3808, %v3807
    %v3818 = vpack.c.b16 %v3810, %v3809
    %v3820 = vsel %vm1135, %v3771, 0
    %v3823 = vsel %vm1135, %v3772, 0
    %v3826 = vsel %vm1135, %v3773, 0
    %v3829 = vsel %vm1135, %v3774, 0
    %v3832 = vsel %vm1135, %v3775, 0
    %v3835 = vsel %vm1135, %v3776, 0
    %v3838 = vsel %vm1135, %v3777, 0
    %v3841 = vsel %vm1135, %v3778, 0
    %v3844 = vsel %vm1135, %v3811, 0
    %v3847 = vsel %vm1135, %v3812, 0
    %v3850 = vsel %vm1135, %v3813, 0
    %v3853 = vsel %vm1135, %v3814, 0
    %v3856 = vsel %vm1135, %v3815, 0
    %v3859 = vsel %vm1135, %v3816, 0
    %v3862 = vsel %vm1135, %v3817, 0
    %v3865 = vsel %vm1135, %v3818, 0
    %3867 = vmatprep.subr.bf16.mxu0 0
    %3868 = vmatpush1.bf16.xpose.msra.mxu0 %v3865
    %3869 = vmatprep.subr.bf16.mxu0 0
    %3870 = vmatpush1.bf16.xpose.msra.mxu0 %v3862
    %3871 = vmatprep.subr.bf16.mxu0 0
    %3872 = vmatpush1.bf16.xpose.msra.mxu0 %v3859
    %3873 = vmatprep.subr.bf16.mxu0 0
    %3874 = vmatpush1.bf16.xpose.msra.mxu0 %v3856
    %3875 = vmatprep.subr.bf16.mxu0 0
    %3876 = vmatpush1.bf16.xpose.msra.mxu0 %v3853
    %3877 = vmatprep.subr.bf16.mxu0 0
    %3878 = vmatpush1.bf16.xpose.msra.mxu0 %v3850
    %3879 = vmatprep.subr.bf16.mxu0 0
    %3880 = vmatpush1.bf16.xpose.msra.mxu0 %v3847
    %3881 = vmatprep.subr.bf16.mxu0 0
    %3882 = vmatpush1.bf16.xpose.msra.mxu0 %v3844
    %3883 = vmatprep.subr.bf16.mxu0 0
    %3884 = vmatpush2.bf16.xpose.msra.mxu0 0
    %3885 = vmatprep.subr.bf16.mxu0 0
    %3886 = vmatpush2.bf16.xpose.msra.mxu0 0
    %3887 = vmatprep.subr.bf16.mxu0 0
    %3888 = vmatpush2.bf16.xpose.msra.mxu0 0
    %3889 = vmatprep.subr.bf16.mxu0 0
    %3890 = vmatpush2.bf16.xpose.msra.mxu0 0
    %3891 = vmatprep.subr.bf16.mxu0 0
    %3892 = vmatpush2.bf16.xpose.msra.mxu0 0
    %3893 = vmatprep.subr.bf16.mxu0 0
    %3894 = vmatpush2.bf16.xpose.msra.mxu0 0
    %3895 = vmatprep.subr.bf16.mxu0 0
    %3896 = vmatpush2.bf16.xpose.msra.mxu0 0
    %3897 = vmatprep.subr.bf16.mxu0 0
    %3898 = vmatpush2.bf16.xpose.msra.mxu0 0
    %3899 = vmatprep.mubr.bf16.mxu0 0
    %3900 = vmatmul.mubr.bf16.gmra.mxu0 %v3820
    %v3901 = vpop.f32.mrf.mxu0
    %v3902 = vadd.f32 0.0, %v3901
    %v3903 = vpop.f32.mrf.mxu0
    %v3904 = vpop.f32.mrf.mxu0
    %v3905 = vadd.f32 0.0, %v3904
    %v3906 = vpop.f32.mrf.mxu0
    %3907 = vmatprep.mubr.bf16.mxu0 0
    %3908 = vmatmul.mubr.bf16.gmra.mxu0 %v3823
    %v3909 = vpop.f32.mrf.mxu0
    %v3910 = vadd.f32 0.0, %v3909
    %v3911 = vpop.f32.mrf.mxu0
    %v3912 = vpop.f32.mrf.mxu0
    %v3913 = vadd.f32 0.0, %v3912
    %v3914 = vpop.f32.mrf.mxu0
    %3915 = vmatprep.mubr.bf16.mxu0 0
    %3916 = vmatmul.mubr.bf16.gmra.mxu0 %v3826
    %v3917 = vpop.f32.mrf.mxu0
    %v3918 = vadd.f32 0.0, %v3917
    %v3919 = vpop.f32.mrf.mxu0
    %v3920 = vpop.f32.mrf.mxu0
    %v3921 = vadd.f32 0.0, %v3920
    %v3922 = vpop.f32.mrf.mxu0
    %3923 = vmatprep.mubr.bf16.mxu0 0
    %3924 = vmatmul.mubr.bf16.gmra.mxu0 %v3829
    %v3925 = vpop.f32.mrf.mxu0
    %v3926 = vadd.f32 0.0, %v3925
    %v3927 = vpop.f32.mrf.mxu0
    %v3928 = vpop.f32.mrf.mxu0
    %v3929 = vadd.f32 0.0, %v3928
    %v3930 = vpop.f32.mrf.mxu0
    %3931 = vmatprep.mubr.bf16.mxu0 0
    %3932 = vmatmul.mubr.bf16.gmra.mxu0 %v3832
    %v3933 = vpop.f32.mrf.mxu0
    %v3934 = vadd.f32 0.0, %v3933
    %v3935 = vpop.f32.mrf.mxu0
    %v3936 = vpop.f32.mrf.mxu0
    %v3937 = vadd.f32 0.0, %v3936
    %v3938 = vpop.f32.mrf.mxu0
    %3939 = vmatprep.mubr.bf16.mxu0 0
    %3940 = vmatmul.mubr.bf16.gmra.mxu0 %v3835
    %v3941 = vpop.f32.mrf.mxu0
    %v3942 = vadd.f32 0.0, %v3941
    %v3943 = vpop.f32.mrf.mxu0
    %v3944 = vpop.f32.mrf.mxu0
    %v3945 = vadd.f32 0.0, %v3944
    %v3946 = vpop.f32.mrf.mxu0
    %3947 = vmatprep.mubr.bf16.mxu0 0
    %3948 = vmatmul.mubr.bf16.gmra.mxu0 %v3838
    %v3949 = vpop.f32.mrf.mxu0
    %v3950 = vadd.f32 0.0, %v3949
    %v3951 = vpop.f32.mrf.mxu0
    %v3952 = vpop.f32.mrf.mxu0
    %v3953 = vadd.f32 0.0, %v3952
    %v3954 = vpop.f32.mrf.mxu0
    %3955 = vmatprep.mubr.bf16.mxu0 0
    %3956 = vmatmul.mubr.bf16.gmra.mxu0 %v3841
    %v3957 = vpop.f32.mrf.mxu0
    %v3958 = vadd.f32 0.0, %v3957
    %v3959 = vpop.f32.mrf.mxu0
    %v3960 = vpop.f32.mrf.mxu0
    %v3961 = vadd.f32 0.0, %v3960
    %v3962 = vpop.f32.mrf.mxu0
    %3963 = vdwg.mxu0
    %3964 = vmax.xlane.f32.xlu0 %v3902
    %v3965 = vpop.xlane.xlu0 %3964
    %3966 = vmax.xlane.f32.xlu0 %v3905
    %v3967 = vpop.xlane.xlu0 %3966
    %3968 = vmax.xlane.f32.xlu0 %v3910
    %v3969 = vpop.xlane.xlu0 %3968
    %3970 = vmax.xlane.f32.xlu0 %v3913
    %v3971 = vpop.xlane.xlu0 %3970
    %3972 = vmax.xlane.f32.xlu0 %v3918
    %v3973 = vpop.xlane.xlu0 %3972
    %3974 = vmax.xlane.f32.xlu0 %v3921
    %v3975 = vpop.xlane.xlu0 %3974
    %3976 = vmax.xlane.f32.xlu0 %v3926
    %v3977 = vpop.xlane.xlu0 %3976
    %3978 = vmax.xlane.f32.xlu0 %v3929
    %v3979 = vpop.xlane.xlu0 %3978
    %3980 = vmax.xlane.f32.xlu0 %v3934
    %v3981 = vpop.xlane.xlu0 %3980
    %3982 = vmax.xlane.f32.xlu0 %v3937
    %v3983 = vpop.xlane.xlu0 %3982
    %3984 = vmax.xlane.f32.xlu0 %v3942
    %v3985 = vpop.xlane.xlu0 %3984
    %3986 = vmax.xlane.f32.xlu0 %v3945
    %v3987 = vpop.xlane.xlu0 %3986
    %3988 = vmax.xlane.f32.xlu0 %v3950
    %v3989 = vpop.xlane.xlu0 %3988
    %3990 = vmax.xlane.f32.xlu0 %v3953
    %v3991 = vpop.xlane.xlu0 %3990
    %3992 = vmax.xlane.f32.xlu0 %v3958
    %v3993 = vpop.xlane.xlu0 %3992
    %3994 = vmax.xlane.f32.xlu0 %v3961
    %v3995 = vpop.xlane.xlu0 %3994
    %v3996 = vsub.f32 %v3902, %v3965
    %v3997 = vsub.f32 %v3905, %v3967
    %v3998 = vsub.f32 %v3910, %v3969
    %v3999 = vsub.f32 %v3913, %v3971
    %v4000 = vsub.f32 %v3918, %v3973
    %v4001 = vsub.f32 %v3921, %v3975
    %v4002 = vsub.f32 %v3926, %v3977
    %v4003 = vsub.f32 %v3929, %v3979
    %v4004 = vsub.f32 %v3934, %v3981
    %v4005 = vsub.f32 %v3937, %v3983
    %v4006 = vsub.f32 %v3942, %v3985
    %v4007 = vsub.f32 %v3945, %v3987
    %v4008 = vsub.f32 %v3950, %v3989
    %v4009 = vsub.f32 %v3953, %v3991
    %v4010 = vsub.f32 %v3958, %v3993
    %v4011 = vsub.f32 %v3961, %v3995
    %v4012 = vmul.f32 %v3996, 1.442695
    %v4013 = vpow.pop %v4012
    %v4014 = vmul.f32 %v3997, 1.442695
    %v4015 = vpow.pop %v4014
    %v4016 = vmul.f32 %v3998, 1.442695
    %v4017 = vpow.pop %v4016
    %v4018 = vmul.f32 %v3999, 1.442695
    %v4019 = vpow.pop %v4018
    %v4020 = vmul.f32 %v4000, 1.442695
    %v4021 = vpow.pop %v4020
    %v4022 = vmul.f32 %v4001, 1.442695
    %v4023 = vpow.pop %v4022
    %v4024 = vmul.f32 %v4002, 1.442695
    %v4025 = vpow.pop %v4024
    %v4026 = vmul.f32 %v4003, 1.442695
    %v4027 = vpow.pop %v4026
    %v4028 = vmul.f32 %v4004, 1.442695
    %v4029 = vpow.pop %v4028
    %v4030 = vmul.f32 %v4005, 1.442695
    %v4031 = vpow.pop %v4030
    %v4032 = vmul.f32 %v4006, 1.442695
    %v4033 = vpow.pop %v4032
    %v4034 = vmul.f32 %v4007, 1.442695
    %v4035 = vpow.pop %v4034
    %v4036 = vmul.f32 %v4008, 1.442695
    %v4037 = vpow.pop %v4036
    %v4038 = vmul.f32 %v4009, 1.442695
    %v4039 = vpow.pop %v4038
    %v4040 = vmul.f32 %v4010, 1.442695
    %v4041 = vpow.pop %v4040
    %v4042 = vmul.f32 %v4011, 1.442695
    %v4043 = vpow.pop %v4042
    %4044 = vadd.xlane.f32.xlu0 %v4013
    %v4045 = vpop.xlane.xlu0 %4044
    %4046 = vadd.xlane.f32.xlu0 %v4015
    %v4047 = vpop.xlane.xlu0 %4046
    %4048 = vadd.xlane.f32.xlu0 %v4017
    %v4049 = vpop.xlane.xlu0 %4048
    %4050 = vadd.xlane.f32.xlu0 %v4019
    %v4051 = vpop.xlane.xlu0 %4050
    %4052 = vadd.xlane.f32.xlu0 %v4021
    %v4053 = vpop.xlane.xlu0 %4052
    %4054 = vadd.xlane.f32.xlu0 %v4023
    %v4055 = vpop.xlane.xlu0 %4054
    %4056 = vadd.xlane.f32.xlu0 %v4025
    %v4057 = vpop.xlane.xlu0 %4056
    %4058 = vadd.xlane.f32.xlu0 %v4027
    %v4059 = vpop.xlane.xlu0 %4058
    %4060 = vadd.xlane.f32.xlu0 %v4029
    %v4061 = vpop.xlane.xlu0 %4060
    %4062 = vadd.xlane.f32.xlu0 %v4031
    %v4063 = vpop.xlane.xlu0 %4062
    %4064 = vadd.xlane.f32.xlu0 %v4033
    %v4065 = vpop.xlane.xlu0 %4064
    %4066 = vadd.xlane.f32.xlu0 %v4035
    %v4067 = vpop.xlane.xlu0 %4066
    %4068 = vadd.xlane.f32.xlu0 %v4037
    %v4069 = vpop.xlane.xlu0 %4068
    %4070 = vadd.xlane.f32.xlu0 %v4039
    %v4071 = vpop.xlane.xlu0 %4070
    %4072 = vadd.xlane.f32.xlu0 %v4041
    %v4073 = vpop.xlane.xlu0 %4072
    %4074 = vadd.xlane.f32.xlu0 %v4043
    %v4075 = vpop.xlane.xlu0 %4074
    %v4076 = vrcp.pop %v4045
    %v4077 = vrcp.pop %v4047
    %v4078 = vrcp.pop %v4049
    %v4079 = vrcp.pop %v4051
    %v4080 = vrcp.pop %v4053
    %v4081 = vrcp.pop %v4055
    %v4082 = vrcp.pop %v4057
    %v4083 = vrcp.pop %v4059
    %v4084 = vrcp.pop %v4061
    %v4085 = vrcp.pop %v4063
    %v4086 = vrcp.pop %v4065
    %v4087 = vrcp.pop %v4067
    %v4088 = vrcp.pop %v4069
    %v4089 = vrcp.pop %v4071
    %v4090 = vrcp.pop %v4073
    %v4091 = vrcp.pop %v4075
    %v4092 = vmul.f32 %v4013, %v4076
    %v4093 = vmul.f32 %v4015, %v4077
    %v4094 = vmul.f32 %v4017, %v4078
    %v4095 = vmul.f32 %v4019, %v4079
    %v4096 = vmul.f32 %v4021, %v4080
    %v4097 = vmul.f32 %v4023, %v4081
    %v4098 = vmul.f32 %v4025, %v4082
    %v4099 = vmul.f32 %v4027, %v4083
    %v4100 = vmul.f32 %v4029, %v4084
    %v4101 = vmul.f32 %v4031, %v4085
    %v4102 = vmul.f32 %v4033, %v4086
    %v4103 = vmul.f32 %v4035, %v4087
    %v4104 = vmul.f32 %v4037, %v4088
    %v4105 = vmul.f32 %v4039, %v4089
    %v4106 = vmul.f32 %v4041, %v4090
    %v4107 = vmul.f32 %v4043, %v4091
    %v4108 = vpack.c.bf16 %v4093, %v4092
    %v4109 = vpack.c.bf16 %v4095, %v4094
    %v4110 = vpack.c.bf16 %v4097, %v4096
    %v4111 = vpack.c.bf16 %v4099, %v4098
    %v4112 = vpack.c.bf16 %v4101, %v4100
    %v4113 = vpack.c.bf16 %v4103, %v4102
    %v4114 = vpack.c.bf16 %v4105, %v4104
    %v4115 = vpack.c.bf16 %v4107, %v4106
    %v4132 = vunpack.c.l.b16 %v3723
    %v4133 = vunpack.c.l.b16 %v3724
    %v4134 = vunpack.c.l.b16 %v3725
    %v4135 = vunpack.c.l.b16 %v3726
    %v4136 = vunpack.c.l.b16 %v3727
    %v4137 = vunpack.c.l.b16 %v3728
    %v4138 = vunpack.c.l.b16 %v3729
    %v4139 = vunpack.c.l.b16 %v3730
    %v4140 = vunpack.c.l.b16 %v3731
    %v4141 = vunpack.c.l.b16 %v3732
    %v4142 = vunpack.c.l.b16 %v3733
    %v4143 = vunpack.c.l.b16 %v3734
    %v4144 = vunpack.c.l.b16 %v3735
    %v4145 = vunpack.c.l.b16 %v3736
    %v4146 = vunpack.c.l.b16 %v3737
    %v4147 = vunpack.c.l.b16 %v3738
    %v4148 = vpack.c.b16 %v4133, %v4132
    %v4149 = vpack.c.b16 %v4135, %v4134
    %v4150 = vpack.c.b16 %v4137, %v4136
    %v4151 = vpack.c.b16 %v4139, %v4138
    %v4152 = vpack.c.b16 %v4141, %v4140
    %v4153 = vpack.c.b16 %v4143, %v4142
    %v4154 = vpack.c.b16 %v4145, %v4144
    %v4155 = vpack.c.b16 %v4147, %v4146
    %4164 = vmatprep.subr.bf16.mxu0 0
    %4165 = vmatpush1.bf16.msra.mxu0 %v4155
    %4166 = vmatprep.subr.bf16.mxu0 0
    %4167 = vmatpush1.bf16.msra.mxu0 %v4154
    %4168 = vmatprep.subr.bf16.mxu0 0
    %4169 = vmatpush1.bf16.msra.mxu0 %v4153
    %4170 = vmatprep.subr.bf16.mxu0 0
    %4171 = vmatpush1.bf16.msra.mxu0 %v4152
    %4172 = vmatprep.subr.bf16.mxu0 0
    %4173 = vmatpush1.bf16.msra.mxu0 %v4151
    %4174 = vmatprep.subr.bf16.mxu0 0
    %4175 = vmatpush1.bf16.msra.mxu0 %v4150
    %4176 = vmatprep.subr.bf16.mxu0 0
    %4177 = vmatpush1.bf16.msra.mxu0 %v4149
    %4178 = vmatprep.subr.bf16.mxu0 0
    %4179 = vmatpush1.bf16.msra.mxu0 %v4148
    %4180 = vmatprep.subr.bf16.mxu0 0
    %4181 = vmatpush2.bf16.msra.mxu0 0
    %4182 = vmatprep.subr.bf16.mxu0 0
    %4183 = vmatpush2.bf16.msra.mxu0 0
    %4184 = vmatprep.subr.bf16.mxu0 0
    %4185 = vmatpush2.bf16.msra.mxu0 0
    %4186 = vmatprep.subr.bf16.mxu0 0
    %4187 = vmatpush2.bf16.msra.mxu0 0
    %4188 = vmatprep.subr.bf16.mxu0 0
    %4189 = vmatpush2.bf16.msra.mxu0 0
    %4190 = vmatprep.subr.bf16.mxu0 0
    %4191 = vmatpush2.bf16.msra.mxu0 0
    %4192 = vmatprep.subr.bf16.mxu0 0
    %4193 = vmatpush2.bf16.msra.mxu0 0
    %4194 = vmatprep.subr.bf16.mxu0 0
    %4195 = vmatpush2.bf16.msra.mxu0 0
    %4196 = vmatprep.mubr.bf16.mxu0 0
    %4197 = vmatmul.mubr.bf16.gmra.mxu0 %v4108
    %v4198 = vpop.f32.mrf.mxu0
    %v4199 = vadd.f32 0.0, %v4198
    %v4200 = vpop.f32.mrf.mxu0
    %v4201 = vpop.f32.mrf.mxu0
    %v4202 = vadd.f32 0.0, %v4201
    %v4203 = vpop.f32.mrf.mxu0
    %4204 = vmatprep.mubr.bf16.mxu0 0
    %4205 = vmatmul.mubr.bf16.gmra.mxu0 %v4109
    %v4206 = vpop.f32.mrf.mxu0
    %v4207 = vadd.f32 0.0, %v4206
    %v4208 = vpop.f32.mrf.mxu0
    %v4209 = vpop.f32.mrf.mxu0
    %v4210 = vadd.f32 0.0, %v4209
    %v4211 = vpop.f32.mrf.mxu0
    %4212 = vmatprep.mubr.bf16.mxu0 0
    %4213 = vmatmul.mubr.bf16.gmra.mxu0 %v4110
    %v4214 = vpop.f32.mrf.mxu0
    %v4215 = vadd.f32 0.0, %v4214
    %v4216 = vpop.f32.mrf.mxu0
    %v4217 = vpop.f32.mrf.mxu0
    %v4218 = vadd.f32 0.0, %v4217
    %v4219 = vpop.f32.mrf.mxu0
    %4220 = vmatprep.mubr.bf16.mxu0 0
    %4221 = vmatmul.mubr.bf16.gmra.mxu0 %v4111
    %v4222 = vpop.f32.mrf.mxu0
    %v4223 = vadd.f32 0.0, %v4222
    %v4224 = vpop.f32.mrf.mxu0
    %v4225 = vpop.f32.mrf.mxu0
    %v4226 = vadd.f32 0.0, %v4225
    %v4227 = vpop.f32.mrf.mxu0
    %4228 = vmatprep.mubr.bf16.mxu0 0
    %4229 = vmatmul.mubr.bf16.gmra.mxu0 %v4112
    %v4230 = vpop.f32.mrf.mxu0
    %v4231 = vadd.f32 0.0, %v4230
    %v4232 = vpop.f32.mrf.mxu0
    %v4233 = vpop.f32.mrf.mxu0
    %v4234 = vadd.f32 0.0, %v4233
    %v4235 = vpop.f32.mrf.mxu0
    %4236 = vmatprep.mubr.bf16.mxu0 0
    %4237 = vmatmul.mubr.bf16.gmra.mxu0 %v4113
    %v4238 = vpop.f32.mrf.mxu0
    %v4239 = vadd.f32 0.0, %v4238
    %v4240 = vpop.f32.mrf.mxu0
    %v4241 = vpop.f32.mrf.mxu0
    %v4242 = vadd.f32 0.0, %v4241
    %v4243 = vpop.f32.mrf.mxu0
    %4244 = vmatprep.mubr.bf16.mxu0 0
    %4245 = vmatmul.mubr.bf16.gmra.mxu0 %v4114
    %v4246 = vpop.f32.mrf.mxu0
    %v4247 = vadd.f32 0.0, %v4246
    %v4248 = vpop.f32.mrf.mxu0
    %v4249 = vpop.f32.mrf.mxu0
    %v4250 = vadd.f32 0.0, %v4249
    %v4251 = vpop.f32.mrf.mxu0
    %4252 = vmatprep.mubr.bf16.mxu0 0
    %4253 = vmatmul.mubr.bf16.gmra.mxu0 %v4115
    %v4254 = vpop.f32.mrf.mxu0
    %v4255 = vadd.f32 0.0, %v4254
    %v4256 = vpop.f32.mrf.mxu0
    %v4257 = vpop.f32.mrf.mxu0
    %v4258 = vadd.f32 0.0, %v4257
    %v4259 = vpop.f32.mrf.mxu0
    %4260 = vdwg.mxu0
    %4261 = vst.msk [vmem:[#allocation8 + $0x80] sm:$0xff] %vm1135, %v4199
    %4262 = vst.msk [vmem:[#allocation8 + $0x88] sm:$0xff] %vm1135, %v4202
    %4263 = vst.msk [vmem:[#allocation8 + $0x90] sm:$0xff] %vm1135, %v4207
    %4264 = vst.msk [vmem:[#allocation8 + $0x98] sm:$0xff] %vm1135, %v4210
    %4265 = vst.msk [vmem:[#allocation8 + $0xa0] sm:$0xff] %vm1135, %v4215
    %4266 = vst.msk [vmem:[#allocation8 + $0xa8] sm:$0xff] %vm1135, %v4218
    %4267 = vst.msk [vmem:[#allocation8 + $0xb0] sm:$0xff] %vm1135, %v4223
    %4268 = vst.msk [vmem:[#allocation8 + $0xb8] sm:$0xff] %vm1135, %v4226
    %4269 = vst.msk [vmem:[#allocation8 + $0xc0] sm:$0xff] %vm1135, %v4231
    %4270 = vst.msk [vmem:[#allocation8 + $0xc8] sm:$0xff] %vm1135, %v4234
    %4271 = vst.msk [vmem:[#allocation8 + $0xd0] sm:$0xff] %vm1135, %v4239
    %4272 = vst.msk [vmem:[#allocation8 + $0xd8] sm:$0xff] %vm1135, %v4242
    %4273 = vst.msk [vmem:[#allocation8 + $0xe0] sm:$0xff] %vm1135, %v4247
    %4274 = vst.msk [vmem:[#allocation8 + $0xe8] sm:$0xff] %vm1135, %v4250
    %4275 = vst.msk [vmem:[#allocation8 + $0xf0] sm:$0xff] %vm1135, %v4255
    %4276 = vst.msk [vmem:[#allocation8 + $0xf8] sm:$0xff] %vm1135, %v4258
    %v4277 = vld [vmem:[#allocation2 + $0xc0] sm:$0xf]
    %v4278 = vld [vmem:[#allocation2 + $0xcc] sm:$0xf]
    %v4279 = vld [vmem:[#allocation2 + $0xd8] sm:$0xf]
    %v4280 = vld [vmem:[#allocation2 + $0xe4] sm:$0xf]
    %v4281 = vld [vmem:[#allocation2 + $0xf0] sm:$0xf]
    %v4282 = vld [vmem:[#allocation2 + $0xfc] sm:$0xf]
    %v4283 = vld [vmem:[#allocation2 + $0x108] sm:$0xf]
    %v4284 = vld [vmem:[#allocation2 + $0x114] sm:$0xf]
    %v4285 = vld [vmem:[#allocation2 + $0x120] sm:$0xf]
    %v4286 = vld [vmem:[#allocation2 + $0x12c] sm:$0xf]
    %v4287 = vld [vmem:[#allocation2 + $0x138] sm:$0xf]
    %v4288 = vld [vmem:[#allocation2 + $0x144] sm:$0xf]
    %v4289 = vld [vmem:[#allocation2 + $0x150] sm:$0xf]
    %v4290 = vld [vmem:[#allocation2 + $0x15c] sm:$0xf]
    %v4291 = vld [vmem:[#allocation2 + $0x168] sm:$0xf]
    %v4292 = vld [vmem:[#allocation2 + $0x174] sm:$0xf]
    %v4293 = vld [vmem:[#allocation2 + $0xc4] sm:$0xf]
    %v4294 = vld [vmem:[#allocation2 + $0xd0] sm:$0xf]
    %v4295 = vld [vmem:[#allocation2 + $0xdc] sm:$0xf]
    %v4296 = vld [vmem:[#allocation2 + $0xe8] sm:$0xf]
    %v4297 = vld [vmem:[#allocation2 + $0xf4] sm:$0xf]
    %v4298 = vld [vmem:[#allocation2 + $0x100] sm:$0xf]
    %v4299 = vld [vmem:[#allocation2 + $0x10c] sm:$0xf]
    %v4300 = vld [vmem:[#allocation2 + $0x118] sm:$0xf]
    %v4301 = vld [vmem:[#allocation2 + $0x124] sm:$0xf]
    %v4302 = vld [vmem:[#allocation2 + $0x130] sm:$0xf]
    %v4303 = vld [vmem:[#allocation2 + $0x13c] sm:$0xf]
    %v4304 = vld [vmem:[#allocation2 + $0x148] sm:$0xf]
    %v4305 = vld [vmem:[#allocation2 + $0x154] sm:$0xf]
    %v4306 = vld [vmem:[#allocation2 + $0x160] sm:$0xf]
    %v4307 = vld [vmem:[#allocation2 + $0x16c] sm:$0xf]
    %v4308 = vld [vmem:[#allocation2 + $0x178] sm:$0xf]
    %v4309 = vld [vmem:[#allocation2 + $0xc8] sm:$0xf]
    %v4310 = vld [vmem:[#allocation2 + $0xd4] sm:$0xf]
    %v4311 = vld [vmem:[#allocation2 + $0xe0] sm:$0xf]
    %v4312 = vld [vmem:[#allocation2 + $0xec] sm:$0xf]
    %v4313 = vld [vmem:[#allocation2 + $0xf8] sm:$0xf]
    %v4314 = vld [vmem:[#allocation2 + $0x104] sm:$0xf]
    %v4315 = vld [vmem:[#allocation2 + $0x110] sm:$0xf]
    %v4316 = vld [vmem:[#allocation2 + $0x11c] sm:$0xf]
    %v4317 = vld [vmem:[#allocation2 + $0x128] sm:$0xf]
    %v4318 = vld [vmem:[#allocation2 + $0x134] sm:$0xf]
    %v4319 = vld [vmem:[#allocation2 + $0x140] sm:$0xf]
    %v4320 = vld [vmem:[#allocation2 + $0x14c] sm:$0xf]
    %v4321 = vld [vmem:[#allocation2 + $0x158] sm:$0xf]
    %v4322 = vld [vmem:[#allocation2 + $0x164] sm:$0xf]
    %v4323 = vld [vmem:[#allocation2 + $0x170] sm:$0xf]
    %v4324 = vld [vmem:[#allocation2 + $0x17c] sm:$0xf]
    %v4341 = vunpack.c.l.b16 %v4277
    %v4342 = vunpack.c.l.b16 %v4278
    %v4343 = vunpack.c.l.b16 %v4279
    %v4344 = vunpack.c.l.b16 %v4280
    %v4345 = vunpack.c.l.b16 %v4281
    %v4346 = vunpack.c.l.b16 %v4282
    %v4347 = vunpack.c.l.b16 %v4283
    %v4348 = vunpack.c.l.b16 %v4284
    %v4349 = vunpack.c.l.b16 %v4285
    %v4350 = vunpack.c.l.b16 %v4286
    %v4351 = vunpack.c.l.b16 %v4287
    %v4352 = vunpack.c.l.b16 %v4288
    %v4353 = vunpack.c.l.b16 %v4289
    %v4354 = vunpack.c.l.b16 %v4290
    %v4355 = vunpack.c.l.b16 %v4291
    %v4356 = vunpack.c.l.b16 %v4292
    %v4357 = vpack.c.b16 %v4342, %v4341
    %v4358 = vpack.c.b16 %v4344, %v4343
    %v4359 = vpack.c.b16 %v4346, %v4345
    %v4360 = vpack.c.b16 %v4348, %v4347
    %v4361 = vpack.c.b16 %v4350, %v4349
    %v4362 = vpack.c.b16 %v4352, %v4351
    %v4363 = vpack.c.b16 %v4354, %v4353
    %v4364 = vpack.c.b16 %v4356, %v4355
    %4365 = vrot.lane.b32.xlu0 %v4357, 96
    %v4366 = vpop.permute.xlu0 %4365
    %4367 = vrot.lane.b32.xlu0 %v4358, 96
    %v4368 = vpop.permute.xlu0 %4367
    %4369 = vrot.lane.b32.xlu0 %v4359, 96
    %v4370 = vpop.permute.xlu0 %4369
    %4371 = vrot.lane.b32.xlu0 %v4360, 96
    %v4372 = vpop.permute.xlu0 %4371
    %4373 = vrot.lane.b32.xlu0 %v4361, 96
    %v4374 = vpop.permute.xlu0 %4373
    %4375 = vrot.lane.b32.xlu0 %v4362, 96
    %v4376 = vpop.permute.xlu0 %4375
    %4377 = vrot.lane.b32.xlu0 %v4363, 96
    %v4378 = vpop.permute.xlu0 %4377
    %4379 = vrot.lane.b32.xlu0 %v4364, 96
    %v4380 = vpop.permute.xlu0 %4379
    %v4397 = vunpack.c.l.b16 %v4293
    %v4398 = vunpack.c.l.b16 %v4294
    %v4399 = vunpack.c.l.b16 %v4295
    %v4400 = vunpack.c.l.b16 %v4296
    %v4401 = vunpack.c.l.b16 %v4297
    %v4402 = vunpack.c.l.b16 %v4298
    %v4403 = vunpack.c.l.b16 %v4299
    %v4404 = vunpack.c.l.b16 %v4300
    %v4405 = vunpack.c.l.b16 %v4301
    %v4406 = vunpack.c.l.b16 %v4302
    %v4407 = vunpack.c.l.b16 %v4303
    %v4408 = vunpack.c.l.b16 %v4304
    %v4409 = vunpack.c.l.b16 %v4305
    %v4410 = vunpack.c.l.b16 %v4306
    %v4411 = vunpack.c.l.b16 %v4307
    %v4412 = vunpack.c.l.b16 %v4308
    %v4413 = vpack.c.b16 %v4398, %v4397
    %v4414 = vpack.c.b16 %v4400, %v4399
    %v4415 = vpack.c.b16 %v4402, %v4401
    %v4416 = vpack.c.b16 %v4404, %v4403
    %v4417 = vpack.c.b16 %v4406, %v4405
    %v4418 = vpack.c.b16 %v4408, %v4407
    %v4419 = vpack.c.b16 %v4410, %v4409
    %v4420 = vpack.c.b16 %v4412, %v4411
    %4421 = vrot.lane.b32.xlu0 %v4413, 96
    %v4422 = vpop.permute.xlu0 %4421
    %4423 = vrot.lane.b32.xlu0 %v4414, 96
    %v4424 = vpop.permute.xlu0 %4423
    %4425 = vrot.lane.b32.xlu0 %v4415, 96
    %v4426 = vpop.permute.xlu0 %4425
    %4427 = vrot.lane.b32.xlu0 %v4416, 96
    %v4428 = vpop.permute.xlu0 %4427
    %4429 = vrot.lane.b32.xlu0 %v4417, 96
    %v4430 = vpop.permute.xlu0 %4429
    %4431 = vrot.lane.b32.xlu0 %v4418, 96
    %v4432 = vpop.permute.xlu0 %4431
    %4433 = vrot.lane.b32.xlu0 %v4419, 96
    %v4434 = vpop.permute.xlu0 %4433
    %4435 = vrot.lane.b32.xlu0 %v4420, 96
    %v4436 = vpop.permute.xlu0 %4435
    %v4438 = vsel %vm1135, %v4366, 0
    %v4441 = vsel %vm1135, %v4368, 0
    %v4444 = vsel %vm1135, %v4370, 0
    %v4447 = vsel %vm1135, %v4372, 0
    %v4450 = vsel %vm1135, %v4374, 0
    %v4453 = vsel %vm1135, %v4376, 0
    %v4456 = vsel %vm1135, %v4378, 0
    %v4459 = vsel %vm1135, %v4380, 0
    %v4462 = vsel %vm1135, %v4422, 0
    %v4465 = vsel %vm1135, %v4424, 0
    %v4468 = vsel %vm1135, %v4426, 0
    %v4471 = vsel %vm1135, %v4428, 0
    %v4474 = vsel %vm1135, %v4430, 0
    %v4477 = vsel %vm1135, %v4432, 0
    %v4480 = vsel %vm1135, %v4434, 0
    %v4483 = vsel %vm1135, %v4436, 0
    %4485 = vmatprep.subr.bf16.mxu0 0
    %4486 = vmatpush1.bf16.xpose.msra.mxu0 %v4483
    %4487 = vmatprep.subr.bf16.mxu0 0
    %4488 = vmatpush1.bf16.xpose.msra.mxu0 %v4480
    %4489 = vmatprep.subr.bf16.mxu0 0
    %4490 = vmatpush1.bf16.xpose.msra.mxu0 %v4477
    %4491 = vmatprep.subr.bf16.mxu0 0
    %4492 = vmatpush1.bf16.xpose.msra.mxu0 %v4474
    %4493 = vmatprep.subr.bf16.mxu0 0
    %4494 = vmatpush1.bf16.xpose.msra.mxu0 %v4471
    %4495 = vmatprep.subr.bf16.mxu0 0
    %4496 = vmatpush1.bf16.xpose.msra.mxu0 %v4468
    %4497 = vmatprep.subr.bf16.mxu0 0
    %4498 = vmatpush1.bf16.xpose.msra.mxu0 %v4465
    %4499 = vmatprep.subr.bf16.mxu0 0
    %4500 = vmatpush1.bf16.xpose.msra.mxu0 %v4462
    %4501 = vmatprep.subr.bf16.mxu0 0
    %4502 = vmatpush2.bf16.xpose.msra.mxu0 0
    %4503 = vmatprep.subr.bf16.mxu0 0
    %4504 = vmatpush2.bf16.xpose.msra.mxu0 0
    %4505 = vmatprep.subr.bf16.mxu0 0
    %4506 = vmatpush2.bf16.xpose.msra.mxu0 0
    %4507 = vmatprep.subr.bf16.mxu0 0
    %4508 = vmatpush2.bf16.xpose.msra.mxu0 0
    %4509 = vmatprep.subr.bf16.mxu0 0
    %4510 = vmatpush2.bf16.xpose.msra.mxu0 0
    %4511 = vmatprep.subr.bf16.mxu0 0
    %4512 = vmatpush2.bf16.xpose.msra.mxu0 0
    %4513 = vmatprep.subr.bf16.mxu0 0
    %4514 = vmatpush2.bf16.xpose.msra.mxu0 0
    %4515 = vmatprep.subr.bf16.mxu0 0
    %4516 = vmatpush2.bf16.xpose.msra.mxu0 0
    %4517 = vmatprep.mubr.bf16.mxu0 0
    %4518 = vmatmul.mubr.bf16.gmra.mxu0 %v4438
    %v4519 = vpop.f32.mrf.mxu0
    %v4520 = vadd.f32 0.0, %v4519
    %v4521 = vpop.f32.mrf.mxu0
    %v4522 = vpop.f32.mrf.mxu0
    %v4523 = vadd.f32 0.0, %v4522
    %v4524 = vpop.f32.mrf.mxu0
    %4525 = vmatprep.mubr.bf16.mxu0 0
    %4526 = vmatmul.mubr.bf16.gmra.mxu0 %v4441
    %v4527 = vpop.f32.mrf.mxu0
    %v4528 = vadd.f32 0.0, %v4527
    %v4529 = vpop.f32.mrf.mxu0
    %v4530 = vpop.f32.mrf.mxu0
    %v4531 = vadd.f32 0.0, %v4530
    %v4532 = vpop.f32.mrf.mxu0
    %4533 = vmatprep.mubr.bf16.mxu0 0
    %4534 = vmatmul.mubr.bf16.gmra.mxu0 %v4444
    %v4535 = vpop.f32.mrf.mxu0
    %v4536 = vadd.f32 0.0, %v4535
    %v4537 = vpop.f32.mrf.mxu0
    %v4538 = vpop.f32.mrf.mxu0
    %v4539 = vadd.f32 0.0, %v4538
    %v4540 = vpop.f32.mrf.mxu0
    %4541 = vmatprep.mubr.bf16.mxu0 0
    %4542 = vmatmul.mubr.bf16.gmra.mxu0 %v4447
    %v4543 = vpop.f32.mrf.mxu0
    %v4544 = vadd.f32 0.0, %v4543
    %v4545 = vpop.f32.mrf.mxu0
    %v4546 = vpop.f32.mrf.mxu0
    %v4547 = vadd.f32 0.0, %v4546
    %v4548 = vpop.f32.mrf.mxu0
    %4549 = vmatprep.mubr.bf16.mxu0 0
    %4550 = vmatmul.mubr.bf16.gmra.mxu0 %v4450
    %v4551 = vpop.f32.mrf.mxu0
    %v4552 = vadd.f32 0.0, %v4551
    %v4553 = vpop.f32.mrf.mxu0
    %v4554 = vpop.f32.mrf.mxu0
    %v4555 = vadd.f32 0.0, %v4554
    %v4556 = vpop.f32.mrf.mxu0
    %4557 = vmatprep.mubr.bf16.mxu0 0
    %4558 = vmatmul.mubr.bf16.gmra.mxu0 %v4453
    %v4559 = vpop.f32.mrf.mxu0
    %v4560 = vadd.f32 0.0, %v4559
    %v4561 = vpop.f32.mrf.mxu0
    %v4562 = vpop.f32.mrf.mxu0
    %v4563 = vadd.f32 0.0, %v4562
    %v4564 = vpop.f32.mrf.mxu0
    %4565 = vmatprep.mubr.bf16.mxu0 0
    %4566 = vmatmul.mubr.bf16.gmra.mxu0 %v4456
    %v4567 = vpop.f32.mrf.mxu0
    %v4568 = vadd.f32 0.0, %v4567
    %v4569 = vpop.f32.mrf.mxu0
    %v4570 = vpop.f32.mrf.mxu0
    %v4571 = vadd.f32 0.0, %v4570
    %v4572 = vpop.f32.mrf.mxu0
    %4573 = vmatprep.mubr.bf16.mxu0 0
    %4574 = vmatmul.mubr.bf16.gmra.mxu0 %v4459
    %v4575 = vpop.f32.mrf.mxu0
    %v4576 = vadd.f32 0.0, %v4575
    %v4577 = vpop.f32.mrf.mxu0
    %v4578 = vpop.f32.mrf.mxu0
    %v4579 = vadd.f32 0.0, %v4578
    %v4580 = vpop.f32.mrf.mxu0
    %4581 = vdwg.mxu0
    %4582 = vmax.xlane.f32.xlu0 %v4520
    %v4583 = vpop.xlane.xlu0 %4582
    %4584 = vmax.xlane.f32.xlu0 %v4523
    %v4585 = vpop.xlane.xlu0 %4584
    %4586 = vmax.xlane.f32.xlu0 %v4528
    %v4587 = vpop.xlane.xlu0 %4586
    %4588 = vmax.xlane.f32.xlu0 %v4531
    %v4589 = vpop.xlane.xlu0 %4588
    %4590 = vmax.xlane.f32.xlu0 %v4536
    %v4591 = vpop.xlane.xlu0 %4590
    %4592 = vmax.xlane.f32.xlu0 %v4539
    %v4593 = vpop.xlane.xlu0 %4592
    %4594 = vmax.xlane.f32.xlu0 %v4544
    %v4595 = vpop.xlane.xlu0 %4594
    %4596 = vmax.xlane.f32.xlu0 %v4547
    %v4597 = vpop.xlane.xlu0 %4596
    %4598 = vmax.xlane.f32.xlu0 %v4552
    %v4599 = vpop.xlane.xlu0 %4598
    %4600 = vmax.xlane.f32.xlu0 %v4555
    %v4601 = vpop.xlane.xlu0 %4600
    %4602 = vmax.xlane.f32.xlu0 %v4560
    %v4603 = vpop.xlane.xlu0 %4602
    %4604 = vmax.xlane.f32.xlu0 %v4563
    %v4605 = vpop.xlane.xlu0 %4604
    %4606 = vmax.xlane.f32.xlu0 %v4568
    %v4607 = vpop.xlane.xlu0 %4606
    %4608 = vmax.xlane.f32.xlu0 %v4571
    %v4609 = vpop.xlane.xlu0 %4608
    %4610 = vmax.xlane.f32.xlu0 %v4576
    %v4611 = vpop.xlane.xlu0 %4610
    %4612 = vmax.xlane.f32.xlu0 %v4579
    %v4613 = vpop.xlane.xlu0 %4612
    %v4614 = vsub.f32 %v4520, %v4583
    %v4615 = vsub.f32 %v4523, %v4585
    %v4616 = vsub.f32 %v4528, %v4587
    %v4617 = vsub.f32 %v4531, %v4589
    %v4618 = vsub.f32 %v4536, %v4591
    %v4619 = vsub.f32 %v4539, %v4593
    %v4620 = vsub.f32 %v4544, %v4595
    %v4621 = vsub.f32 %v4547, %v4597
    %v4622 = vsub.f32 %v4552, %v4599
    %v4623 = vsub.f32 %v4555, %v4601
    %v4624 = vsub.f32 %v4560, %v4603
    %v4625 = vsub.f32 %v4563, %v4605
    %v4626 = vsub.f32 %v4568, %v4607
    %v4627 = vsub.f32 %v4571, %v4609
    %v4628 = vsub.f32 %v4576, %v4611
    %v4629 = vsub.f32 %v4579, %v4613
    %v4630 = vmul.f32 %v4614, 1.442695
    %v4631 = vpow.pop %v4630
    %v4632 = vmul.f32 %v4615, 1.442695
    %v4633 = vpow.pop %v4632
    %v4634 = vmul.f32 %v4616, 1.442695
    %v4635 = vpow.pop %v4634
    %v4636 = vmul.f32 %v4617, 1.442695
    %v4637 = vpow.pop %v4636
    %v4638 = vmul.f32 %v4618, 1.442695
    %v4639 = vpow.pop %v4638
    %v4640 = vmul.f32 %v4619, 1.442695
    %v4641 = vpow.pop %v4640
    %v4642 = vmul.f32 %v4620, 1.442695
    %v4643 = vpow.pop %v4642
    %v4644 = vmul.f32 %v4621, 1.442695
    %v4645 = vpow.pop %v4644
    %v4646 = vmul.f32 %v4622, 1.442695
    %v4647 = vpow.pop %v4646
    %v4648 = vmul.f32 %v4623, 1.442695
    %v4649 = vpow.pop %v4648
    %v4650 = vmul.f32 %v4624, 1.442695
    %v4651 = vpow.pop %v4650
    %v4652 = vmul.f32 %v4625, 1.442695
    %v4653 = vpow.pop %v4652
    %v4654 = vmul.f32 %v4626, 1.442695
    %v4655 = vpow.pop %v4654
    %v4656 = vmul.f32 %v4627, 1.442695
    %v4657 = vpow.pop %v4656
    %v4658 = vmul.f32 %v4628, 1.442695
    %v4659 = vpow.pop %v4658
    %v4660 = vmul.f32 %v4629, 1.442695
    %v4661 = vpow.pop %v4660
    %4662 = vadd.xlane.f32.xlu0 %v4631
    %v4663 = vpop.xlane.xlu0 %4662
    %4664 = vadd.xlane.f32.xlu0 %v4633
    %v4665 = vpop.xlane.xlu0 %4664
    %4666 = vadd.xlane.f32.xlu0 %v4635
    %v4667 = vpop.xlane.xlu0 %4666
    %4668 = vadd.xlane.f32.xlu0 %v4637
    %v4669 = vpop.xlane.xlu0 %4668
    %4670 = vadd.xlane.f32.xlu0 %v4639
    %v4671 = vpop.xlane.xlu0 %4670
    %4672 = vadd.xlane.f32.xlu0 %v4641
    %v4673 = vpop.xlane.xlu0 %4672
    %4674 = vadd.xlane.f32.xlu0 %v4643
    %v4675 = vpop.xlane.xlu0 %4674
    %4676 = vadd.xlane.f32.xlu0 %v4645
    %v4677 = vpop.xlane.xlu0 %4676
    %4678 = vadd.xlane.f32.xlu0 %v4647
    %v4679 = vpop.xlane.xlu0 %4678
    %4680 = vadd.xlane.f32.xlu0 %v4649
    %v4681 = vpop.xlane.xlu0 %4680
    %4682 = vadd.xlane.f32.xlu0 %v4651
    %v4683 = vpop.xlane.xlu0 %4682
    %4684 = vadd.xlane.f32.xlu0 %v4653
    %v4685 = vpop.xlane.xlu0 %4684
    %4686 = vadd.xlane.f32.xlu0 %v4655
    %v4687 = vpop.xlane.xlu0 %4686
    %4688 = vadd.xlane.f32.xlu0 %v4657
    %v4689 = vpop.xlane.xlu0 %4688
    %4690 = vadd.xlane.f32.xlu0 %v4659
    %v4691 = vpop.xlane.xlu0 %4690
    %4692 = vadd.xlane.f32.xlu0 %v4661
    %v4693 = vpop.xlane.xlu0 %4692
    %v4694 = vrcp.pop %v4663
    %v4695 = vrcp.pop %v4665
    %v4696 = vrcp.pop %v4667
    %v4697 = vrcp.pop %v4669
    %v4698 = vrcp.pop %v4671
    %v4699 = vrcp.pop %v4673
    %v4700 = vrcp.pop %v4675
    %v4701 = vrcp.pop %v4677
    %v4702 = vrcp.pop %v4679
    %v4703 = vrcp.pop %v4681
    %v4704 = vrcp.pop %v4683
    %v4705 = vrcp.pop %v4685
    %v4706 = vrcp.pop %v4687
    %v4707 = vrcp.pop %v4689
    %v4708 = vrcp.pop %v4691
    %v4709 = vrcp.pop %v4693
    %v4710 = vmul.f32 %v4631, %v4694
    %v4711 = vmul.f32 %v4633, %v4695
    %v4712 = vmul.f32 %v4635, %v4696
    %v4713 = vmul.f32 %v4637, %v4697
    %v4714 = vmul.f32 %v4639, %v4698
    %v4715 = vmul.f32 %v4641, %v4699
    %v4716 = vmul.f32 %v4643, %v4700
    %v4717 = vmul.f32 %v4645, %v4701
    %v4718 = vmul.f32 %v4647, %v4702
    %v4719 = vmul.f32 %v4649, %v4703
    %v4720 = vmul.f32 %v4651, %v4704
    %v4721 = vmul.f32 %v4653, %v4705
    %v4722 = vmul.f32 %v4655, %v4706
    %v4723 = vmul.f32 %v4657, %v4707
    %v4724 = vmul.f32 %v4659, %v4708
    %v4725 = vmul.f32 %v4661, %v4709
    %v4726 = vpack.c.bf16 %v4711, %v4710
    %v4727 = vpack.c.bf16 %v4713, %v4712
    %v4728 = vpack.c.bf16 %v4715, %v4714
    %v4729 = vpack.c.bf16 %v4717, %v4716
    %v4730 = vpack.c.bf16 %v4719, %v4718
    %v4731 = vpack.c.bf16 %v4721, %v4720
    %v4732 = vpack.c.bf16 %v4723, %v4722
    %v4733 = vpack.c.bf16 %v4725, %v4724
    %v4750 = vunpack.c.l.b16 %v4309
    %v4751 = vunpack.c.l.b16 %v4310
    %v4752 = vunpack.c.l.b16 %v4311
    %v4753 = vunpack.c.l.b16 %v4312
    %v4754 = vunpack.c.l.b16 %v4313
    %v4755 = vunpack.c.l.b16 %v4314
    %v4756 = vunpack.c.l.b16 %v4315
    %v4757 = vunpack.c.l.b16 %v4316
    %v4758 = vunpack.c.l.b16 %v4317
    %v4759 = vunpack.c.l.b16 %v4318
    %v4760 = vunpack.c.l.b16 %v4319
    %v4761 = vunpack.c.l.b16 %v4320
    %v4762 = vunpack.c.l.b16 %v4321
    %v4763 = vunpack.c.l.b16 %v4322
    %v4764 = vunpack.c.l.b16 %v4323
    %v4765 = vunpack.c.l.b16 %v4324
    %v4766 = vpack.c.b16 %v4751, %v4750
    %v4767 = vpack.c.b16 %v4753, %v4752
    %v4768 = vpack.c.b16 %v4755, %v4754
    %v4769 = vpack.c.b16 %v4757, %v4756
    %v4770 = vpack.c.b16 %v4759, %v4758
    %v4771 = vpack.c.b16 %v4761, %v4760
    %v4772 = vpack.c.b16 %v4763, %v4762
    %v4773 = vpack.c.b16 %v4765, %v4764
    %4774 = vrot.lane.b32.xlu0 %v4766, 96
    %v4775 = vpop.permute.xlu0 %4774
    %4776 = vrot.lane.b32.xlu0 %v4767, 96
    %v4777 = vpop.permute.xlu0 %4776
    %4778 = vrot.lane.b32.xlu0 %v4768, 96
    %v4779 = vpop.permute.xlu0 %4778
    %4780 = vrot.lane.b32.xlu0 %v4769, 96
    %v4781 = vpop.permute.xlu0 %4780
    %4782 = vrot.lane.b32.xlu0 %v4770, 96
    %v4783 = vpop.permute.xlu0 %4782
    %4784 = vrot.lane.b32.xlu0 %v4771, 96
    %v4785 = vpop.permute.xlu0 %4784
    %4786 = vrot.lane.b32.xlu0 %v4772, 96
    %v4787 = vpop.permute.xlu0 %4786
    %4788 = vrot.lane.b32.xlu0 %v4773, 96
    %v4789 = vpop.permute.xlu0 %4788
    %4798 = vmatprep.subr.bf16.mxu0 0
    %4799 = vmatpush1.bf16.msra.mxu0 %v4789
    %4800 = vmatprep.subr.bf16.mxu0 0
    %4801 = vmatpush1.bf16.msra.mxu0 %v4787
    %4802 = vmatprep.subr.bf16.mxu0 0
    %4803 = vmatpush1.bf16.msra.mxu0 %v4785
    %4804 = vmatprep.subr.bf16.mxu0 0
    %4805 = vmatpush1.bf16.msra.mxu0 %v4783
    %4806 = vmatprep.subr.bf16.mxu0 0
    %4807 = vmatpush1.bf16.msra.mxu0 %v4781
    %4808 = vmatprep.subr.bf16.mxu0 0
    %4809 = vmatpush1.bf16.msra.mxu0 %v4779
    %4810 = vmatprep.subr.bf16.mxu0 0
    %4811 = vmatpush1.bf16.msra.mxu0 %v4777
    %4812 = vmatprep.subr.bf16.mxu0 0
    %4813 = vmatpush1.bf16.msra.mxu0 %v4775
    %4814 = vmatprep.subr.bf16.mxu0 0
    %4815 = vmatpush2.bf16.msra.mxu0 0
    %4816 = vmatprep.subr.bf16.mxu0 0
    %4817 = vmatpush2.bf16.msra.mxu0 0
    %4818 = vmatprep.subr.bf16.mxu0 0
    %4819 = vmatpush2.bf16.msra.mxu0 0
    %4820 = vmatprep.subr.bf16.mxu0 0
    %4821 = vmatpush2.bf16.msra.mxu0 0
    %4822 = vmatprep.subr.bf16.mxu0 0
    %4823 = vmatpush2.bf16.msra.mxu0 0
    %4824 = vmatprep.subr.bf16.mxu0 0
    %4825 = vmatpush2.bf16.msra.mxu0 0
    %4826 = vmatprep.subr.bf16.mxu0 0
    %4827 = vmatpush2.bf16.msra.mxu0 0
    %4828 = vmatprep.subr.bf16.mxu0 0
    %4829 = vmatpush2.bf16.msra.mxu0 0
    %4830 = vmatprep.mubr.bf16.mxu0 0
    %4831 = vmatmul.mubr.bf16.gmra.mxu0 %v4726
    %v4832 = vpop.f32.mrf.mxu0
    %v4833 = vadd.f32 0.0, %v4832
    %v4834 = vpop.f32.mrf.mxu0
    %v4835 = vpop.f32.mrf.mxu0
    %v4836 = vadd.f32 0.0, %v4835
    %v4837 = vpop.f32.mrf.mxu0
    %4838 = vmatprep.mubr.bf16.mxu0 0
    %4839 = vmatmul.mubr.bf16.gmra.mxu0 %v4727
    %v4840 = vpop.f32.mrf.mxu0
    %v4841 = vadd.f32 0.0, %v4840
    %v4842 = vpop.f32.mrf.mxu0
    %v4843 = vpop.f32.mrf.mxu0
    %v4844 = vadd.f32 0.0, %v4843
    %v4845 = vpop.f32.mrf.mxu0
    %4846 = vmatprep.mubr.bf16.mxu0 0
    %4847 = vmatmul.mubr.bf16.gmra.mxu0 %v4728
    %v4848 = vpop.f32.mrf.mxu0
    %v4849 = vadd.f32 0.0, %v4848
    %v4850 = vpop.f32.mrf.mxu0
    %v4851 = vpop.f32.mrf.mxu0
    %v4852 = vadd.f32 0.0, %v4851
    %v4853 = vpop.f32.mrf.mxu0
    %4854 = vmatprep.mubr.bf16.mxu0 0
    %4855 = vmatmul.mubr.bf16.gmra.mxu0 %v4729
    %v4856 = vpop.f32.mrf.mxu0
    %v4857 = vadd.f32 0.0, %v4856
    %v4858 = vpop.f32.mrf.mxu0
    %v4859 = vpop.f32.mrf.mxu0
    %v4860 = vadd.f32 0.0, %v4859
    %v4861 = vpop.f32.mrf.mxu0
    %4862 = vmatprep.mubr.bf16.mxu0 0
    %4863 = vmatmul.mubr.bf16.gmra.mxu0 %v4730
    %v4864 = vpop.f32.mrf.mxu0
    %v4865 = vadd.f32 0.0, %v4864
    %v4866 = vpop.f32.mrf.mxu0
    %v4867 = vpop.f32.mrf.mxu0
    %v4868 = vadd.f32 0.0, %v4867
    %v4869 = vpop.f32.mrf.mxu0
    %4870 = vmatprep.mubr.bf16.mxu0 0
    %4871 = vmatmul.mubr.bf16.gmra.mxu0 %v4731
    %v4872 = vpop.f32.mrf.mxu0
    %v4873 = vadd.f32 0.0, %v4872
    %v4874 = vpop.f32.mrf.mxu0
    %v4875 = vpop.f32.mrf.mxu0
    %v4876 = vadd.f32 0.0, %v4875
    %v4877 = vpop.f32.mrf.mxu0
    %4878 = vmatprep.mubr.bf16.mxu0 0
    %4879 = vmatmul.mubr.bf16.gmra.mxu0 %v4732
    %v4880 = vpop.f32.mrf.mxu0
    %v4881 = vadd.f32 0.0, %v4880
    %v4882 = vpop.f32.mrf.mxu0
    %v4883 = vpop.f32.mrf.mxu0
    %v4884 = vadd.f32 0.0, %v4883
    %v4885 = vpop.f32.mrf.mxu0
    %4886 = vmatprep.mubr.bf16.mxu0 0
    %4887 = vmatmul.mubr.bf16.gmra.mxu0 %v4733
    %v4888 = vpop.f32.mrf.mxu0
    %v4889 = vadd.f32 0.0, %v4888
    %v4890 = vpop.f32.mrf.mxu0
    %v4891 = vpop.f32.mrf.mxu0
    %v4892 = vadd.f32 0.0, %v4891
    %v4893 = vpop.f32.mrf.mxu0
    %4894 = vdwg.mxu0
    %4911 = vrot.lane.b32.xlu0 %v4833, 32
    %v4912 = vpop.permute.xlu0 %4911
    %4913 = vrot.lane.b32.xlu0 %v4836, 32
    %v4914 = vpop.permute.xlu0 %4913
    %4915 = vrot.lane.b32.xlu0 %v4841, 32
    %v4916 = vpop.permute.xlu0 %4915
    %4917 = vrot.lane.b32.xlu0 %v4844, 32
    %v4918 = vpop.permute.xlu0 %4917
    %4919 = vrot.lane.b32.xlu0 %v4849, 32
    %v4920 = vpop.permute.xlu0 %4919
    %4921 = vrot.lane.b32.xlu0 %v4852, 32
    %v4922 = vpop.permute.xlu0 %4921
    %4923 = vrot.lane.b32.xlu0 %v4857, 32
    %v4924 = vpop.permute.xlu0 %4923
    %4925 = vrot.lane.b32.xlu0 %v4860, 32
    %v4926 = vpop.permute.xlu0 %4925
    %4927 = vrot.lane.b32.xlu0 %v4865, 32
    %v4928 = vpop.permute.xlu0 %4927
    %4929 = vrot.lane.b32.xlu0 %v4868, 32
    %v4930 = vpop.permute.xlu0 %4929
    %4931 = vrot.lane.b32.xlu0 %v4873, 32
    %v4932 = vpop.permute.xlu0 %4931
    %4933 = vrot.lane.b32.xlu0 %v4876, 32
    %v4934 = vpop.permute.xlu0 %4933
    %4935 = vrot.lane.b32.xlu0 %v4881, 32
    %v4936 = vpop.permute.xlu0 %4935
    %4937 = vrot.lane.b32.xlu0 %v4884, 32
    %v4938 = vpop.permute.xlu0 %4937
    %4939 = vrot.lane.b32.xlu0 %v4889, 32
    %v4940 = vpop.permute.xlu0 %4939
    %4941 = vrot.lane.b32.xlu0 %v4892, 32
    %v4942 = vpop.permute.xlu0 %4941
    %4959 = vst.msk [vmem:[#allocation8 + $0x80] sm:$0xff] %vm2276, %v4912
    %4960 = vst.msk [vmem:[#allocation8 + $0x88] sm:$0xff] %vm2276, %v4914
    %4961 = vst.msk [vmem:[#allocation8 + $0x90] sm:$0xff] %vm2276, %v4916
    %4962 = vst.msk [vmem:[#allocation8 + $0x98] sm:$0xff] %vm2276, %v4918
    %4963 = vst.msk [vmem:[#allocation8 + $0xa0] sm:$0xff] %vm2276, %v4920
    %4964 = vst.msk [vmem:[#allocation8 + $0xa8] sm:$0xff] %vm2276, %v4922
    %4965 = vst.msk [vmem:[#allocation8 + $0xb0] sm:$0xff] %vm2276, %v4924
    %4966 = vst.msk [vmem:[#allocation8 + $0xb8] sm:$0xff] %vm2276, %v4926
    %4967 = vst.msk [vmem:[#allocation8 + $0xc0] sm:$0xff] %vm2276, %v4928
    %4968 = vst.msk [vmem:[#allocation8 + $0xc8] sm:$0xff] %vm2276, %v4930
    %4969 = vst.msk [vmem:[#allocation8 + $0xd0] sm:$0xff] %vm2276, %v4932
    %4970 = vst.msk [vmem:[#allocation8 + $0xd8] sm:$0xff] %vm2276, %v4934
    %4971 = vst.msk [vmem:[#allocation8 + $0xe0] sm:$0xff] %vm2276, %v4936
    %4972 = vst.msk [vmem:[#allocation8 + $0xe8] sm:$0xff] %vm2276, %v4938
    %4973 = vst.msk [vmem:[#allocation8 + $0xf0] sm:$0xff] %vm2276, %v4940
    %4974 = vst.msk [vmem:[#allocation8 + $0xf8] sm:$0xff] %vm2276, %v4942
    %v4975 = vld [vmem:[#allocation2 + $0xc0] sm:$0xf]
    %v4976 = vld [vmem:[#allocation2 + $0xcc] sm:$0xf]
    %v4977 = vld [vmem:[#allocation2 + $0xd8] sm:$0xf]
    %v4978 = vld [vmem:[#allocation2 + $0xe4] sm:$0xf]
    %v4979 = vld [vmem:[#allocation2 + $0xf0] sm:$0xf]
    %v4980 = vld [vmem:[#allocation2 + $0xfc] sm:$0xf]
    %v4981 = vld [vmem:[#allocation2 + $0x108] sm:$0xf]
    %v4982 = vld [vmem:[#allocation2 + $0x114] sm:$0xf]
    %v4983 = vld [vmem:[#allocation2 + $0x120] sm:$0xf]
    %v4984 = vld [vmem:[#allocation2 + $0x12c] sm:$0xf]
    %v4985 = vld [vmem:[#allocation2 + $0x138] sm:$0xf]
    %v4986 = vld [vmem:[#allocation2 + $0x144] sm:$0xf]
    %v4987 = vld [vmem:[#allocation2 + $0x150] sm:$0xf]
    %v4988 = vld [vmem:[#allocation2 + $0x15c] sm:$0xf]
    %v4989 = vld [vmem:[#allocation2 + $0x168] sm:$0xf]
    %v4990 = vld [vmem:[#allocation2 + $0x174] sm:$0xf]
    %v4991 = vld [vmem:[#allocation2 + $0xc4] sm:$0xf]
    %v4992 = vld [vmem:[#allocation2 + $0xd0] sm:$0xf]
    %v4993 = vld [vmem:[#allocation2 + $0xdc] sm:$0xf]
    %v4994 = vld [vmem:[#allocation2 + $0xe8] sm:$0xf]
    %v4995 = vld [vmem:[#allocation2 + $0xf4] sm:$0xf]
    %v4996 = vld [vmem:[#allocation2 + $0x100] sm:$0xf]
    %v4997 = vld [vmem:[#allocation2 + $0x10c] sm:$0xf]
    %v4998 = vld [vmem:[#allocation2 + $0x118] sm:$0xf]
    %v4999 = vld [vmem:[#allocation2 + $0x124] sm:$0xf]
    %v5000 = vld [vmem:[#allocation2 + $0x130] sm:$0xf]
    %v5001 = vld [vmem:[#allocation2 + $0x13c] sm:$0xf]
    %v5002 = vld [vmem:[#allocation2 + $0x148] sm:$0xf]
    %v5003 = vld [vmem:[#allocation2 + $0x154] sm:$0xf]
    %v5004 = vld [vmem:[#allocation2 + $0x160] sm:$0xf]
    %v5005 = vld [vmem:[#allocation2 + $0x16c] sm:$0xf]
    %v5006 = vld [vmem:[#allocation2 + $0x178] sm:$0xf]
    %v5007 = vld [vmem:[#allocation2 + $0xc8] sm:$0xf]
    %v5008 = vld [vmem:[#allocation2 + $0xd4] sm:$0xf]
    %v5009 = vld [vmem:[#allocation2 + $0xe0] sm:$0xf]
    %v5010 = vld [vmem:[#allocation2 + $0xec] sm:$0xf]
    %v5011 = vld [vmem:[#allocation2 + $0xf8] sm:$0xf]
    %v5012 = vld [vmem:[#allocation2 + $0x104] sm:$0xf]
    %v5013 = vld [vmem:[#allocation2 + $0x110] sm:$0xf]
    %v5014 = vld [vmem:[#allocation2 + $0x11c] sm:$0xf]
    %v5015 = vld [vmem:[#allocation2 + $0x128] sm:$0xf]
    %v5016 = vld [vmem:[#allocation2 + $0x134] sm:$0xf]
    %v5017 = vld [vmem:[#allocation2 + $0x140] sm:$0xf]
    %v5018 = vld [vmem:[#allocation2 + $0x14c] sm:$0xf]
    %v5019 = vld [vmem:[#allocation2 + $0x158] sm:$0xf]
    %v5020 = vld [vmem:[#allocation2 + $0x164] sm:$0xf]
    %v5021 = vld [vmem:[#allocation2 + $0x170] sm:$0xf]
    %v5022 = vld [vmem:[#allocation2 + $0x17c] sm:$0xf]
    %v5039 = vunpack.c.l.b16 %v4975
    %v5040 = vunpack.c.l.b16 %v4976
    %v5041 = vunpack.c.l.b16 %v4977
    %v5042 = vunpack.c.l.b16 %v4978
    %v5043 = vunpack.c.l.b16 %v4979
    %v5044 = vunpack.c.l.b16 %v4980
    %v5045 = vunpack.c.l.b16 %v4981
    %v5046 = vunpack.c.l.b16 %v4982
    %v5047 = vunpack.c.l.b16 %v4983
    %v5048 = vunpack.c.l.b16 %v4984
    %v5049 = vunpack.c.l.b16 %v4985
    %v5050 = vunpack.c.l.b16 %v4986
    %v5051 = vunpack.c.l.b16 %v4987
    %v5052 = vunpack.c.l.b16 %v4988
    %v5053 = vunpack.c.l.b16 %v4989
    %v5054 = vunpack.c.l.b16 %v4990
    %v5055 = vpack.c.b16 %v5040, %v5039
    %v5056 = vpack.c.b16 %v5042, %v5041
    %v5057 = vpack.c.b16 %v5044, %v5043
    %v5058 = vpack.c.b16 %v5046, %v5045
    %v5059 = vpack.c.b16 %v5048, %v5047
    %v5060 = vpack.c.b16 %v5050, %v5049
    %v5061 = vpack.c.b16 %v5052, %v5051
    %v5062 = vpack.c.b16 %v5054, %v5053
    %5063 = vrot.lane.b32.xlu0 %v5055, 64
    %v5064 = vpop.permute.xlu0 %5063
    %5065 = vrot.lane.b32.xlu0 %v5056, 64
    %v5066 = vpop.permute.xlu0 %5065
    %5067 = vrot.lane.b32.xlu0 %v5057, 64
    %v5068 = vpop.permute.xlu0 %5067
    %5069 = vrot.lane.b32.xlu0 %v5058, 64
    %v5070 = vpop.permute.xlu0 %5069
    %5071 = vrot.lane.b32.xlu0 %v5059, 64
    %v5072 = vpop.permute.xlu0 %5071
    %5073 = vrot.lane.b32.xlu0 %v5060, 64
    %v5074 = vpop.permute.xlu0 %5073
    %5075 = vrot.lane.b32.xlu0 %v5061, 64
    %v5076 = vpop.permute.xlu0 %5075
    %5077 = vrot.lane.b32.xlu0 %v5062, 64
    %v5078 = vpop.permute.xlu0 %5077
    %v5095 = vunpack.c.l.b16 %v4991
    %v5096 = vunpack.c.l.b16 %v4992
    %v5097 = vunpack.c.l.b16 %v4993
    %v5098 = vunpack.c.l.b16 %v4994
    %v5099 = vunpack.c.l.b16 %v4995
    %v5100 = vunpack.c.l.b16 %v4996
    %v5101 = vunpack.c.l.b16 %v4997
    %v5102 = vunpack.c.l.b16 %v4998
    %v5103 = vunpack.c.l.b16 %v4999
    %v5104 = vunpack.c.l.b16 %v5000
    %v5105 = vunpack.c.l.b16 %v5001
    %v5106 = vunpack.c.l.b16 %v5002
    %v5107 = vunpack.c.l.b16 %v5003
    %v5108 = vunpack.c.l.b16 %v5004
    %v5109 = vunpack.c.l.b16 %v5005
    %v5110 = vunpack.c.l.b16 %v5006
    %v5111 = vpack.c.b16 %v5096, %v5095
    %v5112 = vpack.c.b16 %v5098, %v5097
    %v5113 = vpack.c.b16 %v5100, %v5099
    %v5114 = vpack.c.b16 %v5102, %v5101
    %v5115 = vpack.c.b16 %v5104, %v5103
    %v5116 = vpack.c.b16 %v5106, %v5105
    %v5117 = vpack.c.b16 %v5108, %v5107
    %v5118 = vpack.c.b16 %v5110, %v5109
    %5119 = vrot.lane.b32.xlu0 %v5111, 64
    %v5120 = vpop.permute.xlu0 %5119
    %5121 = vrot.lane.b32.xlu0 %v5112, 64
    %v5122 = vpop.permute.xlu0 %5121
    %5123 = vrot.lane.b32.xlu0 %v5113, 64
    %v5124 = vpop.permute.xlu0 %5123
    %5125 = vrot.lane.b32.xlu0 %v5114, 64
    %v5126 = vpop.permute.xlu0 %5125
    %5127 = vrot.lane.b32.xlu0 %v5115, 64
    %v5128 = vpop.permute.xlu0 %5127
    %5129 = vrot.lane.b32.xlu0 %v5116, 64
    %v5130 = vpop.permute.xlu0 %5129
    %5131 = vrot.lane.b32.xlu0 %v5117, 64
    %v5132 = vpop.permute.xlu0 %5131
    %5133 = vrot.lane.b32.xlu0 %v5118, 64
    %v5134 = vpop.permute.xlu0 %5133
    %v5136 = vsel %vm1135, %v5064, 0
    %v5139 = vsel %vm1135, %v5066, 0
    %v5142 = vsel %vm1135, %v5068, 0
    %v5145 = vsel %vm1135, %v5070, 0
    %v5148 = vsel %vm1135, %v5072, 0
    %v5151 = vsel %vm1135, %v5074, 0
    %v5154 = vsel %vm1135, %v5076, 0
    %v5157 = vsel %vm1135, %v5078, 0
    %v5160 = vsel %vm1135, %v5120, 0
    %v5163 = vsel %vm1135, %v5122, 0
    %v5166 = vsel %vm1135, %v5124, 0
    %v5169 = vsel %vm1135, %v5126, 0
    %v5172 = vsel %vm1135, %v5128, 0
    %v5175 = vsel %vm1135, %v5130, 0
    %v5178 = vsel %vm1135, %v5132, 0
    %v5181 = vsel %vm1135, %v5134, 0
    %5183 = vmatprep.subr.bf16.mxu0 0
    %5184 = vmatpush1.bf16.xpose.msra.mxu0 %v5181
    %5185 = vmatprep.subr.bf16.mxu0 0
    %5186 = vmatpush1.bf16.xpose.msra.mxu0 %v5178
    %5187 = vmatprep.subr.bf16.mxu0 0
    %5188 = vmatpush1.bf16.xpose.msra.mxu0 %v5175
    %5189 = vmatprep.subr.bf16.mxu0 0
    %5190 = vmatpush1.bf16.xpose.msra.mxu0 %v5172
    %5191 = vmatprep.subr.bf16.mxu0 0
    %5192 = vmatpush1.bf16.xpose.msra.mxu0 %v5169
    %5193 = vmatprep.subr.bf16.mxu0 0
    %5194 = vmatpush1.bf16.xpose.msra.mxu0 %v5166
    %5195 = vmatprep.subr.bf16.mxu0 0
    %5196 = vmatpush1.bf16.xpose.msra.mxu0 %v5163
    %5197 = vmatprep.subr.bf16.mxu0 0
    %5198 = vmatpush1.bf16.xpose.msra.mxu0 %v5160
    %5199 = vmatprep.subr.bf16.mxu0 0
    %5200 = vmatpush2.bf16.xpose.msra.mxu0 0
    %5201 = vmatprep.subr.bf16.mxu0 0
    %5202 = vmatpush2.bf16.xpose.msra.mxu0 0
    %5203 = vmatprep.subr.bf16.mxu0 0
    %5204 = vmatpush2.bf16.xpose.msra.mxu0 0
    %5205 = vmatprep.subr.bf16.mxu0 0
    %5206 = vmatpush2.bf16.xpose.msra.mxu0 0
    %5207 = vmatprep.subr.bf16.mxu0 0
    %5208 = vmatpush2.bf16.xpose.msra.mxu0 0
    %5209 = vmatprep.subr.bf16.mxu0 0
    %5210 = vmatpush2.bf16.xpose.msra.mxu0 0
    %5211 = vmatprep.subr.bf16.mxu0 0
    %5212 = vmatpush2.bf16.xpose.msra.mxu0 0
    %5213 = vmatprep.subr.bf16.mxu0 0
    %5214 = vmatpush2.bf16.xpose.msra.mxu0 0
    %5215 = vmatprep.mubr.bf16.mxu0 0
    %5216 = vmatmul.mubr.bf16.gmra.mxu0 %v5136
    %v5217 = vpop.f32.mrf.mxu0
    %v5218 = vadd.f32 0.0, %v5217
    %v5219 = vpop.f32.mrf.mxu0
    %v5220 = vpop.f32.mrf.mxu0
    %v5221 = vadd.f32 0.0, %v5220
    %v5222 = vpop.f32.mrf.mxu0
    %5223 = vmatprep.mubr.bf16.mxu0 0
    %5224 = vmatmul.mubr.bf16.gmra.mxu0 %v5139
    %v5225 = vpop.f32.mrf.mxu0
    %v5226 = vadd.f32 0.0, %v5225
    %v5227 = vpop.f32.mrf.mxu0
    %v5228 = vpop.f32.mrf.mxu0
    %v5229 = vadd.f32 0.0, %v5228
    %v5230 = vpop.f32.mrf.mxu0
    %5231 = vmatprep.mubr.bf16.mxu0 0
    %5232 = vmatmul.mubr.bf16.gmra.mxu0 %v5142
    %v5233 = vpop.f32.mrf.mxu0
    %v5234 = vadd.f32 0.0, %v5233
    %v5235 = vpop.f32.mrf.mxu0
    %v5236 = vpop.f32.mrf.mxu0
    %v5237 = vadd.f32 0.0, %v5236
    %v5238 = vpop.f32.mrf.mxu0
    %5239 = vmatprep.mubr.bf16.mxu0 0
    %5240 = vmatmul.mubr.bf16.gmra.mxu0 %v5145
    %v5241 = vpop.f32.mrf.mxu0
    %v5242 = vadd.f32 0.0, %v5241
    %v5243 = vpop.f32.mrf.mxu0
    %v5244 = vpop.f32.mrf.mxu0
    %v5245 = vadd.f32 0.0, %v5244
    %v5246 = vpop.f32.mrf.mxu0
    %5247 = vmatprep.mubr.bf16.mxu0 0
    %5248 = vmatmul.mubr.bf16.gmra.mxu0 %v5148
    %v5249 = vpop.f32.mrf.mxu0
    %v5250 = vadd.f32 0.0, %v5249
    %v5251 = vpop.f32.mrf.mxu0
    %v5252 = vpop.f32.mrf.mxu0
    %v5253 = vadd.f32 0.0, %v5252
    %v5254 = vpop.f32.mrf.mxu0
    %5255 = vmatprep.mubr.bf16.mxu0 0
    %5256 = vmatmul.mubr.bf16.gmra.mxu0 %v5151
    %v5257 = vpop.f32.mrf.mxu0
    %v5258 = vadd.f32 0.0, %v5257
    %v5259 = vpop.f32.mrf.mxu0
    %v5260 = vpop.f32.mrf.mxu0
    %v5261 = vadd.f32 0.0, %v5260
    %v5262 = vpop.f32.mrf.mxu0
    %5263 = vmatprep.mubr.bf16.mxu0 0
    %5264 = vmatmul.mubr.bf16.gmra.mxu0 %v5154
    %v5265 = vpop.f32.mrf.mxu0
    %v5266 = vadd.f32 0.0, %v5265
    %v5267 = vpop.f32.mrf.mxu0
    %v5268 = vpop.f32.mrf.mxu0
    %v5269 = vadd.f32 0.0, %v5268
    %v5270 = vpop.f32.mrf.mxu0
    %5271 = vmatprep.mubr.bf16.mxu0 0
    %5272 = vmatmul.mubr.bf16.gmra.mxu0 %v5157
    %v5273 = vpop.f32.mrf.mxu0
    %v5274 = vadd.f32 0.0, %v5273
    %v5275 = vpop.f32.mrf.mxu0
    %v5276 = vpop.f32.mrf.mxu0
    %v5277 = vadd.f32 0.0, %v5276
    %v5278 = vpop.f32.mrf.mxu0
    %5279 = vdwg.mxu0
    %5280 = vmax.xlane.f32.xlu0 %v5218
    %v5281 = vpop.xlane.xlu0 %5280
    %5282 = vmax.xlane.f32.xlu0 %v5221
    %v5283 = vpop.xlane.xlu0 %5282
    %5284 = vmax.xlane.f32.xlu0 %v5226
    %v5285 = vpop.xlane.xlu0 %5284
    %5286 = vmax.xlane.f32.xlu0 %v5229
    %v5287 = vpop.xlane.xlu0 %5286
    %5288 = vmax.xlane.f32.xlu0 %v5234
    %v5289 = vpop.xlane.xlu0 %5288
    %5290 = vmax.xlane.f32.xlu0 %v5237
    %v5291 = vpop.xlane.xlu0 %5290
    %5292 = vmax.xlane.f32.xlu0 %v5242
    %v5293 = vpop.xlane.xlu0 %5292
    %5294 = vmax.xlane.f32.xlu0 %v5245
    %v5295 = vpop.xlane.xlu0 %5294
    %5296 = vmax.xlane.f32.xlu0 %v5250
    %v5297 = vpop.xlane.xlu0 %5296
    %5298 = vmax.xlane.f32.xlu0 %v5253
    %v5299 = vpop.xlane.xlu0 %5298
    %5300 = vmax.xlane.f32.xlu0 %v5258
    %v5301 = vpop.xlane.xlu0 %5300
    %5302 = vmax.xlane.f32.xlu0 %v5261
    %v5303 = vpop.xlane.xlu0 %5302
    %5304 = vmax.xlane.f32.xlu0 %v5266
    %v5305 = vpop.xlane.xlu0 %5304
    %5306 = vmax.xlane.f32.xlu0 %v5269
    %v5307 = vpop.xlane.xlu0 %5306
    %5308 = vmax.xlane.f32.xlu0 %v5274
    %v5309 = vpop.xlane.xlu0 %5308
    %5310 = vmax.xlane.f32.xlu0 %v5277
    %v5311 = vpop.xlane.xlu0 %5310
    %v5312 = vsub.f32 %v5218, %v5281
    %v5313 = vsub.f32 %v5221, %v5283
    %v5314 = vsub.f32 %v5226, %v5285
    %v5315 = vsub.f32 %v5229, %v5287
    %v5316 = vsub.f32 %v5234, %v5289
    %v5317 = vsub.f32 %v5237, %v5291
    %v5318 = vsub.f32 %v5242, %v5293
    %v5319 = vsub.f32 %v5245, %v5295
    %v5320 = vsub.f32 %v5250, %v5297
    %v5321 = vsub.f32 %v5253, %v5299
    %v5322 = vsub.f32 %v5258, %v5301
    %v5323 = vsub.f32 %v5261, %v5303
    %v5324 = vsub.f32 %v5266, %v5305
    %v5325 = vsub.f32 %v5269, %v5307
    %v5326 = vsub.f32 %v5274, %v5309
    %v5327 = vsub.f32 %v5277, %v5311
    %v5328 = vmul.f32 %v5312, 1.442695
    %v5329 = vpow.pop %v5328
    %v5330 = vmul.f32 %v5313, 1.442695
    %v5331 = vpow.pop %v5330
    %v5332 = vmul.f32 %v5314, 1.442695
    %v5333 = vpow.pop %v5332
    %v5334 = vmul.f32 %v5315, 1.442695
    %v5335 = vpow.pop %v5334
    %v5336 = vmul.f32 %v5316, 1.442695
    %v5337 = vpow.pop %v5336
    %v5338 = vmul.f32 %v5317, 1.442695
    %v5339 = vpow.pop %v5338
    %v5340 = vmul.f32 %v5318, 1.442695
    %v5341 = vpow.pop %v5340
    %v5342 = vmul.f32 %v5319, 1.442695
    %v5343 = vpow.pop %v5342
    %v5344 = vmul.f32 %v5320, 1.442695
    %v5345 = vpow.pop %v5344
    %v5346 = vmul.f32 %v5321, 1.442695
    %v5347 = vpow.pop %v5346
    %v5348 = vmul.f32 %v5322, 1.442695
    %v5349 = vpow.pop %v5348
    %v5350 = vmul.f32 %v5323, 1.442695
    %v5351 = vpow.pop %v5350
    %v5352 = vmul.f32 %v5324, 1.442695
    %v5353 = vpow.pop %v5352
    %v5354 = vmul.f32 %v5325, 1.442695
    %v5355 = vpow.pop %v5354
    %v5356 = vmul.f32 %v5326, 1.442695
    %v5357 = vpow.pop %v5356
    %v5358 = vmul.f32 %v5327, 1.442695
    %v5359 = vpow.pop %v5358
    %5360 = vadd.xlane.f32.xlu0 %v5329
    %v5361 = vpop.xlane.xlu0 %5360
    %5362 = vadd.xlane.f32.xlu0 %v5331
    %v5363 = vpop.xlane.xlu0 %5362
    %5364 = vadd.xlane.f32.xlu0 %v5333
    %v5365 = vpop.xlane.xlu0 %5364
    %5366 = vadd.xlane.f32.xlu0 %v5335
    %v5367 = vpop.xlane.xlu0 %5366
    %5368 = vadd.xlane.f32.xlu0 %v5337
    %v5369 = vpop.xlane.xlu0 %5368
    %5370 = vadd.xlane.f32.xlu0 %v5339
    %v5371 = vpop.xlane.xlu0 %5370
    %5372 = vadd.xlane.f32.xlu0 %v5341
    %v5373 = vpop.xlane.xlu0 %5372
    %5374 = vadd.xlane.f32.xlu0 %v5343
    %v5375 = vpop.xlane.xlu0 %5374
    %5376 = vadd.xlane.f32.xlu0 %v5345
    %v5377 = vpop.xlane.xlu0 %5376
    %5378 = vadd.xlane.f32.xlu0 %v5347
    %v5379 = vpop.xlane.xlu0 %5378
    %5380 = vadd.xlane.f32.xlu0 %v5349
    %v5381 = vpop.xlane.xlu0 %5380
    %5382 = vadd.xlane.f32.xlu0 %v5351
    %v5383 = vpop.xlane.xlu0 %5382
    %5384 = vadd.xlane.f32.xlu0 %v5353
    %v5385 = vpop.xlane.xlu0 %5384
    %5386 = vadd.xlane.f32.xlu0 %v5355
    %v5387 = vpop.xlane.xlu0 %5386
    %5388 = vadd.xlane.f32.xlu0 %v5357
    %v5389 = vpop.xlane.xlu0 %5388
    %5390 = vadd.xlane.f32.xlu0 %v5359
    %v5391 = vpop.xlane.xlu0 %5390
    %v5392 = vrcp.pop %v5361
    %v5393 = vrcp.pop %v5363
    %v5394 = vrcp.pop %v5365
    %v5395 = vrcp.pop %v5367
    %v5396 = vrcp.pop %v5369
    %v5397 = vrcp.pop %v5371
    %v5398 = vrcp.pop %v5373
    %v5399 = vrcp.pop %v5375
    %v5400 = vrcp.pop %v5377
    %v5401 = vrcp.pop %v5379
    %v5402 = vrcp.pop %v5381
    %v5403 = vrcp.pop %v5383
    %v5404 = vrcp.pop %v5385
    %v5405 = vrcp.pop %v5387
    %v5406 = vrcp.pop %v5389
    %v5407 = vrcp.pop %v5391
    %v5408 = vmul.f32 %v5329, %v5392
    %v5409 = vmul.f32 %v5331, %v5393
    %v5410 = vmul.f32 %v5333, %v5394
    %v5411 = vmul.f32 %v5335, %v5395
    %v5412 = vmul.f32 %v5337, %v5396
    %v5413 = vmul.f32 %v5339, %v5397
    %v5414 = vmul.f32 %v5341, %v5398
    %v5415 = vmul.f32 %v5343, %v5399
    %v5416 = vmul.f32 %v5345, %v5400
    %v5417 = vmul.f32 %v5347, %v5401
    %v5418 = vmul.f32 %v5349, %v5402
    %v5419 = vmul.f32 %v5351, %v5403
    %v5420 = vmul.f32 %v5353, %v5404
    %v5421 = vmul.f32 %v5355, %v5405
    %v5422 = vmul.f32 %v5357, %v5406
    %v5423 = vmul.f32 %v5359, %v5407
    %v5424 = vpack.c.bf16 %v5409, %v5408
    %v5425 = vpack.c.bf16 %v5411, %v5410
    %v5426 = vpack.c.bf16 %v5413, %v5412
    %v5427 = vpack.c.bf16 %v5415, %v5414
    %v5428 = vpack.c.bf16 %v5417, %v5416
    %v5429 = vpack.c.bf16 %v5419, %v5418
    %v5430 = vpack.c.bf16 %v5421, %v5420
    %v5431 = vpack.c.bf16 %v5423, %v5422
    %v5448 = vunpack.c.l.b16 %v5007
    %v5449 = vunpack.c.l.b16 %v5008
    %v5450 = vunpack.c.l.b16 %v5009
    %v5451 = vunpack.c.l.b16 %v5010
    %v5452 = vunpack.c.l.b16 %v5011
    %v5453 = vunpack.c.l.b16 %v5012
    %v5454 = vunpack.c.l.b16 %v5013
    %v5455 = vunpack.c.l.b16 %v5014
    %v5456 = vunpack.c.l.b16 %v5015
    %v5457 = vunpack.c.l.b16 %v5016
    %v5458 = vunpack.c.l.b16 %v5017
    %v5459 = vunpack.c.l.b16 %v5018
    %v5460 = vunpack.c.l.b16 %v5019
    %v5461 = vunpack.c.l.b16 %v5020
    %v5462 = vunpack.c.l.b16 %v5021
    %v5463 = vunpack.c.l.b16 %v5022
    %v5464 = vpack.c.b16 %v5449, %v5448
    %v5465 = vpack.c.b16 %v5451, %v5450
    %v5466 = vpack.c.b16 %v5453, %v5452
    %v5467 = vpack.c.b16 %v5455, %v5454
    %v5468 = vpack.c.b16 %v5457, %v5456
    %v5469 = vpack.c.b16 %v5459, %v5458
    %v5470 = vpack.c.b16 %v5461, %v5460
    %v5471 = vpack.c.b16 %v5463, %v5462
    %5472 = vrot.lane.b32.xlu0 %v5464, 64
    %v5473 = vpop.permute.xlu0 %5472
    %5474 = vrot.lane.b32.xlu0 %v5465, 64
    %v5475 = vpop.permute.xlu0 %5474
    %5476 = vrot.lane.b32.xlu0 %v5466, 64
    %v5477 = vpop.permute.xlu0 %5476
    %5478 = vrot.lane.b32.xlu0 %v5467, 64
    %v5479 = vpop.permute.xlu0 %5478
    %5480 = vrot.lane.b32.xlu0 %v5468, 64
    %v5481 = vpop.permute.xlu0 %5480
    %5482 = vrot.lane.b32.xlu0 %v5469, 64
    %v5483 = vpop.permute.xlu0 %5482
    %5484 = vrot.lane.b32.xlu0 %v5470, 64
    %v5485 = vpop.permute.xlu0 %5484
    %5486 = vrot.lane.b32.xlu0 %v5471, 64
    %v5487 = vpop.permute.xlu0 %5486
    %5496 = vmatprep.subr.bf16.mxu0 0
    %5497 = vmatpush1.bf16.msra.mxu0 %v5487
    %5498 = vmatprep.subr.bf16.mxu0 0
    %5499 = vmatpush1.bf16.msra.mxu0 %v5485
    %5500 = vmatprep.subr.bf16.mxu0 0
    %5501 = vmatpush1.bf16.msra.mxu0 %v5483
    %5502 = vmatprep.subr.bf16.mxu0 0
    %5503 = vmatpush1.bf16.msra.mxu0 %v5481
    %5504 = vmatprep.subr.bf16.mxu0 0
    %5505 = vmatpush1.bf16.msra.mxu0 %v5479
    %5506 = vmatprep.subr.bf16.mxu0 0
    %5507 = vmatpush1.bf16.msra.mxu0 %v5477
    %5508 = vmatprep.subr.bf16.mxu0 0
    %5509 = vmatpush1.bf16.msra.mxu0 %v5475
    %5510 = vmatprep.subr.bf16.mxu0 0
    %5511 = vmatpush1.bf16.msra.mxu0 %v5473
    %5512 = vmatprep.subr.bf16.mxu0 0
    %5513 = vmatpush2.bf16.msra.mxu0 0
    %5514 = vmatprep.subr.bf16.mxu0 0
    %5515 = vmatpush2.bf16.msra.mxu0 0
    %5516 = vmatprep.subr.bf16.mxu0 0
    %5517 = vmatpush2.bf16.msra.mxu0 0
    %5518 = vmatprep.subr.bf16.mxu0 0
    %5519 = vmatpush2.bf16.msra.mxu0 0
    %5520 = vmatprep.subr.bf16.mxu0 0
    %5521 = vmatpush2.bf16.msra.mxu0 0
    %5522 = vmatprep.subr.bf16.mxu0 0
    %5523 = vmatpush2.bf16.msra.mxu0 0
    %5524 = vmatprep.subr.bf16.mxu0 0
    %5525 = vmatpush2.bf16.msra.mxu0 0
    %5526 = vmatprep.subr.bf16.mxu0 0
    %5527 = vmatpush2.bf16.msra.mxu0 0
    %5528 = vmatprep.mubr.bf16.mxu0 0
    %5529 = vmatmul.mubr.bf16.gmra.mxu0 %v5424
    %v5530 = vpop.f32.mrf.mxu0
    %v5531 = vadd.f32 0.0, %v5530
    %v5532 = vpop.f32.mrf.mxu0
    %v5533 = vpop.f32.mrf.mxu0
    %v5534 = vadd.f32 0.0, %v5533
    %v5535 = vpop.f32.mrf.mxu0
    %5536 = vmatprep.mubr.bf16.mxu0 0
    %5537 = vmatmul.mubr.bf16.gmra.mxu0 %v5425
    %v5538 = vpop.f32.mrf.mxu0
    %v5539 = vadd.f32 0.0, %v5538
    %v5540 = vpop.f32.mrf.mxu0
    %v5541 = vpop.f32.mrf.mxu0
    %v5542 = vadd.f32 0.0, %v5541
    %v5543 = vpop.f32.mrf.mxu0
    %5544 = vmatprep.mubr.bf16.mxu0 0
    %5545 = vmatmul.mubr.bf16.gmra.mxu0 %v5426
    %v5546 = vpop.f32.mrf.mxu0
    %v5547 = vadd.f32 0.0, %v5546
    %v5548 = vpop.f32.mrf.mxu0
    %v5549 = vpop.f32.mrf.mxu0
    %v5550 = vadd.f32 0.0, %v5549
    %v5551 = vpop.f32.mrf.mxu0
    %5552 = vmatprep.mubr.bf16.mxu0 0
    %5553 = vmatmul.mubr.bf16.gmra.mxu0 %v5427
    %v5554 = vpop.f32.mrf.mxu0
    %v5555 = vadd.f32 0.0, %v5554
    %v5556 = vpop.f32.mrf.mxu0
    %v5557 = vpop.f32.mrf.mxu0
    %v5558 = vadd.f32 0.0, %v5557
    %v5559 = vpop.f32.mrf.mxu0
    %5560 = vmatprep.mubr.bf16.mxu0 0
    %5561 = vmatmul.mubr.bf16.gmra.mxu0 %v5428
    %v5562 = vpop.f32.mrf.mxu0
    %v5563 = vadd.f32 0.0, %v5562
    %v5564 = vpop.f32.mrf.mxu0
    %v5565 = vpop.f32.mrf.mxu0
    %v5566 = vadd.f32 0.0, %v5565
    %v5567 = vpop.f32.mrf.mxu0
    %5568 = vmatprep.mubr.bf16.mxu0 0
    %5569 = vmatmul.mubr.bf16.gmra.mxu0 %v5429
    %v5570 = vpop.f32.mrf.mxu0
    %v5571 = vadd.f32 0.0, %v5570
    %v5572 = vpop.f32.mrf.mxu0
    %v5573 = vpop.f32.mrf.mxu0
    %v5574 = vadd.f32 0.0, %v5573
    %v5575 = vpop.f32.mrf.mxu0
    %5576 = vmatprep.mubr.bf16.mxu0 0
    %5577 = vmatmul.mubr.bf16.gmra.mxu0 %v5430
    %v5578 = vpop.f32.mrf.mxu0
    %v5579 = vadd.f32 0.0, %v5578
    %v5580 = vpop.f32.mrf.mxu0
    %v5581 = vpop.f32.mrf.mxu0
    %v5582 = vadd.f32 0.0, %v5581
    %v5583 = vpop.f32.mrf.mxu0
    %5584 = vmatprep.mubr.bf16.mxu0 0
    %5585 = vmatmul.mubr.bf16.gmra.mxu0 %v5431
    %v5586 = vpop.f32.mrf.mxu0
    %v5587 = vadd.f32 0.0, %v5586
    %v5588 = vpop.f32.mrf.mxu0
    %v5589 = vpop.f32.mrf.mxu0
    %v5590 = vadd.f32 0.0, %v5589
    %v5591 = vpop.f32.mrf.mxu0
    %5592 = vdwg.mxu0
    %5609 = vrot.lane.b32.xlu0 %v5531, 64
    %v5610 = vpop.permute.xlu0 %5609
    %5611 = vrot.lane.b32.xlu0 %v5534, 64
    %v5612 = vpop.permute.xlu0 %5611
    %5613 = vrot.lane.b32.xlu0 %v5539, 64
    %v5614 = vpop.permute.xlu0 %5613
    %5615 = vrot.lane.b32.xlu0 %v5542, 64
    %v5616 = vpop.permute.xlu0 %5615
    %5617 = vrot.lane.b32.xlu0 %v5547, 64
    %v5618 = vpop.permute.xlu0 %5617
    %5619 = vrot.lane.b32.xlu0 %v5550, 64
    %v5620 = vpop.permute.xlu0 %5619
    %5621 = vrot.lane.b32.xlu0 %v5555, 64
    %v5622 = vpop.permute.xlu0 %5621
    %5623 = vrot.lane.b32.xlu0 %v5558, 64
    %v5624 = vpop.permute.xlu0 %5623
    %5625 = vrot.lane.b32.xlu0 %v5563, 64
    %v5626 = vpop.permute.xlu0 %5625
    %5627 = vrot.lane.b32.xlu0 %v5566, 64
    %v5628 = vpop.permute.xlu0 %5627
    %5629 = vrot.lane.b32.xlu0 %v5571, 64
    %v5630 = vpop.permute.xlu0 %5629
    %5631 = vrot.lane.b32.xlu0 %v5574, 64
    %v5632 = vpop.permute.xlu0 %5631
    %5633 = vrot.lane.b32.xlu0 %v5579, 64
    %v5634 = vpop.permute.xlu0 %5633
    %5635 = vrot.lane.b32.xlu0 %v5582, 64
    %v5636 = vpop.permute.xlu0 %5635
    %5637 = vrot.lane.b32.xlu0 %v5587, 64
    %v5638 = vpop.permute.xlu0 %5637
    %5639 = vrot.lane.b32.xlu0 %v5590, 64
    %v5640 = vpop.permute.xlu0 %5639
    %5657 = vst.msk [vmem:[#allocation8 + $0x80] sm:$0xff] %vm2975, %v5610
    %5658 = vst.msk [vmem:[#allocation8 + $0x88] sm:$0xff] %vm2975, %v5612
    %5659 = vst.msk [vmem:[#allocation8 + $0x90] sm:$0xff] %vm2975, %v5614
    %5660 = vst.msk [vmem:[#allocation8 + $0x98] sm:$0xff] %vm2975, %v5616
    %5661 = vst.msk [vmem:[#allocation8 + $0xa0] sm:$0xff] %vm2975, %v5618
    %5662 = vst.msk [vmem:[#allocation8 + $0xa8] sm:$0xff] %vm2975, %v5620
    %5663 = vst.msk [vmem:[#allocation8 + $0xb0] sm:$0xff] %vm2975, %v5622
    %5664 = vst.msk [vmem:[#allocation8 + $0xb8] sm:$0xff] %vm2975, %v5624
    %5665 = vst.msk [vmem:[#allocation8 + $0xc0] sm:$0xff] %vm2975, %v5626
    %5666 = vst.msk [vmem:[#allocation8 + $0xc8] sm:$0xff] %vm2975, %v5628
    %5667 = vst.msk [vmem:[#allocation8 + $0xd0] sm:$0xff] %vm2975, %v5630
    %5668 = vst.msk [vmem:[#allocation8 + $0xd8] sm:$0xff] %vm2975, %v5632
    %5669 = vst.msk [vmem:[#allocation8 + $0xe0] sm:$0xff] %vm2975, %v5634
    %5670 = vst.msk [vmem:[#allocation8 + $0xe8] sm:$0xff] %vm2975, %v5636
    %5671 = vst.msk [vmem:[#allocation8 + $0xf0] sm:$0xff] %vm2975, %v5638
    %5672 = vst.msk [vmem:[#allocation8 + $0xf8] sm:$0xff] %vm2975, %v5640
    %v5673 = vld [vmem:[#allocation2 + $0xc0] sm:$0xf]
    %v5674 = vld [vmem:[#allocation2 + $0xcc] sm:$0xf]
    %v5675 = vld [vmem:[#allocation2 + $0xd8] sm:$0xf]
    %v5676 = vld [vmem:[#allocation2 + $0xe4] sm:$0xf]
    %v5677 = vld [vmem:[#allocation2 + $0xf0] sm:$0xf]
    %v5678 = vld [vmem:[#allocation2 + $0xfc] sm:$0xf]
    %v5679 = vld [vmem:[#allocation2 + $0x108] sm:$0xf]
    %v5680 = vld [vmem:[#allocation2 + $0x114] sm:$0xf]
    %v5681 = vld [vmem:[#allocation2 + $0x120] sm:$0xf]
    %v5682 = vld [vmem:[#allocation2 + $0x12c] sm:$0xf]
    %v5683 = vld [vmem:[#allocation2 + $0x138] sm:$0xf]
    %v5684 = vld [vmem:[#allocation2 + $0x144] sm:$0xf]
    %v5685 = vld [vmem:[#allocation2 + $0x150] sm:$0xf]
    %v5686 = vld [vmem:[#allocation2 + $0x15c] sm:$0xf]
    %v5687 = vld [vmem:[#allocation2 + $0x168] sm:$0xf]
    %v5688 = vld [vmem:[#allocation2 + $0x174] sm:$0xf]
    %v5689 = vld [vmem:[#allocation2 + $0xc4] sm:$0xf]
    %v5690 = vld [vmem:[#allocation2 + $0xd0] sm:$0xf]
    %v5691 = vld [vmem:[#allocation2 + $0xdc] sm:$0xf]
    %v5692 = vld [vmem:[#allocation2 + $0xe8] sm:$0xf]
    %v5693 = vld [vmem:[#allocation2 + $0xf4] sm:$0xf]
    %v5694 = vld [vmem:[#allocation2 + $0x100] sm:$0xf]
    %v5695 = vld [vmem:[#allocation2 + $0x10c] sm:$0xf]
    %v5696 = vld [vmem:[#allocation2 + $0x118] sm:$0xf]
    %v5697 = vld [vmem:[#allocation2 + $0x124] sm:$0xf]
    %v5698 = vld [vmem:[#allocation2 + $0x130] sm:$0xf]
    %v5699 = vld [vmem:[#allocation2 + $0x13c] sm:$0xf]
    %v5700 = vld [vmem:[#allocation2 + $0x148] sm:$0xf]
    %v5701 = vld [vmem:[#allocation2 + $0x154] sm:$0xf]
    %v5702 = vld [vmem:[#allocation2 + $0x160] sm:$0xf]
    %v5703 = vld [vmem:[#allocation2 + $0x16c] sm:$0xf]
    %v5704 = vld [vmem:[#allocation2 + $0x178] sm:$0xf]
    %v5705 = vld [vmem:[#allocation2 + $0xc8] sm:$0xf]
    %v5706 = vld [vmem:[#allocation2 + $0xd4] sm:$0xf]
    %v5707 = vld [vmem:[#allocation2 + $0xe0] sm:$0xf]
    %v5708 = vld [vmem:[#allocation2 + $0xec] sm:$0xf]
    %v5709 = vld [vmem:[#allocation2 + $0xf8] sm:$0xf]
    %v5710 = vld [vmem:[#allocation2 + $0x104] sm:$0xf]
    %v5711 = vld [vmem:[#allocation2 + $0x110] sm:$0xf]
    %v5712 = vld [vmem:[#allocation2 + $0x11c] sm:$0xf]
    %v5713 = vld [vmem:[#allocation2 + $0x128] sm:$0xf]
    %v5714 = vld [vmem:[#allocation2 + $0x134] sm:$0xf]
    %v5715 = vld [vmem:[#allocation2 + $0x140] sm:$0xf]
    %v5716 = vld [vmem:[#allocation2 + $0x14c] sm:$0xf]
    %v5717 = vld [vmem:[#allocation2 + $0x158] sm:$0xf]
    %v5718 = vld [vmem:[#allocation2 + $0x164] sm:$0xf]
    %v5719 = vld [vmem:[#allocation2 + $0x170] sm:$0xf]
    %v5720 = vld [vmem:[#allocation2 + $0x17c] sm:$0xf]
    %v5737 = vunpack.c.l.b16 %v5673
    %v5738 = vunpack.c.l.b16 %v5674
    %v5739 = vunpack.c.l.b16 %v5675
    %v5740 = vunpack.c.l.b16 %v5676
    %v5741 = vunpack.c.l.b16 %v5677
    %v5742 = vunpack.c.l.b16 %v5678
    %v5743 = vunpack.c.l.b16 %v5679
    %v5744 = vunpack.c.l.b16 %v5680
    %v5745 = vunpack.c.l.b16 %v5681
    %v5746 = vunpack.c.l.b16 %v5682
    %v5747 = vunpack.c.l.b16 %v5683
    %v5748 = vunpack.c.l.b16 %v5684
    %v5749 = vunpack.c.l.b16 %v5685
    %v5750 = vunpack.c.l.b16 %v5686
    %v5751 = vunpack.c.l.b16 %v5687
    %v5752 = vunpack.c.l.b16 %v5688
    %v5753 = vpack.c.b16 %v5738, %v5737
    %v5754 = vpack.c.b16 %v5740, %v5739
    %v5755 = vpack.c.b16 %v5742, %v5741
    %v5756 = vpack.c.b16 %v5744, %v5743
    %v5757 = vpack.c.b16 %v5746, %v5745
    %v5758 = vpack.c.b16 %v5748, %v5747
    %v5759 = vpack.c.b16 %v5750, %v5749
    %v5760 = vpack.c.b16 %v5752, %v5751
    %5761 = vrot.lane.b32.xlu0 %v5753, 32
    %v5762 = vpop.permute.xlu0 %5761
    %5763 = vrot.lane.b32.xlu0 %v5754, 32
    %v5764 = vpop.permute.xlu0 %5763
    %5765 = vrot.lane.b32.xlu0 %v5755, 32
    %v5766 = vpop.permute.xlu0 %5765
    %5767 = vrot.lane.b32.xlu0 %v5756, 32
    %v5768 = vpop.permute.xlu0 %5767
    %5769 = vrot.lane.b32.xlu0 %v5757, 32
    %v5770 = vpop.permute.xlu0 %5769
    %5771 = vrot.lane.b32.xlu0 %v5758, 32
    %v5772 = vpop.permute.xlu0 %5771
    %5773 = vrot.lane.b32.xlu0 %v5759, 32
    %v5774 = vpop.permute.xlu0 %5773
    %5775 = vrot.lane.b32.xlu0 %v5760, 32
    %v5776 = vpop.permute.xlu0 %5775
    %v5793 = vunpack.c.l.b16 %v5689
    %v5794 = vunpack.c.l.b16 %v5690
    %v5795 = vunpack.c.l.b16 %v5691
    %v5796 = vunpack.c.l.b16 %v5692
    %v5797 = vunpack.c.l.b16 %v5693
    %v5798 = vunpack.c.l.b16 %v5694
    %v5799 = vunpack.c.l.b16 %v5695
    %v5800 = vunpack.c.l.b16 %v5696
    %v5801 = vunpack.c.l.b16 %v5697
    %v5802 = vunpack.c.l.b16 %v5698
    %v5803 = vunpack.c.l.b16 %v5699
    %v5804 = vunpack.c.l.b16 %v5700
    %v5805 = vunpack.c.l.b16 %v5701
    %v5806 = vunpack.c.l.b16 %v5702
    %v5807 = vunpack.c.l.b16 %v5703
    %v5808 = vunpack.c.l.b16 %v5704
    %v5809 = vpack.c.b16 %v5794, %v5793
    %v5810 = vpack.c.b16 %v5796, %v5795
    %v5811 = vpack.c.b16 %v5798, %v5797
    %v5812 = vpack.c.b16 %v5800, %v5799
    %v5813 = vpack.c.b16 %v5802, %v5801
    %v5814 = vpack.c.b16 %v5804, %v5803
    %v5815 = vpack.c.b16 %v5806, %v5805
    %v5816 = vpack.c.b16 %v5808, %v5807
    %5817 = vrot.lane.b32.xlu0 %v5809, 32
    %v5818 = vpop.permute.xlu0 %5817
    %5819 = vrot.lane.b32.xlu0 %v5810, 32
    %v5820 = vpop.permute.xlu0 %5819
    %5821 = vrot.lane.b32.xlu0 %v5811, 32
    %v5822 = vpop.permute.xlu0 %5821
    %5823 = vrot.lane.b32.xlu0 %v5812, 32
    %v5824 = vpop.permute.xlu0 %5823
    %5825 = vrot.lane.b32.xlu0 %v5813, 32
    %v5826 = vpop.permute.xlu0 %5825
    %5827 = vrot.lane.b32.xlu0 %v5814, 32
    %v5828 = vpop.permute.xlu0 %5827
    %5829 = vrot.lane.b32.xlu0 %v5815, 32
    %v5830 = vpop.permute.xlu0 %5829
    %5831 = vrot.lane.b32.xlu0 %v5816, 32
    %v5832 = vpop.permute.xlu0 %5831
    %v5834 = vsel %vm1135, %v5762, 0
    %v5837 = vsel %vm1135, %v5764, 0
    %v5840 = vsel %vm1135, %v5766, 0
    %v5843 = vsel %vm1135, %v5768, 0
    %v5846 = vsel %vm1135, %v5770, 0
    %v5849 = vsel %vm1135, %v5772, 0
    %v5852 = vsel %vm1135, %v5774, 0
    %v5855 = vsel %vm1135, %v5776, 0
    %v5858 = vsel %vm1135, %v5818, 0
    %v5861 = vsel %vm1135, %v5820, 0
    %v5864 = vsel %vm1135, %v5822, 0
    %v5867 = vsel %vm1135, %v5824, 0
    %v5870 = vsel %vm1135, %v5826, 0
    %v5873 = vsel %vm1135, %v5828, 0
    %v5876 = vsel %vm1135, %v5830, 0
    %v5879 = vsel %vm1135, %v5832, 0
    %5881 = vmatprep.subr.bf16.mxu0 0
    %5882 = vmatpush1.bf16.xpose.msra.mxu0 %v5879
    %5883 = vmatprep.subr.bf16.mxu0 0
    %5884 = vmatpush1.bf16.xpose.msra.mxu0 %v5876
    %5885 = vmatprep.subr.bf16.mxu0 0
    %5886 = vmatpush1.bf16.xpose.msra.mxu0 %v5873
    %5887 = vmatprep.subr.bf16.mxu0 0
    %5888 = vmatpush1.bf16.xpose.msra.mxu0 %v5870
    %5889 = vmatprep.subr.bf16.mxu0 0
    %5890 = vmatpush1.bf16.xpose.msra.mxu0 %v5867
    %5891 = vmatprep.subr.bf16.mxu0 0
    %5892 = vmatpush1.bf16.xpose.msra.mxu0 %v5864
    %5893 = vmatprep.subr.bf16.mxu0 0
    %5894 = vmatpush1.bf16.xpose.msra.mxu0 %v5861
    %5895 = vmatprep.subr.bf16.mxu0 0
    %5896 = vmatpush1.bf16.xpose.msra.mxu0 %v5858
    %5897 = vmatprep.subr.bf16.mxu0 0
    %5898 = vmatpush2.bf16.xpose.msra.mxu0 0
    %5899 = vmatprep.subr.bf16.mxu0 0
    %5900 = vmatpush2.bf16.xpose.msra.mxu0 0
    %5901 = vmatprep.subr.bf16.mxu0 0
    %5902 = vmatpush2.bf16.xpose.msra.mxu0 0
    %5903 = vmatprep.subr.bf16.mxu0 0
    %5904 = vmatpush2.bf16.xpose.msra.mxu0 0
    %5905 = vmatprep.subr.bf16.mxu0 0
    %5906 = vmatpush2.bf16.xpose.msra.mxu0 0
    %5907 = vmatprep.subr.bf16.mxu0 0
    %5908 = vmatpush2.bf16.xpose.msra.mxu0 0
    %5909 = vmatprep.subr.bf16.mxu0 0
    %5910 = vmatpush2.bf16.xpose.msra.mxu0 0
    %5911 = vmatprep.subr.bf16.mxu0 0
    %5912 = vmatpush2.bf16.xpose.msra.mxu0 0
    %5913 = vmatprep.mubr.bf16.mxu0 0
    %5914 = vmatmul.mubr.bf16.gmra.mxu0 %v5834
    %v5915 = vpop.f32.mrf.mxu0
    %v5916 = vadd.f32 0.0, %v5915
    %v5917 = vpop.f32.mrf.mxu0
    %v5918 = vpop.f32.mrf.mxu0
    %v5919 = vadd.f32 0.0, %v5918
    %v5920 = vpop.f32.mrf.mxu0
    %5921 = vmatprep.mubr.bf16.mxu0 0
    %5922 = vmatmul.mubr.bf16.gmra.mxu0 %v5837
    %v5923 = vpop.f32.mrf.mxu0
    %v5924 = vadd.f32 0.0, %v5923
    %v5925 = vpop.f32.mrf.mxu0
    %v5926 = vpop.f32.mrf.mxu0
    %v5927 = vadd.f32 0.0, %v5926
    %v5928 = vpop.f32.mrf.mxu0
    %5929 = vmatprep.mubr.bf16.mxu0 0
    %5930 = vmatmul.mubr.bf16.gmra.mxu0 %v5840
    %v5931 = vpop.f32.mrf.mxu0
    %v5932 = vadd.f32 0.0, %v5931
    %v5933 = vpop.f32.mrf.mxu0
    %v5934 = vpop.f32.mrf.mxu0
    %v5935 = vadd.f32 0.0, %v5934
    %v5936 = vpop.f32.mrf.mxu0
    %5937 = vmatprep.mubr.bf16.mxu0 0
    %5938 = vmatmul.mubr.bf16.gmra.mxu0 %v5843
    %v5939 = vpop.f32.mrf.mxu0
    %v5940 = vadd.f32 0.0, %v5939
    %v5941 = vpop.f32.mrf.mxu0
    %v5942 = vpop.f32.mrf.mxu0
    %v5943 = vadd.f32 0.0, %v5942
    %v5944 = vpop.f32.mrf.mxu0
    %5945 = vmatprep.mubr.bf16.mxu0 0
    %5946 = vmatmul.mubr.bf16.gmra.mxu0 %v5846
    %v5947 = vpop.f32.mrf.mxu0
    %v5948 = vadd.f32 0.0, %v5947
    %v5949 = vpop.f32.mrf.mxu0
    %v5950 = vpop.f32.mrf.mxu0
    %v5951 = vadd.f32 0.0, %v5950
    %v5952 = vpop.f32.mrf.mxu0
    %5953 = vmatprep.mubr.bf16.mxu0 0
    %5954 = vmatmul.mubr.bf16.gmra.mxu0 %v5849
    %v5955 = vpop.f32.mrf.mxu0
    %v5956 = vadd.f32 0.0, %v5955
    %v5957 = vpop.f32.mrf.mxu0
    %v5958 = vpop.f32.mrf.mxu0
    %v5959 = vadd.f32 0.0, %v5958
    %v5960 = vpop.f32.mrf.mxu0
    %5961 = vmatprep.mubr.bf16.mxu0 0
    %5962 = vmatmul.mubr.bf16.gmra.mxu0 %v5852
    %v5963 = vpop.f32.mrf.mxu0
    %v5964 = vadd.f32 0.0, %v5963
    %v5965 = vpop.f32.mrf.mxu0
    %v5966 = vpop.f32.mrf.mxu0
    %v5967 = vadd.f32 0.0, %v5966
    %v5968 = vpop.f32.mrf.mxu0
    %5969 = vmatprep.mubr.bf16.mxu0 0
    %5970 = vmatmul.mubr.bf16.gmra.mxu0 %v5855
    %v5971 = vpop.f32.mrf.mxu0
    %v5972 = vadd.f32 0.0, %v5971
    %v5973 = vpop.f32.mrf.mxu0
    %v5974 = vpop.f32.mrf.mxu0
    %v5975 = vadd.f32 0.0, %v5974
    %v5976 = vpop.f32.mrf.mxu0
    %5977 = vdwg.mxu0
    %5978 = vmax.xlane.f32.xlu0 %v5916
    %v5979 = vpop.xlane.xlu0 %5978
    %5980 = vmax.xlane.f32.xlu0 %v5919
    %v5981 = vpop.xlane.xlu0 %5980
    %5982 = vmax.xlane.f32.xlu0 %v5924
    %v5983 = vpop.xlane.xlu0 %5982
    %5984 = vmax.xlane.f32.xlu0 %v5927
    %v5985 = vpop.xlane.xlu0 %5984
    %5986 = vmax.xlane.f32.xlu0 %v5932
    %v5987 = vpop.xlane.xlu0 %5986
    %5988 = vmax.xlane.f32.xlu0 %v5935
    %v5989 = vpop.xlane.xlu0 %5988
    %5990 = vmax.xlane.f32.xlu0 %v5940
    %v5991 = vpop.xlane.xlu0 %5990
    %5992 = vmax.xlane.f32.xlu0 %v5943
    %v5993 = vpop.xlane.xlu0 %5992
    %5994 = vmax.xlane.f32.xlu0 %v5948
    %v5995 = vpop.xlane.xlu0 %5994
    %5996 = vmax.xlane.f32.xlu0 %v5951
    %v5997 = vpop.xlane.xlu0 %5996
    %5998 = vmax.xlane.f32.xlu0 %v5956
    %v5999 = vpop.xlane.xlu0 %5998
    %6000 = vmax.xlane.f32.xlu0 %v5959
    %v6001 = vpop.xlane.xlu0 %6000
    %6002 = vmax.xlane.f32.xlu0 %v5964
    %v6003 = vpop.xlane.xlu0 %6002
    %6004 = vmax.xlane.f32.xlu0 %v5967
    %v6005 = vpop.xlane.xlu0 %6004
    %6006 = vmax.xlane.f32.xlu0 %v5972
    %v6007 = vpop.xlane.xlu0 %6006
    %6008 = vmax.xlane.f32.xlu0 %v5975
    %v6009 = vpop.xlane.xlu0 %6008
    %v6010 = vsub.f32 %v5916, %v5979
    %v6011 = vsub.f32 %v5919, %v5981
    %v6012 = vsub.f32 %v5924, %v5983
    %v6013 = vsub.f32 %v5927, %v5985
    %v6014 = vsub.f32 %v5932, %v5987
    %v6015 = vsub.f32 %v5935, %v5989
    %v6016 = vsub.f32 %v5940, %v5991
    %v6017 = vsub.f32 %v5943, %v5993
    %v6018 = vsub.f32 %v5948, %v5995
    %v6019 = vsub.f32 %v5951, %v5997
    %v6020 = vsub.f32 %v5956, %v5999
    %v6021 = vsub.f32 %v5959, %v6001
    %v6022 = vsub.f32 %v5964, %v6003
    %v6023 = vsub.f32 %v5967, %v6005
    %v6024 = vsub.f32 %v5972, %v6007
    %v6025 = vsub.f32 %v5975, %v6009
    %v6026 = vmul.f32 %v6010, 1.442695
    %v6027 = vpow.pop %v6026
    %v6028 = vmul.f32 %v6011, 1.442695
    %v6029 = vpow.pop %v6028
    %v6030 = vmul.f32 %v6012, 1.442695
    %v6031 = vpow.pop %v6030
    %v6032 = vmul.f32 %v6013, 1.442695
    %v6033 = vpow.pop %v6032
    %v6034 = vmul.f32 %v6014, 1.442695
    %v6035 = vpow.pop %v6034
    %v6036 = vmul.f32 %v6015, 1.442695
    %v6037 = vpow.pop %v6036
    %v6038 = vmul.f32 %v6016, 1.442695
    %v6039 = vpow.pop %v6038
    %v6040 = vmul.f32 %v6017, 1.442695
    %v6041 = vpow.pop %v6040
    %v6042 = vmul.f32 %v6018, 1.442695
    %v6043 = vpow.pop %v6042
    %v6044 = vmul.f32 %v6019, 1.442695
    %v6045 = vpow.pop %v6044
    %v6046 = vmul.f32 %v6020, 1.442695
    %v6047 = vpow.pop %v6046
    %v6048 = vmul.f32 %v6021, 1.442695
    %v6049 = vpow.pop %v6048
    %v6050 = vmul.f32 %v6022, 1.442695
    %v6051 = vpow.pop %v6050
    %v6052 = vmul.f32 %v6023, 1.442695
    %v6053 = vpow.pop %v6052
    %v6054 = vmul.f32 %v6024, 1.442695
    %v6055 = vpow.pop %v6054
    %v6056 = vmul.f32 %v6025, 1.442695
    %v6057 = vpow.pop %v6056
    %6058 = vadd.xlane.f32.xlu0 %v6027
    %v6059 = vpop.xlane.xlu0 %6058
    %6060 = vadd.xlane.f32.xlu0 %v6029
    %v6061 = vpop.xlane.xlu0 %6060
    %6062 = vadd.xlane.f32.xlu0 %v6031
    %v6063 = vpop.xlane.xlu0 %6062
    %6064 = vadd.xlane.f32.xlu0 %v6033
    %v6065 = vpop.xlane.xlu0 %6064
    %6066 = vadd.xlane.f32.xlu0 %v6035
    %v6067 = vpop.xlane.xlu0 %6066
    %6068 = vadd.xlane.f32.xlu0 %v6037
    %v6069 = vpop.xlane.xlu0 %6068
    %6070 = vadd.xlane.f32.xlu0 %v6039
    %v6071 = vpop.xlane.xlu0 %6070
    %6072 = vadd.xlane.f32.xlu0 %v6041
    %v6073 = vpop.xlane.xlu0 %6072
    %6074 = vadd.xlane.f32.xlu0 %v6043
    %v6075 = vpop.xlane.xlu0 %6074
    %6076 = vadd.xlane.f32.xlu0 %v6045
    %v6077 = vpop.xlane.xlu0 %6076
    %6078 = vadd.xlane.f32.xlu0 %v6047
    %v6079 = vpop.xlane.xlu0 %6078
    %6080 = vadd.xlane.f32.xlu0 %v6049
    %v6081 = vpop.xlane.xlu0 %6080
    %6082 = vadd.xlane.f32.xlu0 %v6051
    %v6083 = vpop.xlane.xlu0 %6082
    %6084 = vadd.xlane.f32.xlu0 %v6053
    %v6085 = vpop.xlane.xlu0 %6084
    %6086 = vadd.xlane.f32.xlu0 %v6055
    %v6087 = vpop.xlane.xlu0 %6086
    %6088 = vadd.xlane.f32.xlu0 %v6057
    %v6089 = vpop.xlane.xlu0 %6088
    %v6090 = vrcp.pop %v6059
    %v6091 = vrcp.pop %v6061
    %v6092 = vrcp.pop %v6063
    %v6093 = vrcp.pop %v6065
    %v6094 = vrcp.pop %v6067
    %v6095 = vrcp.pop %v6069
    %v6096 = vrcp.pop %v6071
    %v6097 = vrcp.pop %v6073
    %v6098 = vrcp.pop %v6075
    %v6099 = vrcp.pop %v6077
    %v6100 = vrcp.pop %v6079
    %v6101 = vrcp.pop %v6081
    %v6102 = vrcp.pop %v6083
    %v6103 = vrcp.pop %v6085
    %v6104 = vrcp.pop %v6087
    %v6105 = vrcp.pop %v6089
    %v6106 = vmul.f32 %v6027, %v6090
    %v6107 = vmul.f32 %v6029, %v6091
    %v6108 = vmul.f32 %v6031, %v6092
    %v6109 = vmul.f32 %v6033, %v6093
    %v6110 = vmul.f32 %v6035, %v6094
    %v6111 = vmul.f32 %v6037, %v6095
    %v6112 = vmul.f32 %v6039, %v6096
    %v6113 = vmul.f32 %v6041, %v6097
    %v6114 = vmul.f32 %v6043, %v6098
    %v6115 = vmul.f32 %v6045, %v6099
    %v6116 = vmul.f32 %v6047, %v6100
    %v6117 = vmul.f32 %v6049, %v6101
    %v6118 = vmul.f32 %v6051, %v6102
    %v6119 = vmul.f32 %v6053, %v6103
    %v6120 = vmul.f32 %v6055, %v6104
    %v6121 = vmul.f32 %v6057, %v6105
    %v6122 = vpack.c.bf16 %v6107, %v6106
    %v6123 = vpack.c.bf16 %v6109, %v6108
    %v6124 = vpack.c.bf16 %v6111, %v6110
    %v6125 = vpack.c.bf16 %v6113, %v6112
    %v6126 = vpack.c.bf16 %v6115, %v6114
    %v6127 = vpack.c.bf16 %v6117, %v6116
    %v6128 = vpack.c.bf16 %v6119, %v6118
    %v6129 = vpack.c.bf16 %v6121, %v6120
    %v6146 = vunpack.c.l.b16 %v5705
    %v6147 = vunpack.c.l.b16 %v5706
    %v6148 = vunpack.c.l.b16 %v5707
    %v6149 = vunpack.c.l.b16 %v5708
    %v6150 = vunpack.c.l.b16 %v5709
    %v6151 = vunpack.c.l.b16 %v5710
    %v6152 = vunpack.c.l.b16 %v5711
    %v6153 = vunpack.c.l.b16 %v5712
    %v6154 = vunpack.c.l.b16 %v5713
    %v6155 = vunpack.c.l.b16 %v5714
    %v6156 = vunpack.c.l.b16 %v5715
    %v6157 = vunpack.c.l.b16 %v5716
    %v6158 = vunpack.c.l.b16 %v5717
    %v6159 = vunpack.c.l.b16 %v5718
    %v6160 = vunpack.c.l.b16 %v5719
    %v6161 = vunpack.c.l.b16 %v5720
    %v6162 = vpack.c.b16 %v6147, %v6146
    %v6163 = vpack.c.b16 %v6149, %v6148
    %v6164 = vpack.c.b16 %v6151, %v6150
    %v6165 = vpack.c.b16 %v6153, %v6152
    %v6166 = vpack.c.b16 %v6155, %v6154
    %v6167 = vpack.c.b16 %v6157, %v6156
    %v6168 = vpack.c.b16 %v6159, %v6158
    %v6169 = vpack.c.b16 %v6161, %v6160
    %6170 = vrot.lane.b32.xlu0 %v6162, 32
    %v6171 = vpop.permute.xlu0 %6170
    %6172 = vrot.lane.b32.xlu0 %v6163, 32
    %v6173 = vpop.permute.xlu0 %6172
    %6174 = vrot.lane.b32.xlu0 %v6164, 32
    %v6175 = vpop.permute.xlu0 %6174
    %6176 = vrot.lane.b32.xlu0 %v6165, 32
    %v6177 = vpop.permute.xlu0 %6176
    %6178 = vrot.lane.b32.xlu0 %v6166, 32
    %v6179 = vpop.permute.xlu0 %6178
    %6180 = vrot.lane.b32.xlu0 %v6167, 32
    %v6181 = vpop.permute.xlu0 %6180
    %6182 = vrot.lane.b32.xlu0 %v6168, 32
    %v6183 = vpop.permute.xlu0 %6182
    %6184 = vrot.lane.b32.xlu0 %v6169, 32
    %v6185 = vpop.permute.xlu0 %6184
    %6194 = vmatprep.subr.bf16.mxu0 0
    %6195 = vmatpush1.bf16.msra.mxu0 %v6185
    %6196 = vmatprep.subr.bf16.mxu0 0
    %6197 = vmatpush1.bf16.msra.mxu0 %v6183
    %6198 = vmatprep.subr.bf16.mxu0 0
    %6199 = vmatpush1.bf16.msra.mxu0 %v6181
    %6200 = vmatprep.subr.bf16.mxu0 0
    %6201 = vmatpush1.bf16.msra.mxu0 %v6179
    %6202 = vmatprep.subr.bf16.mxu0 0
    %6203 = vmatpush1.bf16.msra.mxu0 %v6177
    %6204 = vmatprep.subr.bf16.mxu0 0
    %6205 = vmatpush1.bf16.msra.mxu0 %v6175
    %6206 = vmatprep.subr.bf16.mxu0 0
    %6207 = vmatpush1.bf16.msra.mxu0 %v6173
    %6208 = vmatprep.subr.bf16.mxu0 0
    %6209 = vmatpush1.bf16.msra.mxu0 %v6171
    %6210 = vmatprep.subr.bf16.mxu0 0
    %6211 = vmatpush2.bf16.msra.mxu0 0
    %6212 = vmatprep.subr.bf16.mxu0 0
    %6213 = vmatpush2.bf16.msra.mxu0 0
    %6214 = vmatprep.subr.bf16.mxu0 0
    %6215 = vmatpush2.bf16.msra.mxu0 0
    %6216 = vmatprep.subr.bf16.mxu0 0
    %6217 = vmatpush2.bf16.msra.mxu0 0
    %6218 = vmatprep.subr.bf16.mxu0 0
    %6219 = vmatpush2.bf16.msra.mxu0 0
    %6220 = vmatprep.subr.bf16.mxu0 0
    %6221 = vmatpush2.bf16.msra.mxu0 0
    %6222 = vmatprep.subr.bf16.mxu0 0
    %6223 = vmatpush2.bf16.msra.mxu0 0
    %6224 = vmatprep.subr.bf16.mxu0 0
    %6225 = vmatpush2.bf16.msra.mxu0 0
    %6226 = vmatprep.mubr.bf16.mxu0 0
    %6227 = vmatmul.mubr.bf16.gmra.mxu0 %v6122
    %v6228 = vpop.f32.mrf.mxu0
    %v6229 = vadd.f32 0.0, %v6228
    %v6230 = vpop.f32.mrf.mxu0
    %v6231 = vpop.f32.mrf.mxu0
    %v6232 = vadd.f32 0.0, %v6231
    %v6233 = vpop.f32.mrf.mxu0
    %6234 = vmatprep.mubr.bf16.mxu0 0
    %6235 = vmatmul.mubr.bf16.gmra.mxu0 %v6123
    %v6236 = vpop.f32.mrf.mxu0
    %v6237 = vadd.f32 0.0, %v6236
    %v6238 = vpop.f32.mrf.mxu0
    %v6239 = vpop.f32.mrf.mxu0
    %v6240 = vadd.f32 0.0, %v6239
    %v6241 = vpop.f32.mrf.mxu0
    %6242 = vmatprep.mubr.bf16.mxu0 0
    %6243 = vmatmul.mubr.bf16.gmra.mxu0 %v6124
    %v6244 = vpop.f32.mrf.mxu0
    %v6245 = vadd.f32 0.0, %v6244
    %v6246 = vpop.f32.mrf.mxu0
    %v6247 = vpop.f32.mrf.mxu0
    %v6248 = vadd.f32 0.0, %v6247
    %v6249 = vpop.f32.mrf.mxu0
    %6250 = vmatprep.mubr.bf16.mxu0 0
    %6251 = vmatmul.mubr.bf16.gmra.mxu0 %v6125
    %v6252 = vpop.f32.mrf.mxu0
    %v6253 = vadd.f32 0.0, %v6252
    %v6254 = vpop.f32.mrf.mxu0
    %v6255 = vpop.f32.mrf.mxu0
    %v6256 = vadd.f32 0.0, %v6255
    %v6257 = vpop.f32.mrf.mxu0
    %6258 = vmatprep.mubr.bf16.mxu0 0
    %6259 = vmatmul.mubr.bf16.gmra.mxu0 %v6126
    %v6260 = vpop.f32.mrf.mxu0
    %v6261 = vadd.f32 0.0, %v6260
    %v6262 = vpop.f32.mrf.mxu0
    %v6263 = vpop.f32.mrf.mxu0
    %v6264 = vadd.f32 0.0, %v6263
    %v6265 = vpop.f32.mrf.mxu0
    %6266 = vmatprep.mubr.bf16.mxu0 0
    %6267 = vmatmul.mubr.bf16.gmra.mxu0 %v6127
    %v6268 = vpop.f32.mrf.mxu0
    %v6269 = vadd.f32 0.0, %v6268
    %v6270 = vpop.f32.mrf.mxu0
    %v6271 = vpop.f32.mrf.mxu0
    %v6272 = vadd.f32 0.0, %v6271
    %v6273 = vpop.f32.mrf.mxu0
    %6274 = vmatprep.mubr.bf16.mxu0 0
    %6275 = vmatmul.mubr.bf16.gmra.mxu0 %v6128
    %v6276 = vpop.f32.mrf.mxu0
    %v6277 = vadd.f32 0.0, %v6276
    %v6278 = vpop.f32.mrf.mxu0
    %v6279 = vpop.f32.mrf.mxu0
    %v6280 = vadd.f32 0.0, %v6279
    %v6281 = vpop.f32.mrf.mxu0
    %6282 = vmatprep.mubr.bf16.mxu0 0
    %6283 = vmatmul.mubr.bf16.gmra.mxu0 %v6129
    %v6284 = vpop.f32.mrf.mxu0
    %v6285 = vadd.f32 0.0, %v6284
    %v6286 = vpop.f32.mrf.mxu0
    %v6287 = vpop.f32.mrf.mxu0
    %v6288 = vadd.f32 0.0, %v6287
    %v6289 = vpop.f32.mrf.mxu0
    %6290 = vdwg.mxu0
    %6307 = vrot.lane.b32.xlu0 %v6229, 96
    %v6308 = vpop.permute.xlu0 %6307
    %6309 = vrot.lane.b32.xlu0 %v6232, 96
    %v6310 = vpop.permute.xlu0 %6309
    %6311 = vrot.lane.b32.xlu0 %v6237, 96
    %v6312 = vpop.permute.xlu0 %6311
    %6313 = vrot.lane.b32.xlu0 %v6240, 96
    %v6314 = vpop.permute.xlu0 %6313
    %6315 = vrot.lane.b32.xlu0 %v6245, 96
    %v6316 = vpop.permute.xlu0 %6315
    %6317 = vrot.lane.b32.xlu0 %v6248, 96
    %v6318 = vpop.permute.xlu0 %6317
    %6319 = vrot.lane.b32.xlu0 %v6253, 96
    %v6320 = vpop.permute.xlu0 %6319
    %6321 = vrot.lane.b32.xlu0 %v6256, 96
    %v6322 = vpop.permute.xlu0 %6321
    %6323 = vrot.lane.b32.xlu0 %v6261, 96
    %v6324 = vpop.permute.xlu0 %6323
    %6325 = vrot.lane.b32.xlu0 %v6264, 96
    %v6326 = vpop.permute.xlu0 %6325
    %6327 = vrot.lane.b32.xlu0 %v6269, 96
    %v6328 = vpop.permute.xlu0 %6327
    %6329 = vrot.lane.b32.xlu0 %v6272, 96
    %v6330 = vpop.permute.xlu0 %6329
    %6331 = vrot.lane.b32.xlu0 %v6277, 96
    %v6332 = vpop.permute.xlu0 %6331
    %6333 = vrot.lane.b32.xlu0 %v6280, 96
    %v6334 = vpop.permute.xlu0 %6333
    %6335 = vrot.lane.b32.xlu0 %v6285, 96
    %v6336 = vpop.permute.xlu0 %6335
    %6337 = vrot.lane.b32.xlu0 %v6288, 96
    %v6338 = vpop.permute.xlu0 %6337
    %6355 = vst.msk [vmem:[#allocation8 + $0x80] sm:$0xff] %vm3674, %v6308
    %6356 = vst.msk [vmem:[#allocation8 + $0x88] sm:$0xff] %vm3674, %v6310
    %6357 = vst.msk [vmem:[#allocation8 + $0x90] sm:$0xff] %vm3674, %v6312
    %6358 = vst.msk [vmem:[#allocation8 + $0x98] sm:$0xff] %vm3674, %v6314
    %6359 = vst.msk [vmem:[#allocation8 + $0xa0] sm:$0xff] %vm3674, %v6316
    %6360 = vst.msk [vmem:[#allocation8 + $0xa8] sm:$0xff] %vm3674, %v6318
    %6361 = vst.msk [vmem:[#allocation8 + $0xb0] sm:$0xff] %vm3674, %v6320
    %6362 = vst.msk [vmem:[#allocation8 + $0xb8] sm:$0xff] %vm3674, %v6322
    %6363 = vst.msk [vmem:[#allocation8 + $0xc0] sm:$0xff] %vm3674, %v6324
    %6364 = vst.msk [vmem:[#allocation8 + $0xc8] sm:$0xff] %vm3674, %v6326
    %6365 = vst.msk [vmem:[#allocation8 + $0xd0] sm:$0xff] %vm3674, %v6328
    %6366 = vst.msk [vmem:[#allocation8 + $0xd8] sm:$0xff] %vm3674, %v6330
    %6367 = vst.msk [vmem:[#allocation8 + $0xe0] sm:$0xff] %vm3674, %v6332
    %6368 = vst.msk [vmem:[#allocation8 + $0xe8] sm:$0xff] %vm3674, %v6334
    %6369 = vst.msk [vmem:[#allocation8 + $0xf0] sm:$0xff] %vm3674, %v6336
    %6370 = vst.msk [vmem:[#allocation8 + $0xf8] sm:$0xff] %vm3674, %v6338
    // Predicated region
    $region22: #{tpu_custom_call.1} parent=1 // pred_check
      _
    $region23: #{tpu_custom_call.1} parent=1 // pred_check_branch
      %6372 = sbr.rel (0) target = $region25
    $region24: #{tpu_custom_call.1} parent=1 // pred_region
      %s6374 = ssub.s32 4096, 4096
      %6375 = vsyncadd [#allocation5], %s6374
      %s6376 = sshll.u32 [#allocation8], 4
      %s6377 = int_to_ptr.vmem [resolvable:$true] %s6376
      %6382 = dma.vmem_to_hbm [thread:$0]  %s6377, 4096, %s3, [#allocation5], 128, 128, 8
    $region25: #{tpu_custom_call.1} parent=1 // pred_fallthru
      _
    // Predicated region
    $region26: #{tpu_custom_call.1} parent=1 // pred_check
      _
    $region27: #{tpu_custom_call.1} parent=1 // pred_check_branch
      %6384 = sbr.rel (0) target = $region29
    $region28: #{tpu_custom_call.1} parent=1 // pred_region
      %6385 = dma.done [#allocation5], 4096
    $region29: #{tpu_custom_call.1} parent=1 // pred_fallthru
      _
    %6386 = vsyncpa [#allocation4], 1
    %6387 = vsyncpa [#allocation7], 1
    %6388 = vsyncpa [#allocation5], 1

</llo_original>
